<compile_context>
chip_gen: v7x
topology: tpu7x:2x2x1
jax: 0.10.0
libtpu: 0.0.40
codegen_flags: <defaults>
</compile_context>

<pallas_src>
import jax
import jax.numpy as jnp
from jax import lax
from jax.experimental import pallas as pl
from jax.experimental.pallas import tpu as pltpu


# ----------------------------- kernel helpers --------------------------------


def _group_norm_silu(x2d, gamma, beta, gmap, gmap_t, eps):
    """GroupNorm + SiLU for one sample laid out (H*W, C).  All math in f32.

    gmap (C, G) / gmap_t (G, C) are precomputed one-hot group maps (resident
    inputs); group stats are two tiny stacked MXU matmuls.
    """
    n, C = x2d.shape
    G = gmap.shape[1]
    inv_count = 1.0 / float(n * (C // G))
    s = jnp.sum(x2d, axis=0, keepdims=True)                       # (1, C)
    q = jnp.sum(x2d * x2d, axis=0, keepdims=True)                 # (1, C)
    sq = jnp.concatenate([s, q], axis=0)                          # (2, C)
    gstats = jnp.dot(sq, gmap,
                     preferred_element_type=jnp.float32) * inv_count  # (2, G)
    mean = gstats[0:1, :]
    # E[x^2] - mean^2 can round slightly negative -> clamp (NaN-safe rsqrt).
    var = jnp.maximum(gstats[1:2, :] - mean * mean, 0.0)
    inv = lax.rsqrt(var + eps)
    mi = jnp.concatenate([mean, inv], axis=0)                     # (2, G)
    mi_c = jnp.dot(mi, gmap_t, preferred_element_type=jnp.float32)  # (2, C)
    scale = mi_c[1:2, :] * gamma                                  # (1, C)
    shift = beta - mi_c[0:1, :] * scale                           # (1, C)
    y = x2d * scale + shift
    return y * jax.nn.sigmoid(y)                                  # SiLU fused


def _conv3x3_rows(a2d, w_rows_ref, mask_l, mask_r, acc0, H, W, cdtype):
    """3x3 SAME conv of one (H*W, Cin) activation.

    w_rows_ref: (3, 3*Cin, Cout) weights; row ky = [w(ky,0); w(ky,1); w(ky,2)].
    mask_l/r:   ((H+2)*W, 1) masks killing the wrapped x==0 / x==W-1 columns.
    acc0:       initial f32 accumulator (bias / time-emb / residual), broadcastable.

    H-only zero padding + pltpu.roll for the +-1 column shifts keeps every slab
    feeding the MXU contiguous and sublane-aligned; the 3 kx taps are fused along
    K (K = 3*Cin), so the conv is 3 matmuls instead of 9.
    """
    Cin = a2d.shape[-1]
    n_pad = (H + 2) * W
    zrow = jnp.zeros((W, Cin), jnp.float32)
    flat = jnp.concatenate([zrow, a2d, zrow], axis=0)             # ((H+2)*W, Cin)
    left = pltpu.roll(flat, shift=1, axis=0) * mask_l             # kx = 0 source
    right = pltpu.roll(flat, shift=n_pad - 1, axis=0) * mask_r    # kx = 2 source
    cols = jnp.concatenate([left, flat, right], axis=-1).astype(cdtype)  # (n_pad, 3*Cin)
    acc = acc0
    for ky in range(3):                                           # static unroll
        slab = cols[ky * W:ky * W + H * W, :]                     # aligned slice
        acc = acc + jnp.dot(slab, w_rows_ref[ky],
                            preferred_element_type=jnp.float32)
    return acc


def _make_kernel(H, W, Cin, Cout, eps, cdtype, use_res_proj):
    def kernel(*refs):
        if use_res_proj:
            (img_ref, tadd_ref, g1_ref, b1_ref, gm1_ref, gmt1_ref,
             g2_ref, b2_ref, gm2_ref, gmt2_ref, w1_ref, w2_ref,
             bout_ref, ml_ref, mr_ref, wr_ref, out_ref, res_ref) = refs
        else:
            (img_ref, tadd_ref, g1_ref, b1_ref, gm1_ref, gmt1_ref,
             g2_ref, b2_ref, gm2_ref, gmt2_ref, w1_ref, w2_ref,
             bout_ref, ml_ref, mr_ref, out_ref, res_ref) = refs
            wr_ref = None

        b = pl.program_id(0)
        ml = ml_ref[...]
        mr = mr_ref[...]

        x2d = img_ref[...].astype(jnp.float32).reshape(H * W, Cin)

        # Residual path first, stashed in VMEM scratch, so x2d is dead after
        # GroupNorm1 (keeps f32 live ranges / vreg pressure down).
        if use_res_proj:
            res_ref[...] = jnp.dot(x2d.astype(cdtype), wr_ref[...],
                                   preferred_element_type=jnp.float32)
        else:
            res_ref[...] = x2d

        # GroupNorm1 + SiLU + conv1.  The (precomputed) time embedding with
        # conv1's bias folded in is the initial accumulator.
        a1 = _group_norm_silu(x2d, g1_ref[...], b1_ref[...],
                              gm1_ref[...], gmt1_ref[...], eps)
        tadd = tadd_ref[pl.ds(b, 1), :]                           # (1, Cout)
        h = _conv3x3_rows(a1, w1_ref, ml, mr, tadd, H, W, cdtype)

        # GroupNorm2 + SiLU + conv2; accumulator starts at residual + out bias.
        a2 = _group_norm_silu(h, g2_ref[...], b2_ref[...],
                              gm2_ref[...], gmt2_ref[...], eps)
        out2d = _conv3x3_rows(a2, w2_ref, ml, mr,
                              res_ref[...] + bout_ref[...], H, W, cdtype)
        out_ref[...] = out2d.reshape(H, W, Cout).astype(out_ref.dtype)

    return kernel


# ------------------------------- wrapper --------------------------------------


def _group_maps(C, G):
    g_of_c = jnp.arange(C, dtype=jnp.int32) // (C // G)
    gmap = (g_of_c[:, None] == jnp.arange(G, dtype=jnp.int32)[None, :]
            ).astype(jnp.float32)                                 # (C, G)
    return gmap, gmap.T


def unet_residual_block(img, time, params, *, groups=32, eps=1e-5,
                        compute_dtype=jnp.bfloat16):
    """Fused UNET residual block.

    img:  (B, H, W, in_c)  NHWC (channels on the 128-lane axis)
    time: (B, time_emb)
    Weights are channels-last / (in, out): conv*_w (3,3,Cin,Cout),
    lin_time_w (T,Cout), res_w (Cin,Cout).
    compute_dtype: dtype of MXU operands.  bfloat16 recommended on v5e/v6e/v7x
    (v5e's MXU is bf16-native); GroupNorm/SiLU/bias/accumulation stay f32.
    """
    B, H, W, Cin = img.shape
    Bt, T = time.shape
    assert Bt == B
    assert W % 8 == 0, "W must be a multiple of 8 (sublane alignment)"
    Cout = params["conv1_w"].shape[-1]
    assert Cin % groups == 0 and Cout % groups == 0
    use_res_proj = "res_w" in params
    cdtype = compute_dtype
    f32 = jnp.float32

    # ---- XLA-side precompute (perf review: keep out of the kernel) ----------
    # Time projection as one batched matmul; conv1 bias folded in.
    t_add = (jnp.dot(jax.nn.silu(time.astype(f32)),
                     params["lin_time_w"].astype(f32),
                     preferred_element_type=f32)
             + params["lin_time_b"].astype(f32)
             + params["conv1_b"].astype(f32))                      # (B, Cout)

    # Conv weights as (3, 3*Cin, Cout): row ky = [w(ky,0); w(ky,1); w(ky,2)].
    w1r = params["conv1_w"].astype(cdtype).reshape(3, 3 * Cin, Cout)
    w2r = params["conv2_w"].astype(cdtype).reshape(3, 3 * Cout, Cout)

    g1 = params["gn1_gamma"].reshape(1, Cin).astype(f32)
    b1 = params["gn1_beta"].reshape(1, Cin).astype(f32)
    g2 = params["gn2_gamma"].reshape(1, Cout).astype(f32)
    b2 = params["gn2_beta"].reshape(1, Cout).astype(f32)
    gm1, gmt1 = _group_maps(Cin, groups)
    gm2, gmt2 = _group_maps(Cout, groups)

    # conv2 bias (+ residual-projection bias) folded into one output bias row.
    bout = params["conv2_b"].astype(f32)
    if use_res_proj:
        bout = bout + params["res_b"].astype(f32)
    bout = bout.reshape(1, Cout)

    # Edge-column masks for the rolled, flattened, H-padded activation.
    col = jnp.tile(jnp.arange(W, dtype=jnp.int32), H + 2)
    mask_l = (col != 0).astype(f32)[:, None]                       # ((H+2)*W, 1)
    mask_r = (col != W - 1).astype(f32)[:, None]

    inputs = [img, t_add, g1, b1, gm1, gmt1, g2, b2, gm2, gmt2,
              w1r, w2r, bout, mask_l, mask_r]
    if use_res_proj:
        inputs.append(params["res_w"].astype(cdtype))

    def resident(a):   # whole array, constant block index -> DMA'd once
        return pl.BlockSpec(a.shape, lambda b, _n=a.ndim: (0,) * _n)

    in_specs = ([pl.BlockSpec((None, H, W, Cin), lambda b: (b, 0, 0, 0))]
                + [resident(a) for a in inputs[1:]])

    def nbytes(a):
        return int(a.size) * a.dtype.itemsize

    flops = (2 * B * H * W * 9 * Cin * Cout
             + 2 * B * H * W * 9 * Cout * Cout
             + (2 * B * H * W * Cin * Cout if use_res_proj else 0))
    transcendentals = B * H * W * (Cin + Cout)
    out_bytes = B * H * W * Cout * img.dtype.itemsize
    bytes_accessed = sum(nbytes(a) for a in inputs) + out_bytes

    # Explicit VMEM budget: resident weights + per-step working set, 2x headroom.
    n_pad = (H + 2) * W
    work = 4 * (n_pad * 3 * (Cin + Cout)            # flat/left/right both convs
                + n_pad * 3 * (Cin + Cout)          # im2col slabs
                + H * W * (Cin + 5 * Cout))         # x2d, a1/a2, h, acc, res
    resident_bytes = sum(nbytes(a) for a in inputs[1:])
    io_bytes = 2 * (H * W * Cin + H * W * Cout) * img.dtype.itemsize
    vmem_limit = int(min(max(2 * (work + resident_bytes + io_bytes), 16 << 20),
                         48 << 20))

    kernel = _make_kernel(H, W, Cin, Cout, eps, cdtype, use_res_proj)

    return pl.pallas_call(
        kernel,
        out_shape=jax.ShapeDtypeStruct((B, H, W, Cout), img.dtype),
        grid_spec=pltpu.PrefetchScalarGridSpec(
            num_scalar_prefetch=0,
            grid=(B,),
            in_specs=in_specs,
            out_specs=pl.BlockSpec((None, H, W, Cout), lambda b: (b, 0, 0, 0)),
            scratch_shapes=[pltpu.VMEM((H * W, Cout), jnp.float32)],  # residual
        ),
        compiler_params=pltpu.CompilerParams(
            dimension_semantics=("parallel",),       # batch-parallel (megacore)
            vmem_limit_bytes=vmem_limit),
        cost_estimate=pl.CostEstimate(
            flops=flops, transcendentals=transcendentals,
            bytes_accessed=bytes_accessed),
    )(*inputs)


# --------------------------- init + pure-JAX reference -------------------------


def init_params(key, in_c, out_c, time_emb, dtype=jnp.float32):
    """PyTorch-style U(-1/sqrt(fan_in), 1/sqrt(fan_in)) init, channels-last."""
    ks = jax.random.split(key, 10)

    def uni(k, shape, fan_in):
        b = 1.0 / (fan_in ** 0.5)
        return jax.random.uniform(k, shape, dtype, -b, b)

    p = {
        "gn1_gamma": 1.0 + 0.1 * jax.random.normal(ks[0], (in_c,), dtype),
        "gn1_beta": 0.1 * jax.random.normal(ks[1], (in_c,), dtype),
        "conv1_w": uni(ks[2], (3, 3, in_c, out_c), 9 * in_c),
        "conv1_b": uni(ks[3], (out_c,), 9 * in_c),
        "gn2_gamma": 1.0 + 0.1 * jax.random.normal(ks[4], (out_c,), dtype),
        "gn2_beta": 0.1 * jax.random.normal(ks[5], (out_c,), dtype),
        "conv2_w": uni(ks[6], (3, 3, out_c, out_c), 9 * out_c),
        "conv2_b": uni(ks[7], (out_c,), 9 * out_c),
        "lin_time_w": uni(ks[8], (time_emb, out_c), time_emb),
        "lin_time_b": uni(ks[9], (out_c,), time_emb),
    }
    if in_c != out_c:
        kr1, kr2 = jax.random.split(ks[0], 2)
        p["res_w"] = uni(kr1, (in_c, out_c), in_c)
        p["res_b"] = uni(kr2, (out_c,), in_c)
    return p


def unet_residual_block_ref(img, time, params, *, groups=32, eps=1e-5,
                            compute_dtype=jnp.float32):
    """Pure-JAX reference with the same mixed-precision policy as the kernel."""
    cd = compute_dtype

    def group_norm(x, gamma, beta):
        B, H, W, C = x.shape
        xg = x.reshape(B, H * W, groups, C // groups)
        mean = xg.mean(axis=(1, 3), keepdims=True)
        var = jnp.mean((xg - mean) ** 2, axis=(1, 3), keepdims=True)
        xn = ((xg - mean) / jnp.sqrt(var + eps)).reshape(B, H, W, C)
        return xn * gamma + beta

    def conv3x3(x, w, b):
        y = lax.conv_general_dilated(
            x.astype(cd), w.astype(cd), (1, 1), "SAME",
            dimension_numbers=("NHWC", "HWIO", "NHWC"),
            preferred_element_type=jnp.float32)
        return y + b

    x = img.astype(jnp.float32)
    h = conv3x3(jax.nn.silu(group_norm(x, params["gn1_gamma"], params["gn1_beta"])),
                params["conv1_w"], params["conv1_b"])
    temb = (jnp.dot(jax.nn.silu(time.astype(jnp.float32)),
                    params["lin_time_w"].astype(jnp.float32),
                    preferred_element_type=jnp.float32)
            + params["lin_time_b"].astype(jnp.float32))
    agg = h + temb[:, None, None, :]
    agg = conv3x3(jax.nn.silu(group_norm(agg, params["gn2_gamma"], params["gn2_beta"])),
                  params["conv2_w"], params["conv2_b"])
    if "res_w" in params:
        res = (jnp.dot(x.astype(cd), params["res_w"].astype(cd),
                       preferred_element_type=jnp.float32)
               + params["res_b"].astype(jnp.float32))
    else:
        res = x
    return agg + res


# --------------------------------- demo ----------------------------------------


if __name__ == "__main__":
    key = jax.random.PRNGKey(0)
    k_img, k_time, k_p = jax.random.split(key, 3)

    B, H, W = 2, 16, 16
    in_c, out_c = 64, 128          # GroupNorm(32, .): group sizes 2 and 4
    time_emb = 1280                # module default

    img = jax.random.normal(k_img, (B, H, W, in_c), jnp.float32)
    time = jax.random.normal(k_time, (B, time_emb), jnp.float32)
    params = init_params(k_p, in_c, out_c, time_emb)

    # f32 MXU operands: exact semantics of the PyTorch module.
    out_f32 = jax.block_until_ready(
        unet_residual_block(img, time, params, compute_dtype=jnp.float32))
    ref_f32 = unet_residual_block_ref(img, time, params,
                                      compute_dtype=jnp.float32)
    assert out_f32.shape == (B, H, W, out_c)
    assert jnp.allclose(out_f32, ref_f32, atol=2e-3, rtol=2e-3), (
        float(jnp.max(jnp.abs(out_f32 - ref_f32))))

    # bf16 MXU operands + f32 accumulation: recommended on all TPU generations.
    out_bf16 = jax.block_until_ready(
        unet_residual_block(img, time, params, compute_dtype=jnp.bfloat16))
    ref_bf16 = unet_residual_block_ref(img, time, params,
                                       compute_dtype=jnp.bfloat16)
    assert jnp.allclose(out_bf16, ref_bf16, atol=5e-2, rtol=5e-2), (
        float(jnp.max(jnp.abs(out_bf16 - ref_bf16))))

    # Identity-residual path (in_c == out_c).
    img2 = jax.random.normal(k_img, (1, 8, 8, 64), jnp.float32)
    time2 = jax.random.normal(k_time, (1, time_emb), jnp.float32)
    p2 = init_params(k_p, 64, 64, time_emb)
    out_id = jax.block_until_ready(
        unet_residual_block(img2, time2, p2, compute_dtype=jnp.float32))
    ref_id = unet_residual_block_ref(img2, time2, p2, compute_dtype=jnp.float32)
    assert jnp.allclose(out_id, ref_id, atol=2e-3, rtol=2e-3), (
        float(jnp.max(jnp.abs(out_id - ref_id))))

    print("KERNEL_OK")
</pallas_src>

<mosaic_0001>
module attributes {stable_mosaic.version = 11 : i64} {
  func.func @kernel(%arg0: i32, %arg1: memref<1x16x16x64xf32, #tpu.memory_space<vmem>>, %arg2: memref<2x128xf32, #tpu.memory_space<vmem>>, %arg3: memref<1x64xf32, #tpu.memory_space<vmem>>, %arg4: memref<1x64xf32, #tpu.memory_space<vmem>>, %arg5: memref<64x32xf32, #tpu.memory_space<vmem>>, %arg6: memref<32x64xf32, #tpu.memory_space<vmem>>, %arg7: memref<1x128xf32, #tpu.memory_space<vmem>>, %arg8: memref<1x128xf32, #tpu.memory_space<vmem>>, %arg9: memref<128x32xf32, #tpu.memory_space<vmem>>, %arg10: memref<32x128xf32, #tpu.memory_space<vmem>>, %arg11: memref<3x192x128xf32, #tpu.memory_space<vmem>>, %arg12: memref<3x384x128xf32, #tpu.memory_space<vmem>>, %arg13: memref<1x128xf32, #tpu.memory_space<vmem>>, %arg14: memref<288x1xf32, #tpu.memory_space<vmem>>, %arg15: memref<288x1xf32, #tpu.memory_space<vmem>>, %arg16: memref<64x128xf32, #tpu.memory_space<vmem>>, %arg17: memref<1x16x16x128xf32, #tpu.memory_space<vmem>>, %arg18: memref<256x128xf32, #tpu.memory_space<vmem>>) attributes {dimension_semantics = [#tpu.dimension_semantics<parallel>], iteration_bounds = array<i64: 2>, scalar_prefetch = 0 : i64, scratch_operands = 1 : i64, tpu.core_type = #tpu.core_type<tc>, window_params = [{transform_indices = @transform_0, window_bounds = array<i64: 1, 16, 16, 64>}, {pipeline_mode = #tpu.pipeline_mode<synchronous>, transform_indices = @transform_1, window_bounds = array<i64: 2, 128>}, {pipeline_mode = #tpu.pipeline_mode<synchronous>, transform_indices = @transform_2, window_bounds = array<i64: 1, 64>}, {pipeline_mode = #tpu.pipeline_mode<synchronous>, transform_indices = @transform_3, window_bounds = array<i64: 1, 64>}, {pipeline_mode = #tpu.pipeline_mode<synchronous>, transform_indices = @transform_4, window_bounds = array<i64: 64, 32>}, {pipeline_mode = #tpu.pipeline_mode<synchronous>, transform_indices = @transform_5, window_bounds = array<i64: 32, 64>}, {pipeline_mode = #tpu.pipeline_mode<synchronous>, transform_indices = @transform_6, window_bounds = array<i64: 1, 128>}, {pipeline_mode = #tpu.pipeline_mode<synchronous>, transform_indices = @transform_7, window_bounds = array<i64: 1, 128>}, {pipeline_mode = #tpu.pipeline_mode<synchronous>, transform_indices = @transform_8, window_bounds = array<i64: 128, 32>}, {pipeline_mode = #tpu.pipeline_mode<synchronous>, transform_indices = @transform_9, window_bounds = array<i64: 32, 128>}, {pipeline_mode = #tpu.pipeline_mode<synchronous>, transform_indices = @transform_10, window_bounds = array<i64: 3, 192, 128>}, {pipeline_mode = #tpu.pipeline_mode<synchronous>, transform_indices = @transform_11, window_bounds = array<i64: 3, 384, 128>}, {pipeline_mode = #tpu.pipeline_mode<synchronous>, transform_indices = @transform_12, window_bounds = array<i64: 1, 128>}, {pipeline_mode = #tpu.pipeline_mode<synchronous>, transform_indices = @transform_13, window_bounds = array<i64: 288, 1>}, {pipeline_mode = #tpu.pipeline_mode<synchronous>, transform_indices = @transform_14, window_bounds = array<i64: 288, 1>}, {pipeline_mode = #tpu.pipeline_mode<synchronous>, transform_indices = @transform_15, window_bounds = array<i64: 64, 128>}, {transform_indices = @transform_16, window_bounds = array<i64: 1, 16, 16, 128>}]} {
    %c0 = arith.constant 0 : index
    %c0_0 = arith.constant 0 : index
    %0 = vector.load %arg14[%c0, %c0_0] : memref<288x1xf32, #tpu.memory_space<vmem>>, vector<288x1xf32>
    %c0_1 = arith.constant 0 : index
    %c0_2 = arith.constant 0 : index
    %1 = vector.load %arg15[%c0_1, %c0_2] : memref<288x1xf32, #tpu.memory_space<vmem>>, vector<288x1xf32>
    %c0_3 = arith.constant 0 : index
    %c0_4 = arith.constant 0 : index
    %c0_5 = arith.constant 0 : index
    %c0_6 = arith.constant 0 : index
    %2 = vector.load %arg1[%c0_3, %c0_4, %c0_5, %c0_6] : memref<1x16x16x64xf32, #tpu.memory_space<vmem>>, vector<1x16x16x64xf32>
    %3 = vector.shape_cast %2 : vector<1x16x16x64xf32> to vector<16x16x64xf32>
    %4 = vector.shape_cast %3 : vector<16x16x64xf32> to vector<256x64xf32>
    %c0_7 = arith.constant 0 : index
    %c0_8 = arith.constant 0 : index
    %5 = vector.load %arg16[%c0_7, %c0_8] : memref<64x128xf32, #tpu.memory_space<vmem>>, vector<64x128xf32>
    %cst = arith.constant dense<0.000000e+00> : vector<256x128xf32>
    %6 = tpu.matmul %4, %5, %cst {dimension_numbers = #tpu.dot_dimension_numbers<[1], [0], [0], [1], [0, 0, 1, 1], [], []>} : vector<256x64xf32>, vector<64x128xf32>, vector<256x128xf32> -> vector<256x128xf32>
    %c0_9 = arith.constant 0 : index
    %c0_10 = arith.constant 0 : index
    %7 = vector.load %arg18[%c0_9, %c0_10] : memref<256x128xf32, #tpu.memory_space<vmem>>, vector<256x128xf32>
    tpu.vector_store %arg18[%c0_9, %c0_10], %6 {strides = array<i32>} : memref<256x128xf32, #tpu.memory_space<vmem>>, vector<256x128xf32>,
    %c0_11 = arith.constant 0 : index
    %c0_12 = arith.constant 0 : index
    %8 = vector.load %arg3[%c0_11, %c0_12] : memref<1x64xf32, #tpu.memory_space<vmem>>, vector<1x64xf32>
    %c0_13 = arith.constant 0 : index
    %c0_14 = arith.constant 0 : index
    %9 = vector.load %arg4[%c0_13, %c0_14] : memref<1x64xf32, #tpu.memory_space<vmem>>, vector<1x64xf32>
    %c0_15 = arith.constant 0 : index
    %c0_16 = arith.constant 0 : index
    %10 = vector.load %arg5[%c0_15, %c0_16] : memref<64x32xf32, #tpu.memory_space<vmem>>, vector<64x32xf32>
    %c0_17 = arith.constant 0 : index
    %c0_18 = arith.constant 0 : index
    %11 = vector.load %arg6[%c0_17, %c0_18] : memref<32x64xf32, #tpu.memory_space<vmem>>, vector<32x64xf32>
    %cst_19 = arith.constant dense<0.000000e+00> : vector<64xf32>
    %12 = vector.multi_reduction <add>, %4, %cst_19 [0] : vector<256x64xf32> to vector<64xf32>
    %13 = vector.shape_cast %12 : vector<64xf32> to vector<1x64xf32>
    %14 = arith.mulf %4, %4 : vector<256x64xf32>
    %cst_20 = arith.constant dense<0.000000e+00> : vector<64xf32>
    %15 = vector.multi_reduction <add>, %14, %cst_20 [0] : vector<256x64xf32> to vector<64xf32>
    %16 = vector.shape_cast %15 : vector<64xf32> to vector<1x64xf32>
    %17 = tpu.concatenate %13, %16 in 0 : vector<1x64xf32>, vector<1x64xf32> -> vector<2x64xf32>
    %cst_21 = arith.constant dense<0.000000e+00> : vector<2x32xf32>
    %18 = tpu.matmul %17, %10, %cst_21 {dimension_numbers = #tpu.dot_dimension_numbers<[1], [0], [0], [1], [0, 0, 1, 1], [], []>} : vector<2x64xf32>, vector<64x32xf32>, vector<2x32xf32> -> vector<2x32xf32>
    %cst_22 = arith.constant 0.001953125 : f32
    %19 = vector.broadcast %cst_22 : f32 to vector<2x32xf32>
    %20 = arith.mulf %18, %19 : vector<2x32xf32>
    %21 = vector.extract_strided_slice %20 {offsets = [0, 0], sizes = [1, 32], strides = [1, 1]} : vector<2x32xf32> to vector<1x32xf32>
    %22 = vector.extract_strided_slice %20 {offsets = [1, 0], sizes = [1, 32], strides = [1, 1]} : vector<2x32xf32> to vector<1x32xf32>
    %23 = arith.mulf %21, %21 : vector<1x32xf32>
    %24 = arith.subf %22, %23 : vector<1x32xf32>
    %cst_23 = arith.constant 0.000000e+00 : f32
    %25 = vector.broadcast %cst_23 : f32 to vector<1x32xf32>
    %26 = arith.maximumf %24, %25 : vector<1x32xf32>
    %cst_24 = arith.constant 9.99999974E-6 : f32
    %27 = vector.broadcast %cst_24 : f32 to vector<1x32xf32>
    %28 = arith.addf %26, %27 : vector<1x32xf32>
    %29 = math.rsqrt %28 : vector<1x32xf32>
    %30 = tpu.concatenate %21, %29 in 0 : vector<1x32xf32>, vector<1x32xf32> -> vector<2x32xf32>
    %cst_25 = arith.constant dense<0.000000e+00> : vector<2x64xf32>
    %31 = tpu.matmul %30, %11, %cst_25 {dimension_numbers = #tpu.dot_dimension_numbers<[1], [0], [0], [1], [0, 0, 1, 1], [], []>} : vector<2x32xf32>, vector<32x64xf32>, vector<2x64xf32> -> vector<2x64xf32>
    %32 = vector.extract_strided_slice %31 {offsets = [1, 0], sizes = [1, 64], strides = [1, 1]} : vector<2x64xf32> to vector<1x64xf32>
    %33 = arith.mulf %32, %8 : vector<1x64xf32>
    %34 = vector.extract_strided_slice %31 {offsets = [0, 0], sizes = [1, 64], strides = [1, 1]} : vector<2x64xf32> to vector<1x64xf32>
    %35 = arith.mulf %34, %33 : vector<1x64xf32>
    %36 = arith.subf %9, %35 : vector<1x64xf32>
    %37 = vector.broadcast %33 : vector<1x64xf32> to vector<256x64xf32>
    %38 = arith.mulf %4, %37 : vector<256x64xf32>
    %39 = vector.broadcast %36 : vector<1x64xf32> to vector<256x64xf32>
    %40 = arith.addf %38, %39 : vector<256x64xf32>
    %41 = arith.negf %40 : vector<256x64xf32>
    %42 = math.exp %41 : vector<256x64xf32>
    %cst_26 = arith.constant 1.000000e+00 : f32
    %43 = vector.broadcast %cst_26 : f32 to vector<256x64xf32>
    %44 = arith.addf %43, %42 : vector<256x64xf32>
    %45 = arith.divf %43, %44 : vector<256x64xf32>
    %46 = arith.mulf %40, %45 : vector<256x64xf32>
    %47 = arith.index_cast %arg0 : i32 to index
    %c0_27 = arith.constant 0 : index
    %48 = vector.load %arg2[%47, %c0_27] : memref<2x128xf32, #tpu.memory_space<vmem>>, vector<1x128xf32>
    %cst_28 = arith.constant 0.000000e+00 : f32
    %49 = vector.broadcast %cst_28 : f32 to vector<16x64xf32>
    %50 = tpu.concatenate %49, %46, %49 in 0 : vector<16x64xf32>, vector<256x64xf32>, vector<16x64xf32> -> vector<288x64xf32>
    %c1_i32 = arith.constant 1 : i32
    %51 = tpu.dynamic_rotate %50 by %c1_i32 dim 0 : vector<288x64xf32>, i32 -> vector<288x64xf32>
    %52 = vector.broadcast %0 : vector<288x1xf32> to vector<288x64xf32>
    %53 = arith.mulf %51, %52 : vector<288x64xf32>
    %c287_i32 = arith.constant 287 : i32
    %54 = tpu.dynamic_rotate %50 by %c287_i32 dim 0 : vector<288x64xf32>, i32 -> vector<288x64xf32>
    %55 = vector.broadcast %1 : vector<288x1xf32> to vector<288x64xf32>
    %56 = arith.mulf %54, %55 : vector<288x64xf32>
    %57 = tpu.concatenate %53, %50, %56 in 1 : vector<288x64xf32>, vector<288x64xf32>, vector<288x64xf32> -> vector<288x192xf32>
    %58 = vector.extract_strided_slice %57 {offsets = [0, 0], sizes = [256, 192], strides = [1, 1]} : vector<288x192xf32> to vector<256x192xf32>
    %c0_29 = arith.constant 0 : index
    %c0_30 = arith.constant 0 : index
    %c0_31 = arith.constant 0 : index
    %59 = vector.load %arg11[%c0_29, %c0_30, %c0_31] : memref<3x192x128xf32, #tpu.memory_space<vmem>>, vector<1x192x128xf32>
    %60 = vector.shape_cast %59 : vector<1x192x128xf32> to vector<192x128xf32>
    %cst_32 = arith.constant dense<0.000000e+00> : vector<256x128xf32>
    %61 = tpu.matmul %58, %60, %cst_32 {dimension_numbers = #tpu.dot_dimension_numbers<[1], [0], [0], [1], [0, 0, 1, 1], [], []>} : vector<256x192xf32>, vector<192x128xf32>, vector<256x128xf32> -> vector<256x128xf32>
    %62 = vector.broadcast %48 : vector<1x128xf32> to vector<256x128xf32>
    %63 = arith.addf %62, %61 : vector<256x128xf32>
    %64 = vector.extract_strided_slice %57 {offsets = [16, 0], sizes = [256, 192], strides = [1, 1]} : vector<288x192xf32> to vector<256x192xf32>
    %c1 = arith.constant 1 : index
    %c0_33 = arith.constant 0 : index
    %c0_34 = arith.constant 0 : index
    %65 = vector.load %arg11[%c1, %c0_33, %c0_34] : memref<3x192x128xf32, #tpu.memory_space<vmem>>, vector<1x192x128xf32>
    %66 = vector.shape_cast %65 : vector<1x192x128xf32> to vector<192x128xf32>
    %cst_35 = arith.constant dense<0.000000e+00> : vector<256x128xf32>
    %67 = tpu.matmul %64, %66, %cst_35 {dimension_numbers = #tpu.dot_dimension_numbers<[1], [0], [0], [1], [0, 0, 1, 1], [], []>} : vector<256x192xf32>, vector<192x128xf32>, vector<256x128xf32> -> vector<256x128xf32>
    %68 = arith.addf %63, %67 : vector<256x128xf32>
    %69 = vector.extract_strided_slice %57 {offsets = [32, 0], sizes = [256, 192], strides = [1, 1]} : vector<288x192xf32> to vector<256x192xf32>
    %c2 = arith.constant 2 : index
    %c0_36 = arith.constant 0 : index
    %c0_37 = arith.constant 0 : index
    %70 = vector.load %arg11[%c2, %c0_36, %c0_37] : memref<3x192x128xf32, #tpu.memory_space<vmem>>, vector<1x192x128xf32>
    %71 = vector.shape_cast %70 : vector<1x192x128xf32> to vector<192x128xf32>
    %cst_38 = arith.constant dense<0.000000e+00> : vector<256x128xf32>
    %72 = tpu.matmul %69, %71, %cst_38 {dimension_numbers = #tpu.dot_dimension_numbers<[1], [0], [0], [1], [0, 0, 1, 1], [], []>} : vector<256x192xf32>, vector<192x128xf32>, vector<256x128xf32> -> vector<256x128xf32>
    %73 = arith.addf %68, %72 : vector<256x128xf32>
    %c0_39 = arith.constant 0 : index
    %c0_40 = arith.constant 0 : index
    %74 = vector.load %arg7[%c0_39, %c0_40] : memref<1x128xf32, #tpu.memory_space<vmem>>, vector<1x128xf32>
    %c0_41 = arith.constant 0 : index
    %c0_42 = arith.constant 0 : index
    %75 = vector.load %arg8[%c0_41, %c0_42] : memref<1x128xf32, #tpu.memory_space<vmem>>, vector<1x128xf32>
    %c0_43 = arith.constant 0 : index
    %c0_44 = arith.constant 0 : index
    %76 = vector.load %arg9[%c0_43, %c0_44] : memref<128x32xf32, #tpu.memory_space<vmem>>, vector<128x32xf32>
    %c0_45 = arith.constant 0 : index
    %c0_46 = arith.constant 0 : index
    %77 = vector.load %arg10[%c0_45, %c0_46] : memref<32x128xf32, #tpu.memory_space<vmem>>, vector<32x128xf32>
    %cst_47 = arith.constant dense<0.000000e+00> : vector<128xf32>
    %78 = vector.multi_reduction <add>, %73, %cst_47 [0] : vector<256x128xf32> to vector<128xf32>
    %79 = vector.shape_cast %78 : vector<128xf32> to vector<1x128xf32>
    %80 = arith.mulf %73, %73 : vector<256x128xf32>
    %cst_48 = arith.constant dense<0.000000e+00> : vector<128xf32>
    %81 = vector.multi_reduction <add>, %80, %cst_48 [0] : vector<256x128xf32> to vector<128xf32>
    %82 = vector.shape_cast %81 : vector<128xf32> to vector<1x128xf32>
    %83 = tpu.concatenate %79, %82 in 0 : vector<1x128xf32>, vector<1x128xf32> -> vector<2x128xf32>
    %cst_49 = arith.constant dense<0.000000e+00> : vector<2x32xf32>
    %84 = tpu.matmul %83, %76, %cst_49 {dimension_numbers = #tpu.dot_dimension_numbers<[1], [0], [0], [1], [0, 0, 1, 1], [], []>} : vector<2x128xf32>, vector<128x32xf32>, vector<2x32xf32> -> vector<2x32xf32>
    %cst_50 = arith.constant 9.765625E-4 : f32
    %85 = vector.broadcast %cst_50 : f32 to vector<2x32xf32>
    %86 = arith.mulf %84, %85 : vector<2x32xf32>
    %87 = vector.extract_strided_slice %86 {offsets = [0, 0], sizes = [1, 32], strides = [1, 1]} : vector<2x32xf32> to vector<1x32xf32>
    %88 = vector.extract_strided_slice %86 {offsets = [1, 0], sizes = [1, 32], strides = [1, 1]} : vector<2x32xf32> to vector<1x32xf32>
    %89 = arith.mulf %87, %87 : vector<1x32xf32>
    %90 = arith.subf %88, %89 : vector<1x32xf32>
    %cst_51 = arith.constant 0.000000e+00 : f32
    %91 = vector.broadcast %cst_51 : f32 to vector<1x32xf32>
    %92 = arith.maximumf %90, %91 : vector<1x32xf32>
    %cst_52 = arith.constant 9.99999974E-6 : f32
    %93 = vector.broadcast %cst_52 : f32 to vector<1x32xf32>
    %94 = arith.addf %92, %93 : vector<1x32xf32>
    %95 = math.rsqrt %94 : vector<1x32xf32>
    %96 = tpu.concatenate %87, %95 in 0 : vector<1x32xf32>, vector<1x32xf32> -> vector<2x32xf32>
    %cst_53 = arith.constant dense<0.000000e+00> : vector<2x128xf32>
    %97 = tpu.matmul %96, %77, %cst_53 {dimension_numbers = #tpu.dot_dimension_numbers<[1], [0], [0], [1], [0, 0, 1, 1], [], []>} : vector<2x32xf32>, vector<32x128xf32>, vector<2x128xf32> -> vector<2x128xf32>
    %98 = vector.extract_strided_slice %97 {offsets = [1, 0], sizes = [1, 128], strides = [1, 1]} : vector<2x128xf32> to vector<1x128xf32>
    %99 = arith.mulf %98, %74 : vector<1x128xf32>
    %100 = vector.extract_strided_slice %97 {offsets = [0, 0], sizes = [1, 128], strides = [1, 1]} : vector<2x128xf32> to vector<1x128xf32>
    %101 = arith.mulf %100, %99 : vector<1x128xf32>
    %102 = arith.subf %75, %101 : vector<1x128xf32>
    %103 = vector.broadcast %99 : vector<1x128xf32> to vector<256x128xf32>
    %104 = arith.mulf %73, %103 : vector<256x128xf32>
    %105 = vector.broadcast %102 : vector<1x128xf32> to vector<256x128xf32>
    %106 = arith.addf %104, %105 : vector<256x128xf32>
    %107 = arith.negf %106 : vector<256x128xf32>
    %108 = math.exp %107 : vector<256x128xf32>
    %cst_54 = arith.constant 1.000000e+00 : f32
    %109 = vector.broadcast %cst_54 : f32 to vector<256x128xf32>
    %110 = arith.addf %109, %108 : vector<256x128xf32>
    %111 = arith.divf %109, %110 : vector<256x128xf32>
    %112 = arith.mulf %106, %111 : vector<256x128xf32>
    %c0_55 = arith.constant 0 : index
    %c0_56 = arith.constant 0 : index
    %113 = vector.load %arg18[%c0_55, %c0_56] : memref<256x128xf32, #tpu.memory_space<vmem>>, vector<256x128xf32>
    %c0_57 = arith.constant 0 : index
    %c0_58 = arith.constant 0 : index
    %114 = vector.load %arg13[%c0_57, %c0_58] : memref<1x128xf32, #tpu.memory_space<vmem>>, vector<1x128xf32>
    %115 = vector.broadcast %114 : vector<1x128xf32> to vector<256x128xf32>
    %116 = arith.addf %113, %115 : vector<256x128xf32>
    %cst_59 = arith.constant 0.000000e+00 : f32
    %117 = vector.broadcast %cst_59 : f32 to vector<16x128xf32>
    %118 = tpu.concatenate %117, %112, %117 in 0 : vector<16x128xf32>, vector<256x128xf32>, vector<16x128xf32> -> vector<288x128xf32>
    %c1_i32_60 = arith.constant 1 : i32
    %119 = tpu.dynamic_rotate %118 by %c1_i32_60 dim 0 : vector<288x128xf32>, i32 -> vector<288x128xf32>
    %120 = vector.broadcast %0 : vector<288x1xf32> to vector<288x128xf32>
    %121 = arith.mulf %119, %120 : vector<288x128xf32>
    %c287_i32_61 = arith.constant 287 : i32
    %122 = tpu.dynamic_rotate %118 by %c287_i32_61 dim 0 : vector<288x128xf32>, i32 -> vector<288x128xf32>
    %123 = vector.broadcast %1 : vector<288x1xf32> to vector<288x128xf32>
    %124 = arith.mulf %122, %123 : vector<288x128xf32>
    %125 = tpu.concatenate %121, %118, %124 in 1 : vector<288x128xf32>, vector<288x128xf32>, vector<288x128xf32> -> vector<288x384xf32>
    %126 = vector.extract_strided_slice %125 {offsets = [0, 0], sizes = [256, 384], strides = [1, 1]} : vector<288x384xf32> to vector<256x384xf32>
    %c0_62 = arith.constant 0 : index
    %c0_63 = arith.constant 0 : index
    %c0_64 = arith.constant 0 : index
    %127 = vector.load %arg12[%c0_62, %c0_63, %c0_64] : memref<3x384x128xf32, #tpu.memory_space<vmem>>, vector<1x384x128xf32>
    %128 = vector.shape_cast %127 : vector<1x384x128xf32> to vector<384x128xf32>
    %cst_65 = arith.constant dense<0.000000e+00> : vector<256x128xf32>
    %129 = tpu.matmul %126, %128, %cst_65 {dimension_numbers = #tpu.dot_dimension_numbers<[1], [0], [0], [1], [0, 0, 1, 1], [], []>} : vector<256x384xf32>, vector<384x128xf32>, vector<256x128xf32> -> vector<256x128xf32>
    %130 = arith.addf %116, %129 : vector<256x128xf32>
    %131 = vector.extract_strided_slice %125 {offsets = [16, 0], sizes = [256, 384], strides = [1, 1]} : vector<288x384xf32> to vector<256x384xf32>
    %c1_66 = arith.constant 1 : index
    %c0_67 = arith.constant 0 : index
    %c0_68 = arith.constant 0 : index
    %132 = vector.load %arg12[%c1_66, %c0_67, %c0_68] : memref<3x384x128xf32, #tpu.memory_space<vmem>>, vector<1x384x128xf32>
    %133 = vector.shape_cast %132 : vector<1x384x128xf32> to vector<384x128xf32>
    %cst_69 = arith.constant dense<0.000000e+00> : vector<256x128xf32>
    %134 = tpu.matmul %131, %133, %cst_69 {dimension_numbers = #tpu.dot_dimension_numbers<[1], [0], [0], [1], [0, 0, 1, 1], [], []>} : vector<256x384xf32>, vector<384x128xf32>, vector<256x128xf32> -> vector<256x128xf32>
    %135 = arith.addf %130, %134 : vector<256x128xf32>
    %136 = vector.extract_strided_slice %125 {offsets = [32, 0], sizes = [256, 384], strides = [1, 1]} : vector<288x384xf32> to vector<256x384xf32>
    %c2_70 = arith.constant 2 : index
    %c0_71 = arith.constant 0 : index
    %c0_72 = arith.constant 0 : index
    %137 = vector.load %arg12[%c2_70, %c0_71, %c0_72] : memref<3x384x128xf32, #tpu.memory_space<vmem>>, vector<1x384x128xf32>
    %138 = vector.shape_cast %137 : vector<1x384x128xf32> to vector<384x128xf32>
    %cst_73 = arith.constant dense<0.000000e+00> : vector<256x128xf32>
    %139 = tpu.matmul %136, %138, %cst_73 {dimension_numbers = #tpu.dot_dimension_numbers<[1], [0], [0], [1], [0, 0, 1, 1], [], []>} : vector<256x384xf32>, vector<384x128xf32>, vector<256x128xf32> -> vector<256x128xf32>
    %140 = arith.addf %135, %139 : vector<256x128xf32>
    %141 = vector.shape_cast %140 : vector<256x128xf32> to vector<16x16x128xf32>
    %c0_74 = arith.constant 0 : index
    %c0_75 = arith.constant 0 : index
    %c0_76 = arith.constant 0 : index
    %c0_77 = arith.constant 0 : index
    %142 = vector.load %arg17[%c0_74, %c0_75, %c0_76, %c0_77] : memref<1x16x16x128xf32, #tpu.memory_space<vmem>>, vector<1x16x16x128xf32>
    %143 = vector.shape_cast %142 : vector<1x16x16x128xf32> to vector<16x16x128xf32>
    %144 = vector.shape_cast %141 : vector<16x16x128xf32> to vector<1x16x16x128xf32>
    tpu.vector_store %arg17[%c0_74, %c0_75, %c0_76, %c0_77], %144 {strides = array<i32>} : memref<1x16x16x128xf32, #tpu.memory_space<vmem>>, vector<1x16x16x128xf32>,
    return
  }
  func.func @transform_0(%arg0: i32) -> (i32, i32, i32, i32) {
    %c0_i32 = arith.constant 0 : i32
    %c0_i32_0 = arith.constant 0 : i32
    %c0_i32_1 = arith.constant 0 : i32
    %c0_i32_2 = arith.constant 0 : i32
    return %arg0, %c0_i32, %c0_i32_0, %c0_i32_1 : i32, i32, i32, i32
  }
  func.func @transform_1(%arg0: i32) -> (i32, i32) {
    %c0_i32 = arith.constant 0 : i32
    %c0_i32_0 = arith.constant 0 : i32
    %c0_i32_1 = arith.constant 0 : i32
    return %c0_i32, %c0_i32_0 : i32, i32
  }
  func.func @transform_2(%arg0: i32) -> (i32, i32) {
    %c0_i32 = arith.constant 0 : i32
    %c0_i32_0 = arith.constant 0 : i32
    %c0_i32_1 = arith.constant 0 : i32
    return %c0_i32, %c0_i32_0 : i32, i32
  }
  func.func @transform_3(%arg0: i32) -> (i32, i32) {
    %c0_i32 = arith.constant 0 : i32
    %c0_i32_0 = arith.constant 0 : i32
    %c0_i32_1 = arith.constant 0 : i32
    return %c0_i32, %c0_i32_0 : i32, i32
  }
  func.func @transform_4(%arg0: i32) -> (i32, i32) {
    %c0_i32 = arith.constant 0 : i32
    %c0_i32_0 = arith.constant 0 : i32
    %c0_i32_1 = arith.constant 0 : i32
    return %c0_i32, %c0_i32_0 : i32, i32
  }
  func.func @transform_5(%arg0: i32) -> (i32, i32) {
    %c0_i32 = arith.constant 0 : i32
    %c0_i32_0 = arith.constant 0 : i32
    %c0_i32_1 = arith.constant 0 : i32
    return %c0_i32, %c0_i32_0 : i32, i32
  }
  func.func @transform_6(%arg0: i32) -> (i32, i32) {
    %c0_i32 = arith.constant 0 : i32
    %c0_i32_0 = arith.constant 0 : i32
    %c0_i32_1 = arith.constant 0 : i32
    return %c0_i32, %c0_i32_0 : i32, i32
  }
  func.func @transform_7(%arg0: i32) -> (i32, i32) {
    %c0_i32 = arith.constant 0 : i32
    %c0_i32_0 = arith.constant 0 : i32
    %c0_i32_1 = arith.constant 0 : i32
    return %c0_i32, %c0_i32_0 : i32, i32
  }
  func.func @transform_8(%arg0: i32) -> (i32, i32) {
    %c0_i32 = arith.constant 0 : i32
    %c0_i32_0 = arith.constant 0 : i32
    %c0_i32_1 = arith.constant 0 : i32
    return %c0_i32, %c0_i32_0 : i32, i32
  }
  func.func @transform_9(%arg0: i32) -> (i32, i32) {
    %c0_i32 = arith.constant 0 : i32
    %c0_i32_0 = arith.constant 0 : i32
    %c0_i32_1 = arith.constant 0 : i32
    return %c0_i32, %c0_i32_0 : i32, i32
  }
  func.func @transform_10(%arg0: i32) -> (i32, i32, i32) {
    %c0_i32 = arith.constant 0 : i32
    %c0_i32_0 = arith.constant 0 : i32
    %c0_i32_1 = arith.constant 0 : i32
    %c0_i32_2 = arith.constant 0 : i32
    return %c0_i32, %c0_i32_0, %c0_i32_1 : i32, i32, i32
  }
  func.func @transform_11(%arg0: i32) -> (i32, i32, i32) {
    %c0_i32 = arith.constant 0 : i32
    %c0_i32_0 = arith.constant 0 : i32
    %c0_i32_1 = arith.constant 0 : i32
    %c0_i32_2 = arith.constant 0 : i32
    return %c0_i32, %c0_i32_0, %c0_i32_1 : i32, i32, i32
  }
  func.func @transform_12(%arg0: i32) -> (i32, i32) {
    %c0_i32 = arith.constant 0 : i32
    %c0_i32_0 = arith.constant 0 : i32
    %c0_i32_1 = arith.constant 0 : i32
    return %c0_i32, %c0_i32_0 : i32, i32
  }
  func.func @transform_13(%arg0: i32) -> (i32, i32) {
    %c0_i32 = arith.constant 0 : i32
    %c0_i32_0 = arith.constant 0 : i32
    %c0_i32_1 = arith.constant 0 : i32
    return %c0_i32, %c0_i32_0 : i32, i32
  }
  func.func @transform_14(%arg0: i32) -> (i32, i32) {
    %c0_i32 = arith.constant 0 : i32
    %c0_i32_0 = arith.constant 0 : i32
    %c0_i32_1 = arith.constant 0 : i32
    return %c0_i32, %c0_i32_0 : i32, i32
  }
  func.func @transform_15(%arg0: i32) -> (i32, i32) {
    %c0_i32 = arith.constant 0 : i32
    %c0_i32_0 = arith.constant 0 : i32
    %c0_i32_1 = arith.constant 0 : i32
    return %c0_i32, %c0_i32_0 : i32, i32
  }
  func.func @transform_16(%arg0: i32) -> (i32, i32, i32, i32) {
    %c0_i32 = arith.constant 0 : i32
    %c0_i32_0 = arith.constant 0 : i32
    %c0_i32_1 = arith.constant 0 : i32
    %c0_i32_2 = arith.constant 0 : i32
    return %arg0, %c0_i32, %c0_i32_0, %c0_i32_1 : i32, i32, i32, i32
  }
}

</mosaic_0001>

<llo_original>
// kernel: tpu_custom_call.1
$region0: #{tpu_custom_call.1}
  #allocation0 [shape = 'u32[]', space=smem, size = 0x4, offset = 0x4, fixed_abs, tag = 'smem constant byte address 0x4 - core index']
  #allocation1 [shape = 'u32[144,128]{1,0:T(1,128)}', space=vmem, size = 0x12000, scoped, tag = 'internal scratch']
  #allocation2 [shape = 'f32[256,128]{1,0:T(8,128)}', space=vmem, size = 0x20000, scoped, tag = 'scratch operand']
  %s0 = inlined_call_operand.hbm [shape: f32[2,16,16,64], index: 0, kind: input, shape index: {}]
  %s1 = inlined_call_operand.vmem [shape: f32[2,128], index: 1, kind: input, shape index: {}]
  %s2 = inlined_call_operand.vmem [shape: f32[1,64], index: 2, kind: input, shape index: {}]
  %s3 = inlined_call_operand.vmem [shape: f32[1,64], index: 3, kind: input, shape index: {}]
  %s4 = inlined_call_operand.vmem [shape: f32[64,32], index: 4, kind: input, shape index: {}]
  %s5 = inlined_call_operand.vmem [shape: f32[32,64], index: 5, kind: input, shape index: {}]
  %s6 = inlined_call_operand.vmem [shape: f32[1,128], index: 6, kind: input, shape index: {}]
  %s7 = inlined_call_operand.vmem [shape: f32[1,128], index: 7, kind: input, shape index: {}]
  %s8 = inlined_call_operand.vmem [shape: f32[128,32], index: 8, kind: input, shape index: {}]
  %s9 = inlined_call_operand.vmem [shape: f32[32,128], index: 9, kind: input, shape index: {}]
  %s10 = inlined_call_operand.vmem [shape: f32[3,192,128], index: 10, kind: input, shape index: {}]
  %s11 = inlined_call_operand.hbm [shape: f32[3,384,128], index: 11, kind: input, shape index: {}]
  %s12 = inlined_call_operand.vmem [shape: f32[1,128], index: 12, kind: input, shape index: {}]
  %s13 = inlined_call_operand.vmem [shape: f32[288,1], index: 13, kind: input, shape index: {}]
  %s14 = inlined_call_operand.vmem [shape: f32[288,1], index: 14, kind: input, shape index: {}]
  %s15 = inlined_call_operand.vmem [shape: f32[64,128], index: 15, kind: input, shape index: {}]
  %s16 = inlined_call_operand.hbm [shape: f32[2,16,16,128], index: 16, kind: output, shape index: {}]
  %s17 = sld [smem:[#allocation0]]
  $region105: #{tpu_custom_call.1} parent=0
    _
  %s19 = ssub.s32 1, %s17
  %s20 = scalar_select 0, %s19, %s17
  $region1: #{tpu_custom_call.1} parent=0
    #allocation3 [shape = 'u8[262144]{0}', space=vmem, size = 0x40000, scoped, tag = 'input window, operand 0']
    #allocation4 [shape = 's32[2]{0}', space=sflag, size = 0x8, scoped, tag = 'scoped memory for tpu_custom_call.1']
    #allocation5 [shape = 's32[2]{0}', space=sflag, size = 0x8, scoped, tag = 'scoped memory for tpu_custom_call.1']
    #allocation6 [shape = 'u8[589824]{0}', space=vmem, size = 0x90000, scoped, tag = 'input window, operand 11, single buffered']
    #allocation7 [shape = 's32[1]{0}', space=sflag, size = 0x4, scoped, tag = 'scoped memory for tpu_custom_call.1']
    #allocation8 [shape = 'u8[262144]{0}', space=vmem, size = 0x40000, scoped, tag = 'output window, operand 0']
    %21 = vsyncpa [#allocation4], 0
    %s22 = scalar_lea.sflag [#allocation4], 1
    %23 = vsyncpa %s22, 0
    %24 = vsyncpa [#allocation7], 0
    %25 = vsyncpa [#allocation5], 0
    %s26 = scalar_lea.sflag [#allocation5], 1
    %27 = vsyncpa %s26, 0
    loop: start=0, step=1, limit=4
    $region2: #{tpu_custom_call.1} parent=1 // loop_pre_header
      _
    $region3: #{tpu_custom_call.1} parent=1 // loop_header
      %s29 = sphi 0, %s33
      %p30 = scmp.ge.s32.totalorder %s29, 4
      %s39 = sphi 0, %s41
      %s42 = sphi 0, %s39
      %s43 = sphi 0, %s42
      %s59 = sphi 0, %s43
      %s63 = sphi 0, %s63
      %s65 = sphi 0, %s63
      %s66 = sphi 0, %s65
      %s80 = sphi 0, %s66
      %s84 = sphi 0, %s84
      %s86 = sphi 0, %s84
      %s87 = sphi 0, %s86
      %s101 = sphi 0, %s87
      %s105 = sphi 0, %s105
      %s107 = sphi 0, %s105
      %s108 = sphi 0, %s107
      %s122 = sphi 0, %s108
      %s126 = sphi 0, %s126
      %s128 = sphi 0, %s126
      %s129 = sphi 0, %s128
      %s143 = sphi 0, %s129
      %s147 = sphi 0, %s147
      %s149 = sphi 0, %s147
      %s150 = sphi 0, %s149
      %s164 = sphi 0, %s150
      %s168 = sphi 0, %s168
      %s170 = sphi 0, %s168
      %s171 = sphi 0, %s170
      %s185 = sphi 0, %s171
      %s189 = sphi 0, %s189
      %s191 = sphi 0, %s189
      %s192 = sphi 0, %s191
      %s206 = sphi 0, %s192
      %s210 = sphi 0, %s210
      %s212 = sphi 0, %s210
      %s213 = sphi 0, %s212
      %s227 = sphi 0, %s213
      %s231 = sphi 0, %s231
      %s233 = sphi 0, %s231
      %s234 = sphi 0, %s233
      %s248 = sphi 0, %s234
      %s252 = sphi 0, %s252
      %s254 = sphi 0, %s252
      %s255 = sphi 0, %s254
      %s269 = sphi 0, %s255
      %s273 = sphi 0, %s273
      %s275 = sphi 0, %s273
      %s276 = sphi 0, %s275
      %s290 = sphi 0, %s276
      %s294 = sphi 0, %s294
      %s296 = sphi 0, %s294
      %s297 = sphi 0, %s296
      %s311 = sphi 0, %s297
      %s315 = sphi 0, %s315
      %s317 = sphi 0, %s315
      %s318 = sphi 0, %s317
      %s332 = sphi 0, %s318
      %s336 = sphi 0, %s336
      %s338 = sphi 0, %s336
      %s339 = sphi 0, %s338
      %s353 = sphi 0, %s339
      %s357 = sphi 0, %s357
      %s359 = sphi 0, %s357
      %s360 = sphi 0, %s359
      %s374 = sphi 0, %s360
      %s380 = sphi 0, %s382
      %s383 = sphi 0, %s380
      %s384 = sphi 0, %s383
      %s400 = sphi 0, %s384
    $region4: #{tpu_custom_call.1} parent=1 // loop_header_branch
      %32 = sbr.rel (%p30) target = $region8
    $region5: #{tpu_custom_call.1} parent=1 // loop_body
      %s34 = ssub.s32 %s29, 1
      %s35 = ssub.s32 %s29, 2
      %s36 = sadd.s32 %s29, 1
      %s37 = ssub.s32 %s29, %s36
      %p38 = scmp.eq.s32.totalorder %s37, 0
      %s40 = sadd.s32 %s39, 1
      %s41 = scalar_select %p38, %s39, %s40
      %p44 = pneg %p38
      %p45 = scmp.eq.s32.totalorder %s29, 1
      %p46 = por %p44, %p45
      %p47 = scmp.ne.s32.totalorder %s39, %s42
      %p48 = scmp.eq.s32.totalorder %s29, 0
      %p49 = por %p47, %p48
      %p50 = scmp.ne.s32.totalorder %s39, %s42
      %p51 = scmp.eq.s32.totalorder %s34, 1
      %p52 = por %p50, %p51
      %p53 = scmp.ne.s32.totalorder %s42, %s43
      %p54 = scmp.eq.s32.totalorder %s34, 0
      %p55 = por %p53, %p54
      %p56 = scmp.ne.s32.totalorder %s42, %s43
      %p57 = scmp.eq.s32.totalorder %s35, 1
      %p58 = por %p56, %p57
      %p60 = scmp.ne.s32.totalorder %s43, %s59
      %p61 = scmp.eq.s32.totalorder %s35, 0
      %p62 = por %p60, %p61
      %s64 = sadd.s32 %s63, 1
      %p67 = scmp.eq.s32.totalorder %s29, 1
      %p68 = scmp.ne.s32.totalorder %s63, %s65
      %p69 = scmp.eq.s32.totalorder %s29, 0
      %p70 = por %p68, %p69
      %p71 = scmp.ne.s32.totalorder %s63, %s65
      %p72 = scmp.eq.s32.totalorder %s34, 1
      %p73 = por %p71, %p72
      %p74 = scmp.ne.s32.totalorder %s65, %s66
      %p75 = scmp.eq.s32.totalorder %s34, 0
      %p76 = por %p74, %p75
      %p77 = scmp.ne.s32.totalorder %s65, %s66
      %p78 = scmp.eq.s32.totalorder %s35, 1
      %p79 = por %p77, %p78
      %p81 = scmp.ne.s32.totalorder %s66, %s80
      %p82 = scmp.eq.s32.totalorder %s35, 0
      %p83 = por %p81, %p82
      %s85 = sadd.s32 %s84, 1
      %p88 = scmp.eq.s32.totalorder %s29, 1
      %p89 = scmp.ne.s32.totalorder %s84, %s86
      %p90 = scmp.eq.s32.totalorder %s29, 0
      %p91 = por %p89, %p90
      %p92 = scmp.ne.s32.totalorder %s84, %s86
      %p93 = scmp.eq.s32.totalorder %s34, 1
      %p94 = por %p92, %p93
      %p95 = scmp.ne.s32.totalorder %s86, %s87
      %p96 = scmp.eq.s32.totalorder %s34, 0
      %p97 = por %p95, %p96
      %p98 = scmp.ne.s32.totalorder %s86, %s87
      %p99 = scmp.eq.s32.totalorder %s35, 1
      %p100 = por %p98, %p99
      %p102 = scmp.ne.s32.totalorder %s87, %s101
      %p103 = scmp.eq.s32.totalorder %s35, 0
      %p104 = por %p102, %p103
      %s106 = sadd.s32 %s105, 1
      %p109 = scmp.eq.s32.totalorder %s29, 1
      %p110 = scmp.ne.s32.totalorder %s105, %s107
      %p111 = scmp.eq.s32.totalorder %s29, 0
      %p112 = por %p110, %p111
      %p113 = scmp.ne.s32.totalorder %s105, %s107
      %p114 = scmp.eq.s32.totalorder %s34, 1
      %p115 = por %p113, %p114
      %p116 = scmp.ne.s32.totalorder %s107, %s108
      %p117 = scmp.eq.s32.totalorder %s34, 0
      %p118 = por %p116, %p117
      %p119 = scmp.ne.s32.totalorder %s107, %s108
      %p120 = scmp.eq.s32.totalorder %s35, 1
      %p121 = por %p119, %p120
      %p123 = scmp.ne.s32.totalorder %s108, %s122
      %p124 = scmp.eq.s32.totalorder %s35, 0
      %p125 = por %p123, %p124
      %s127 = sadd.s32 %s126, 1
      %p130 = scmp.eq.s32.totalorder %s29, 1
      %p131 = scmp.ne.s32.totalorder %s126, %s128
      %p132 = scmp.eq.s32.totalorder %s29, 0
      %p133 = por %p131, %p132
      %p134 = scmp.ne.s32.totalorder %s126, %s128
      %p135 = scmp.eq.s32.totalorder %s34, 1
      %p136 = por %p134, %p135
      %p137 = scmp.ne.s32.totalorder %s128, %s129
      %p138 = scmp.eq.s32.totalorder %s34, 0
      %p139 = por %p137, %p138
      %p140 = scmp.ne.s32.totalorder %s128, %s129
      %p141 = scmp.eq.s32.totalorder %s35, 1
      %p142 = por %p140, %p141
      %p144 = scmp.ne.s32.totalorder %s129, %s143
      %p145 = scmp.eq.s32.totalorder %s35, 0
      %p146 = por %p144, %p145
      %s148 = sadd.s32 %s147, 1
      %p151 = scmp.eq.s32.totalorder %s29, 1
      %p152 = scmp.ne.s32.totalorder %s147, %s149
      %p153 = scmp.eq.s32.totalorder %s29, 0
      %p154 = por %p152, %p153
      %p155 = scmp.ne.s32.totalorder %s147, %s149
      %p156 = scmp.eq.s32.totalorder %s34, 1
      %p157 = por %p155, %p156
      %p158 = scmp.ne.s32.totalorder %s149, %s150
      %p159 = scmp.eq.s32.totalorder %s34, 0
      %p160 = por %p158, %p159
      %p161 = scmp.ne.s32.totalorder %s149, %s150
      %p162 = scmp.eq.s32.totalorder %s35, 1
      %p163 = por %p161, %p162
      %p165 = scmp.ne.s32.totalorder %s150, %s164
      %p166 = scmp.eq.s32.totalorder %s35, 0
      %p167 = por %p165, %p166
      %s169 = sadd.s32 %s168, 1
      %p172 = scmp.eq.s32.totalorder %s29, 1
      %p173 = scmp.ne.s32.totalorder %s168, %s170
      %p174 = scmp.eq.s32.totalorder %s29, 0
      %p175 = por %p173, %p174
      %p176 = scmp.ne.s32.totalorder %s168, %s170
      %p177 = scmp.eq.s32.totalorder %s34, 1
      %p178 = por %p176, %p177
      %p179 = scmp.ne.s32.totalorder %s170, %s171
      %p180 = scmp.eq.s32.totalorder %s34, 0
      %p181 = por %p179, %p180
      %p182 = scmp.ne.s32.totalorder %s170, %s171
      %p183 = scmp.eq.s32.totalorder %s35, 1
      %p184 = por %p182, %p183
      %p186 = scmp.ne.s32.totalorder %s171, %s185
      %p187 = scmp.eq.s32.totalorder %s35, 0
      %p188 = por %p186, %p187
      %s190 = sadd.s32 %s189, 1
      %p193 = scmp.eq.s32.totalorder %s29, 1
      %p194 = scmp.ne.s32.totalorder %s189, %s191
      %p195 = scmp.eq.s32.totalorder %s29, 0
      %p196 = por %p194, %p195
      %p197 = scmp.ne.s32.totalorder %s189, %s191
      %p198 = scmp.eq.s32.totalorder %s34, 1
      %p199 = por %p197, %p198
      %p200 = scmp.ne.s32.totalorder %s191, %s192
      %p201 = scmp.eq.s32.totalorder %s34, 0
      %p202 = por %p200, %p201
      %p203 = scmp.ne.s32.totalorder %s191, %s192
      %p204 = scmp.eq.s32.totalorder %s35, 1
      %p205 = por %p203, %p204
      %p207 = scmp.ne.s32.totalorder %s192, %s206
      %p208 = scmp.eq.s32.totalorder %s35, 0
      %p209 = por %p207, %p208
      %s211 = sadd.s32 %s210, 1
      %p214 = scmp.eq.s32.totalorder %s29, 1
      %p215 = scmp.ne.s32.totalorder %s210, %s212
      %p216 = scmp.eq.s32.totalorder %s29, 0
      %p217 = por %p215, %p216
      %p218 = scmp.ne.s32.totalorder %s210, %s212
      %p219 = scmp.eq.s32.totalorder %s34, 1
      %p220 = por %p218, %p219
      %p221 = scmp.ne.s32.totalorder %s212, %s213
      %p222 = scmp.eq.s32.totalorder %s34, 0
      %p223 = por %p221, %p222
      %p224 = scmp.ne.s32.totalorder %s212, %s213
      %p225 = scmp.eq.s32.totalorder %s35, 1
      %p226 = por %p224, %p225
      %p228 = scmp.ne.s32.totalorder %s213, %s227
      %p229 = scmp.eq.s32.totalorder %s35, 0
      %p230 = por %p228, %p229
      %s232 = sadd.s32 %s231, 1
      %p235 = scmp.eq.s32.totalorder %s29, 1
      %p236 = scmp.ne.s32.totalorder %s231, %s233
      %p237 = scmp.eq.s32.totalorder %s29, 0
      %p238 = por %p236, %p237
      %p239 = scmp.ne.s32.totalorder %s231, %s233
      %p240 = scmp.eq.s32.totalorder %s34, 1
      %p241 = por %p239, %p240
      %p242 = scmp.ne.s32.totalorder %s233, %s234
      %p243 = scmp.eq.s32.totalorder %s34, 0
      %p244 = por %p242, %p243
      %p245 = scmp.ne.s32.totalorder %s233, %s234
      %p246 = scmp.eq.s32.totalorder %s35, 1
      %p247 = por %p245, %p246
      %p249 = scmp.ne.s32.totalorder %s234, %s248
      %p250 = scmp.eq.s32.totalorder %s35, 0
      %p251 = por %p249, %p250
      %s253 = sadd.s32 %s252, 1
      %p256 = scmp.eq.s32.totalorder %s29, 1
      %p257 = scmp.ne.s32.totalorder %s252, %s254
      %p258 = scmp.eq.s32.totalorder %s29, 0
      %p259 = por %p257, %p258
      %p260 = scmp.ne.s32.totalorder %s252, %s254
      %p261 = scmp.eq.s32.totalorder %s34, 1
      %p262 = por %p260, %p261
      %p263 = scmp.ne.s32.totalorder %s254, %s255
      %p264 = scmp.eq.s32.totalorder %s34, 0
      %p265 = por %p263, %p264
      %p266 = scmp.ne.s32.totalorder %s254, %s255
      %p267 = scmp.eq.s32.totalorder %s35, 1
      %p268 = por %p266, %p267
      %p270 = scmp.ne.s32.totalorder %s255, %s269
      %p271 = scmp.eq.s32.totalorder %s35, 0
      %p272 = por %p270, %p271
      %s274 = sadd.s32 %s273, 1
      %p277 = scmp.eq.s32.totalorder %s29, 1
      %p278 = scmp.ne.s32.totalorder %s273, %s275
      %p279 = scmp.eq.s32.totalorder %s29, 0
      %p280 = por %p278, %p279
      %p281 = scmp.ne.s32.totalorder %s273, %s275
      %p282 = scmp.eq.s32.totalorder %s34, 1
      %p283 = por %p281, %p282
      %p284 = scmp.ne.s32.totalorder %s275, %s276
      %p285 = scmp.eq.s32.totalorder %s34, 0
      %p286 = por %p284, %p285
      %p287 = scmp.ne.s32.totalorder %s275, %s276
      %p288 = scmp.eq.s32.totalorder %s35, 1
      %p289 = por %p287, %p288
      %p291 = scmp.ne.s32.totalorder %s276, %s290
      %p292 = scmp.eq.s32.totalorder %s35, 0
      %p293 = por %p291, %p292
      %s295 = sadd.s32 %s294, 1
      %p298 = scmp.eq.s32.totalorder %s29, 1
      %p299 = scmp.ne.s32.totalorder %s294, %s296
      %p300 = scmp.eq.s32.totalorder %s29, 0
      %p301 = por %p299, %p300
      %p302 = scmp.ne.s32.totalorder %s294, %s296
      %p303 = scmp.eq.s32.totalorder %s34, 1
      %p304 = por %p302, %p303
      %p305 = scmp.ne.s32.totalorder %s296, %s297
      %p306 = scmp.eq.s32.totalorder %s34, 0
      %p307 = por %p305, %p306
      %p308 = scmp.ne.s32.totalorder %s296, %s297
      %p309 = scmp.eq.s32.totalorder %s35, 1
      %p310 = por %p308, %p309
      %p312 = scmp.ne.s32.totalorder %s297, %s311
      %p313 = scmp.eq.s32.totalorder %s35, 0
      %p314 = por %p312, %p313
      %s316 = sadd.s32 %s315, 1
      %p319 = scmp.eq.s32.totalorder %s29, 1
      %p320 = scmp.ne.s32.totalorder %s315, %s317
      %p321 = scmp.eq.s32.totalorder %s29, 0
      %p322 = por %p320, %p321
      %p323 = scmp.ne.s32.totalorder %s315, %s317
      %p324 = scmp.eq.s32.totalorder %s34, 1
      %p325 = por %p323, %p324
      %p326 = scmp.ne.s32.totalorder %s317, %s318
      %p327 = scmp.eq.s32.totalorder %s34, 0
      %p328 = por %p326, %p327
      %p329 = scmp.ne.s32.totalorder %s317, %s318
      %p330 = scmp.eq.s32.totalorder %s35, 1
      %p331 = por %p329, %p330
      %p333 = scmp.ne.s32.totalorder %s318, %s332
      %p334 = scmp.eq.s32.totalorder %s35, 0
      %p335 = por %p333, %p334
      %s337 = sadd.s32 %s336, 1
      %p340 = scmp.eq.s32.totalorder %s29, 1
      %p341 = scmp.ne.s32.totalorder %s336, %s338
      %p342 = scmp.eq.s32.totalorder %s29, 0
      %p343 = por %p341, %p342
      %p344 = scmp.ne.s32.totalorder %s336, %s338
      %p345 = scmp.eq.s32.totalorder %s34, 1
      %p346 = por %p344, %p345
      %p347 = scmp.ne.s32.totalorder %s338, %s339
      %p348 = scmp.eq.s32.totalorder %s34, 0
      %p349 = por %p347, %p348
      %p350 = scmp.ne.s32.totalorder %s338, %s339
      %p351 = scmp.eq.s32.totalorder %s35, 1
      %p352 = por %p350, %p351
      %p354 = scmp.ne.s32.totalorder %s339, %s353
      %p355 = scmp.eq.s32.totalorder %s35, 0
      %p356 = por %p354, %p355
      %s358 = sadd.s32 %s357, 1
      %p361 = scmp.eq.s32.totalorder %s29, 1
      %p362 = scmp.ne.s32.totalorder %s357, %s359
      %p363 = scmp.eq.s32.totalorder %s29, 0
      %p364 = por %p362, %p363
      %p365 = scmp.ne.s32.totalorder %s357, %s359
      %p366 = scmp.eq.s32.totalorder %s34, 1
      %p367 = por %p365, %p366
      %p368 = scmp.ne.s32.totalorder %s359, %s360
      %p369 = scmp.eq.s32.totalorder %s34, 0
      %p370 = por %p368, %p369
      %p371 = scmp.ne.s32.totalorder %s359, %s360
      %p372 = scmp.eq.s32.totalorder %s35, 1
      %p373 = por %p371, %p372
      %p375 = scmp.ne.s32.totalorder %s360, %s374
      %p376 = scmp.eq.s32.totalorder %s35, 0
      %p377 = por %p375, %p376
      %s378 = ssub.s32 %s29, %s36
      %p379 = scmp.eq.s32.totalorder %s378, 0
      %s381 = sadd.s32 %s380, 1
      %s382 = scalar_select %p379, %s380, %s381
      %p385 = pneg %p379
      %p386 = scmp.eq.s32.totalorder %s29, 1
      %p387 = por %p385, %p386
      %p388 = scmp.ne.s32.totalorder %s380, %s383
      %p389 = scmp.eq.s32.totalorder %s29, 0
      %p390 = por %p388, %p389
      %p391 = scmp.ne.s32.totalorder %s380, %s383
      %p392 = scmp.eq.s32.totalorder %s34, 1
      %p393 = por %p391, %p392
      %p394 = scmp.ne.s32.totalorder %s383, %s384
      %p395 = scmp.eq.s32.totalorder %s34, 0
      %p396 = por %p394, %p395
      %p397 = scmp.ne.s32.totalorder %s383, %s384
      %p398 = scmp.eq.s32.totalorder %s35, 1
      %p399 = por %p397, %p398
      %p401 = scmp.ne.s32.totalorder %s384, %s400
      %p402 = scmp.eq.s32.totalorder %s35, 0
      %p403 = por %p401, %p402
      %p404 = scmp.le.s32.totalorder 1, %s29
      %p405 = scmp.lt.s32.totalorder %s29, 3
      %p406 = pnand %p404, %p405
      %p407 = pneg %p406
      // Predicated region
      $region9: #{tpu_custom_call.1} parent=5 // pred_check
        _
      $region10: #{tpu_custom_call.1} parent=5 // pred_check_branch
        %409 = sbr.rel (%p406) target = $region12
      $region11: #{tpu_custom_call.1} parent=5 // pred_region
        %s410 = ssub.s32 %s29, 1
        // Predicated region
        $region13: #{tpu_custom_call.1} parent=11 // pred_check
          %p411 = pneg %p76
        $region14: #{tpu_custom_call.1} parent=11 // pred_check_branch
          %413 = sbr.rel (%p411) target = $region16
        $region15: #{tpu_custom_call.1} parent=11 // pred_region
          _
        $region16: #{tpu_custom_call.1} parent=11 // pred_fallthru
          _
        // Predicated region
        $region17: #{tpu_custom_call.1} parent=11 // pred_check
          %p414 = pneg %p97
        $region18: #{tpu_custom_call.1} parent=11 // pred_check_branch
          %416 = sbr.rel (%p414) target = $region20
        $region19: #{tpu_custom_call.1} parent=11 // pred_region
          _
        $region20: #{tpu_custom_call.1} parent=11 // pred_fallthru
          _
        // Predicated region
        $region21: #{tpu_custom_call.1} parent=11 // pred_check
          %p417 = pneg %p118
        $region22: #{tpu_custom_call.1} parent=11 // pred_check_branch
          %419 = sbr.rel (%p417) target = $region24
        $region23: #{tpu_custom_call.1} parent=11 // pred_region
          _
        $region24: #{tpu_custom_call.1} parent=11 // pred_fallthru
          _
        // Predicated region
        $region25: #{tpu_custom_call.1} parent=11 // pred_check
          %p420 = pneg %p139
        $region26: #{tpu_custom_call.1} parent=11 // pred_check_branch
          %422 = sbr.rel (%p420) target = $region28
        $region27: #{tpu_custom_call.1} parent=11 // pred_region
          _
        $region28: #{tpu_custom_call.1} parent=11 // pred_fallthru
          _
        // Predicated region
        $region29: #{tpu_custom_call.1} parent=11 // pred_check
          %p423 = pneg %p160
        $region30: #{tpu_custom_call.1} parent=11 // pred_check_branch
          %425 = sbr.rel (%p423) target = $region32
        $region31: #{tpu_custom_call.1} parent=11 // pred_region
          _
        $region32: #{tpu_custom_call.1} parent=11 // pred_fallthru
          _
        // Predicated region
        $region33: #{tpu_custom_call.1} parent=11 // pred_check
          %p426 = pneg %p181
        $region34: #{tpu_custom_call.1} parent=11 // pred_check_branch
          %428 = sbr.rel (%p426) target = $region36
        $region35: #{tpu_custom_call.1} parent=11 // pred_region
          _
        $region36: #{tpu_custom_call.1} parent=11 // pred_fallthru
          _
        // Predicated region
        $region37: #{tpu_custom_call.1} parent=11 // pred_check
          %p429 = pneg %p202
        $region38: #{tpu_custom_call.1} parent=11 // pred_check_branch
          %431 = sbr.rel (%p429) target = $region40
        $region39: #{tpu_custom_call.1} parent=11 // pred_region
          _
        $region40: #{tpu_custom_call.1} parent=11 // pred_fallthru
          _
        // Predicated region
        $region41: #{tpu_custom_call.1} parent=11 // pred_check
          %p432 = pneg %p223
        $region42: #{tpu_custom_call.1} parent=11 // pred_check_branch
          %434 = sbr.rel (%p432) target = $region44
        $region43: #{tpu_custom_call.1} parent=11 // pred_region
          _
        $region44: #{tpu_custom_call.1} parent=11 // pred_fallthru
          _
        // Predicated region
        $region45: #{tpu_custom_call.1} parent=11 // pred_check
          %p435 = pneg %p244
        $region46: #{tpu_custom_call.1} parent=11 // pred_check_branch
          %437 = sbr.rel (%p435) target = $region48
        $region47: #{tpu_custom_call.1} parent=11 // pred_region
          _
        $region48: #{tpu_custom_call.1} parent=11 // pred_fallthru
          _
        // Predicated region
        $region49: #{tpu_custom_call.1} parent=11 // pred_check
          %p438 = pneg %p265
        $region50: #{tpu_custom_call.1} parent=11 // pred_check_branch
          %440 = sbr.rel (%p438) target = $region52
        $region51: #{tpu_custom_call.1} parent=11 // pred_region
          _
        $region52: #{tpu_custom_call.1} parent=11 // pred_fallthru
          _
        // Predicated region
        $region53: #{tpu_custom_call.1} parent=11 // pred_check
          %p441 = pneg %p286
        $region54: #{tpu_custom_call.1} parent=11 // pred_check_branch
          %443 = sbr.rel (%p441) target = $region56
        $region55: #{tpu_custom_call.1} parent=11 // pred_region
          %s445 = ssub.s32 18432, 18432
          %446 = vsyncadd [#allocation7], %s445
          %s447 = sshll.u32 [#allocation6], 4
          %s448 = int_to_ptr.vmem [resolvable:$true] %s447
          %453 = dma.hbm_to_vmem [thread:$0]  %s11, 18432, %s448, [#allocation7], 128, 128, 8
        $region56: #{tpu_custom_call.1} parent=11 // pred_fallthru
          _
        // Predicated region
        $region57: #{tpu_custom_call.1} parent=11 // pred_check
          %p454 = pneg %p307
        $region58: #{tpu_custom_call.1} parent=11 // pred_check_branch
          %456 = sbr.rel (%p454) target = $region60
        $region59: #{tpu_custom_call.1} parent=11 // pred_region
          _
        $region60: #{tpu_custom_call.1} parent=11 // pred_fallthru
          _
        // Predicated region
        $region61: #{tpu_custom_call.1} parent=11 // pred_check
          %p457 = pneg %p328
        $region62: #{tpu_custom_call.1} parent=11 // pred_check_branch
          %459 = sbr.rel (%p457) target = $region64
        $region63: #{tpu_custom_call.1} parent=11 // pred_region
          _
        $region64: #{tpu_custom_call.1} parent=11 // pred_fallthru
          _
        // Predicated region
        $region65: #{tpu_custom_call.1} parent=11 // pred_check
          %p460 = pneg %p349
        $region66: #{tpu_custom_call.1} parent=11 // pred_check_branch
          %462 = sbr.rel (%p460) target = $region68
        $region67: #{tpu_custom_call.1} parent=11 // pred_region
          _
        $region68: #{tpu_custom_call.1} parent=11 // pred_fallthru
          _
        // Predicated region
        $region69: #{tpu_custom_call.1} parent=11 // pred_check
          %p463 = pneg %p370
        $region70: #{tpu_custom_call.1} parent=11 // pred_check_branch
          %465 = sbr.rel (%p463) target = $region72
        $region71: #{tpu_custom_call.1} parent=11 // pred_region
          _
        $region72: #{tpu_custom_call.1} parent=11 // pred_fallthru
          _
      $region12: #{tpu_custom_call.1} parent=5 // pred_fallthru
        _
      %p466 = scmp.lt.s32.totalorder %s29, 2
      // Predicated region
      $region73: #{tpu_custom_call.1} parent=5 // pred_check
        %p467 = pneg %p466
      $region74: #{tpu_custom_call.1} parent=5 // pred_check_branch
        %469 = sbr.rel (%p467) target = $region76
      $region75: #{tpu_custom_call.1} parent=5 // pred_region
        // Predicated region
        $region77: #{tpu_custom_call.1} parent=75 // pred_check
          %p470 = pneg %p49
        $region78: #{tpu_custom_call.1} parent=75 // pred_check_branch
          %472 = sbr.rel (%p470) target = $region80
        $region79: #{tpu_custom_call.1} parent=75 // pred_region
          %s473 = sand.u32 %s39, 1
          %s474 = scalar_lea.sflag [#allocation4], %s473
          %s475 = sand.u32 %s39, 1
          %s476 = smul.addr %s475, 256
          %s477 = scalar_lea.vmem [#allocation3], %s476
          %s479 = ssub.s32 4096, 4096
          %480 = vsyncadd %s474, %s479
          %s481 = smul.addr %s29, 32
          %s482 = smul.addr %s481, 128
          %s483 = scalar_lea.hbm %s0, %s482
          %s484 = sshll.u32 %s477, 4
          %s485 = int_to_ptr.vmem [resolvable:$true] %s484
          %490 = dma.hbm_to_vmem [thread:$0]  %s483, 4096, %s485, %s474, 128, 128, 8
        $region80: #{tpu_custom_call.1} parent=75 // pred_fallthru
          _
      $region76: #{tpu_custom_call.1} parent=5 // pred_fallthru
        _
      %p491 = scmp.le.s32.totalorder 1, %s29
      %p492 = scmp.lt.s32.totalorder %s29, 3
      %p493 = pnand %p491, %p492
      %p494 = pneg %p493
      // Predicated region
      $region81: #{tpu_custom_call.1} parent=5 // pred_check
        _
      $region82: #{tpu_custom_call.1} parent=5 // pred_check_branch
        %496 = sbr.rel (%p493) target = $region84
      $region83: #{tpu_custom_call.1} parent=5 // pred_region
        %s497 = ssub.s32 %s29, 1
        %s498 = sand.u32 %s42, 1
        %s499 = scalar_lea.sflag [#allocation4], %s498
        %s500 = sand.u32 %s42, 1
        %s501 = smul.addr %s500, 256
        %s502 = scalar_lea.vmem [#allocation3], %s501
        // Predicated region
        $region85: #{tpu_custom_call.1} parent=83 // pred_check
          %p503 = pneg %p55
        $region86: #{tpu_custom_call.1} parent=83 // pred_check_branch
          %505 = sbr.rel (%p503) target = $region88
        $region87: #{tpu_custom_call.1} parent=83 // pred_region
          %506 = dma.done %s499, 4096
        $region88: #{tpu_custom_call.1} parent=83 // pred_fallthru
          _
        // Predicated region
        $region89: #{tpu_custom_call.1} parent=83 // pred_check
          %p507 = pneg %p286
        $region90: #{tpu_custom_call.1} parent=83 // pred_check_branch
          %509 = sbr.rel (%p507) target = $region92
        $region91: #{tpu_custom_call.1} parent=83 // pred_region
          %510 = dma.done [#allocation7], 18432
        $region92: #{tpu_custom_call.1} parent=83 // pred_fallthru
          _
        %s511 = sand.u32 %s42, 1
        %s512 = scalar_lea.sflag [#allocation4], %s511
        %s513 = sand.u32 %s42, 1
        %s514 = smul.addr %s513, 256
        %s515 = scalar_lea.vmem [#allocation3], %s514
        %p516 = pneg %p55
        %p517 = pneg %p52
        %p518 = pneg %p76
        %p519 = pneg %p73
        %p520 = pneg %p97
        %p521 = pneg %p94
        %p522 = pneg %p118
        %p523 = pneg %p115
        %p524 = pneg %p139
        %p525 = pneg %p136
        %p526 = pneg %p160
        %p527 = pneg %p157
        %p528 = pneg %p181
        %p529 = pneg %p178
        %p530 = pneg %p202
        %p531 = pneg %p199
        %p532 = pneg %p223
        %p533 = pneg %p220
        %p534 = pneg %p244
        %p535 = pneg %p241
        %p536 = pneg %p265
        %p537 = pneg %p262
        %p538 = pneg %p286
        %p539 = pneg %p283
        %p540 = pneg %p307
        %p541 = pneg %p304
        %p542 = pneg %p328
        %p543 = pneg %p325
        %p544 = pneg %p349
        %p545 = pneg %p346
        %p546 = pneg %p370
        %p547 = pneg %p367
        %p548 = pneg %p396
        %p549 = pneg %p393
        %s550 = sand.u32 %s383, 1
        %s551 = scalar_lea.sflag [#allocation5], %s550
        %s552 = sand.u32 %s383, 1
        %s553 = smul.addr %s552, 256
        %s554 = scalar_lea.vmem [#allocation8], %s553
        %v555 = vld [vmem:[%s13] sm:$0xff]
        %v556 = vld [vmem:[%s13 + $0x8] sm:$0xff]
        %v557 = vld [vmem:[%s13 + $0x10] sm:$0xff]
        %v558 = vld [vmem:[%s13 + $0x18] sm:$0xff]
        %v559 = vld [vmem:[%s13 + $0x20] sm:$0xff]
        %v560 = vld [vmem:[%s13 + $0x28] sm:$0xff]
        %v561 = vld [vmem:[%s13 + $0x30] sm:$0xff]
        %v562 = vld [vmem:[%s13 + $0x38] sm:$0xff]
        %v563 = vld [vmem:[%s13 + $0x40] sm:$0xff]
        %v564 = vld [vmem:[%s13 + $0x48] sm:$0xff]
        %v565 = vld [vmem:[%s13 + $0x50] sm:$0xff]
        %v566 = vld [vmem:[%s13 + $0x58] sm:$0xff]
        %v567 = vld [vmem:[%s13 + $0x60] sm:$0xff]
        %v568 = vld [vmem:[%s13 + $0x68] sm:$0xff]
        %v569 = vld [vmem:[%s13 + $0x70] sm:$0xff]
        %v570 = vld [vmem:[%s13 + $0x78] sm:$0xff]
        %v571 = vld [vmem:[%s13 + $0x80] sm:$0xff]
        %v572 = vld [vmem:[%s13 + $0x88] sm:$0xff]
        %v573 = vld [vmem:[%s13 + $0x90] sm:$0xff]
        %v574 = vld [vmem:[%s13 + $0x98] sm:$0xff]
        %v575 = vld [vmem:[%s13 + $0xa0] sm:$0xff]
        %v576 = vld [vmem:[%s13 + $0xa8] sm:$0xff]
        %v577 = vld [vmem:[%s13 + $0xb0] sm:$0xff]
        %v578 = vld [vmem:[%s13 + $0xb8] sm:$0xff]
        %v579 = vld [vmem:[%s13 + $0xc0] sm:$0xff]
        %v580 = vld [vmem:[%s13 + $0xc8] sm:$0xff]
        %v581 = vld [vmem:[%s13 + $0xd0] sm:$0xff]
        %v582 = vld [vmem:[%s13 + $0xd8] sm:$0xff]
        %v583 = vld [vmem:[%s13 + $0xe0] sm:$0xff]
        %v584 = vld [vmem:[%s13 + $0xe8] sm:$0xff]
        %v585 = vld [vmem:[%s13 + $0xf0] sm:$0xff]
        %v586 = vld [vmem:[%s13 + $0xf8] sm:$0xff]
        %v587 = vld [vmem:[%s13 + $0x100] sm:$0xff]
        %v588 = vld [vmem:[%s13 + $0x108] sm:$0xff]
        %v589 = vld [vmem:[%s13 + $0x110] sm:$0xff]
        %v590 = vld [vmem:[%s13 + $0x118] sm:$0xff]
        %v591 = vld [vmem:[%s14] sm:$0xff]
        %v592 = vld [vmem:[%s14 + $0x8] sm:$0xff]
        %v593 = vld [vmem:[%s14 + $0x10] sm:$0xff]
        %v594 = vld [vmem:[%s14 + $0x18] sm:$0xff]
        %v595 = vld [vmem:[%s14 + $0x20] sm:$0xff]
        %v596 = vld [vmem:[%s14 + $0x28] sm:$0xff]
        %v597 = vld [vmem:[%s14 + $0x30] sm:$0xff]
        %v598 = vld [vmem:[%s14 + $0x38] sm:$0xff]
        %v599 = vld [vmem:[%s14 + $0x40] sm:$0xff]
        %v600 = vld [vmem:[%s14 + $0x48] sm:$0xff]
        %v601 = vld [vmem:[%s14 + $0x50] sm:$0xff]
        %v602 = vld [vmem:[%s14 + $0x58] sm:$0xff]
        %v603 = vld [vmem:[%s14 + $0x60] sm:$0xff]
        %v604 = vld [vmem:[%s14 + $0x68] sm:$0xff]
        %v605 = vld [vmem:[%s14 + $0x70] sm:$0xff]
        %v606 = vld [vmem:[%s14 + $0x78] sm:$0xff]
        %v607 = vld [vmem:[%s14 + $0x80] sm:$0xff]
        %v608 = vld [vmem:[%s14 + $0x88] sm:$0xff]
        %v609 = vld [vmem:[%s14 + $0x90] sm:$0xff]
        %v610 = vld [vmem:[%s14 + $0x98] sm:$0xff]
        %v611 = vld [vmem:[%s14 + $0xa0] sm:$0xff]
        %v612 = vld [vmem:[%s14 + $0xa8] sm:$0xff]
        %v613 = vld [vmem:[%s14 + $0xb0] sm:$0xff]
        %v614 = vld [vmem:[%s14 + $0xb8] sm:$0xff]
        %v615 = vld [vmem:[%s14 + $0xc0] sm:$0xff]
        %v616 = vld [vmem:[%s14 + $0xc8] sm:$0xff]
        %v617 = vld [vmem:[%s14 + $0xd0] sm:$0xff]
        %v618 = vld [vmem:[%s14 + $0xd8] sm:$0xff]
        %v619 = vld [vmem:[%s14 + $0xe0] sm:$0xff]
        %v620 = vld [vmem:[%s14 + $0xe8] sm:$0xff]
        %v621 = vld [vmem:[%s14 + $0xf0] sm:$0xff]
        %v622 = vld [vmem:[%s14 + $0xf8] sm:$0xff]
        %v623 = vld [vmem:[%s14 + $0x100] sm:$0xff]
        %v624 = vld [vmem:[%s14 + $0x108] sm:$0xff]
        %v625 = vld [vmem:[%s14 + $0x110] sm:$0xff]
        %v626 = vld [vmem:[%s14 + $0x118] sm:$0xff]
        %v627 = vld [vmem:[%s502] sm:$0xff]
        %v628 = vld [vmem:[%s502 + $0x8] sm:$0xff]
        %v629 = vld [vmem:[%s502 + $0x10] sm:$0xff]
        %v630 = vld [vmem:[%s502 + $0x18] sm:$0xff]
        %v631 = vld [vmem:[%s502 + $0x20] sm:$0xff]
        %v632 = vld [vmem:[%s502 + $0x28] sm:$0xff]
        %v633 = vld [vmem:[%s502 + $0x30] sm:$0xff]
        %v634 = vld [vmem:[%s502 + $0x38] sm:$0xff]
        %v635 = vld [vmem:[%s502 + $0x40] sm:$0xff]
        %v636 = vld [vmem:[%s502 + $0x48] sm:$0xff]
        %v637 = vld [vmem:[%s502 + $0x50] sm:$0xff]
        %v638 = vld [vmem:[%s502 + $0x58] sm:$0xff]
        %v639 = vld [vmem:[%s502 + $0x60] sm:$0xff]
        %v640 = vld [vmem:[%s502 + $0x68] sm:$0xff]
        %v641 = vld [vmem:[%s502 + $0x70] sm:$0xff]
        %v642 = vld [vmem:[%s502 + $0x78] sm:$0xff]
        %v643 = vld [vmem:[%s502 + $0x80] sm:$0xff]
        %v644 = vld [vmem:[%s502 + $0x88] sm:$0xff]
        %v645 = vld [vmem:[%s502 + $0x90] sm:$0xff]
        %v646 = vld [vmem:[%s502 + $0x98] sm:$0xff]
        %v647 = vld [vmem:[%s502 + $0xa0] sm:$0xff]
        %v648 = vld [vmem:[%s502 + $0xa8] sm:$0xff]
        %v649 = vld [vmem:[%s502 + $0xb0] sm:$0xff]
        %v650 = vld [vmem:[%s502 + $0xb8] sm:$0xff]
        %v651 = vld [vmem:[%s502 + $0xc0] sm:$0xff]
        %v652 = vld [vmem:[%s502 + $0xc8] sm:$0xff]
        %v653 = vld [vmem:[%s502 + $0xd0] sm:$0xff]
        %v654 = vld [vmem:[%s502 + $0xd8] sm:$0xff]
        %v655 = vld [vmem:[%s502 + $0xe0] sm:$0xff]
        %v656 = vld [vmem:[%s502 + $0xe8] sm:$0xff]
        %v657 = vld [vmem:[%s502 + $0xf0] sm:$0xff]
        %v658 = vld [vmem:[%s502 + $0xf8] sm:$0xff]
        %v659 = vld [vmem:[%s15] sm:$0xff]
        %v660 = vld [vmem:[%s15 + $0x8] sm:$0xff]
        %v661 = vld [vmem:[%s15 + $0x10] sm:$0xff]
        %v662 = vld [vmem:[%s15 + $0x18] sm:$0xff]
        %v663 = vld [vmem:[%s15 + $0x20] sm:$0xff]
        %v664 = vld [vmem:[%s15 + $0x28] sm:$0xff]
        %v665 = vld [vmem:[%s15 + $0x30] sm:$0xff]
        %v666 = vld [vmem:[%s15 + $0x38] sm:$0xff]
        %vm667 = vcmask 523264
        %v669 = vsel %vm667, %v627, 0
        %v672 = vsel %vm667, %v628, 0
        %v675 = vsel %vm667, %v629, 0
        %v678 = vsel %vm667, %v630, 0
        %v681 = vsel %vm667, %v631, 0
        %v684 = vsel %vm667, %v632, 0
        %v687 = vsel %vm667, %v633, 0
        %v690 = vsel %vm667, %v634, 0
        %v693 = vsel %vm667, %v635, 0
        %v696 = vsel %vm667, %v636, 0
        %v699 = vsel %vm667, %v637, 0
        %v702 = vsel %vm667, %v638, 0
        %v705 = vsel %vm667, %v639, 0
        %v708 = vsel %vm667, %v640, 0
        %v711 = vsel %vm667, %v641, 0
        %v714 = vsel %vm667, %v642, 0
        %v717 = vsel %vm667, %v643, 0
        %v720 = vsel %vm667, %v644, 0
        %v723 = vsel %vm667, %v645, 0
        %v726 = vsel %vm667, %v646, 0
        %v729 = vsel %vm667, %v647, 0
        %v732 = vsel %vm667, %v648, 0
        %v735 = vsel %vm667, %v649, 0
        %v738 = vsel %vm667, %v650, 0
        %v741 = vsel %vm667, %v651, 0
        %v744 = vsel %vm667, %v652, 0
        %v747 = vsel %vm667, %v653, 0
        %v750 = vsel %vm667, %v654, 0
        %v753 = vsel %vm667, %v655, 0
        %v756 = vsel %vm667, %v656, 0
        %v759 = vsel %vm667, %v657, 0
        %v762 = vsel %vm667, %v658, 0
        %764 = vmatprep.subr.mxu0 0.0
        %765 = vmatpush1.msra.mxu0 %v659
        %766 = vmatprep.subr.mxu0 0.0
        %767 = vmatpush1.msra.mxu0 %v660
        %768 = vmatprep.subr.mxu0 0.0
        %769 = vmatpush1.msra.mxu0 %v661
        %770 = vmatprep.subr.mxu0 0.0
        %771 = vmatpush1.msra.mxu0 %v662
        %772 = vmatprep.subr.mxu0 0.0
        %773 = vmatpush1.msra.mxu0 %v663
        %774 = vmatprep.subr.mxu0 0.0
        %775 = vmatpush1.msra.mxu0 %v664
        %776 = vmatprep.subr.mxu0 0.0
        %777 = vmatpush1.msra.mxu0 %v665
        %778 = vmatprep.subr.mxu0 0.0
        %779 = vmatpush1.msra.mxu0 %v666
        %780 = vmatprep.subr.mxu0 0.0
        %781 = vmatpush1.msra.mxu0 0.0
        %782 = vmatprep.subr.mxu0 0.0
        %783 = vmatpush1.msra.mxu0 0.0
        %784 = vmatprep.subr.mxu0 0.0
        %785 = vmatpush1.msra.mxu0 0.0
        %786 = vmatprep.subr.mxu0 0.0
        %787 = vmatpush1.msra.mxu0 0.0
        %788 = vmatprep.subr.mxu0 0.0
        %789 = vmatpush1.msra.mxu0 0.0
        %790 = vmatprep.subr.mxu0 0.0
        %791 = vmatpush1.msra.mxu0 0.0
        %792 = vmatprep.subr.mxu0 0.0
        %793 = vmatpush1.msra.mxu0 0.0
        %794 = vmatprep.subr.mxu0 0.0
        %795 = vmatpush1.msra.mxu0 0.0
        %796 = vmatprep.subr.mxu0 0.0
        %797 = vmatpush1.msra.mxu0 0.0
        %798 = vmatprep.subr.mxu0 0.0
        %799 = vmatpush1.msra.mxu0 0.0
        %800 = vmatprep.subr.mxu0 0.0
        %801 = vmatpush1.msra.mxu0 0.0
        %802 = vmatprep.subr.mxu0 0.0
        %803 = vmatpush1.msra.mxu0 0.0
        %804 = vmatprep.subr.mxu0 0.0
        %805 = vmatpush1.msra.mxu0 0.0
        %806 = vmatprep.subr.mxu0 0.0
        %807 = vmatpush1.msra.mxu0 0.0
        %808 = vmatprep.subr.mxu0 0.0
        %809 = vmatpush1.msra.mxu0 0.0
        %810 = vmatprep.subr.mxu0 0.0
        %811 = vmatpush1.msra.mxu0 0.0
        %812 = vmatprep.subr.mxu0 0.0
        %813 = vmatpush1.msra.mxu0 0.0
        %814 = vmatprep.subr.mxu0 0.0
        %815 = vmatpush1.msra.mxu0 0.0
        %816 = vmatprep.subr.mxu0 0.0
        %817 = vmatpush1.msra.mxu0 0.0
        %818 = vmatprep.subr.mxu0 0.0
        %819 = vmatpush1.msra.mxu0 0.0
        %820 = vmatprep.subr.mxu0 0.0
        %821 = vmatpush1.msra.mxu0 0.0
        %822 = vmatprep.subr.mxu0 0.0
        %823 = vmatpush1.msra.mxu0 0.0
        %824 = vmatprep.subr.mxu0 0.0
        %825 = vmatpush1.msra.mxu0 0.0
        %826 = vmatprep.subr.mxu0 0.0
        %827 = vmatpush1.msra.mxu0 0.0
        %828 = vmatprep.mubr.f32.mxu0 0.0
        %829 = vmatmul.mubr.f32.gmra.mrb[0].mxu0 %v669
        %v830 = vpop.f32.mrb[0].mxu0
        %v831 = vadd.f32 0.0, %v830
        %v832 = vpop.f32.mrb[0].mxu0
        %833 = vmatprep.mubr.f32.mxu0 0.0
        %834 = vmatmul.mubr.f32.gmra.mrb[0].mxu0 %v672
        %v835 = vpop.f32.mrb[0].mxu0
        %v836 = vadd.f32 0.0, %v835
        %v837 = vpop.f32.mrb[0].mxu0
        %838 = vmatprep.mubr.f32.mxu0 0.0
        %839 = vmatmul.mubr.f32.gmra.mrb[0].mxu0 %v675
        %v840 = vpop.f32.mrb[0].mxu0
        %v841 = vadd.f32 0.0, %v840
        %v842 = vpop.f32.mrb[0].mxu0
        %843 = vmatprep.mubr.f32.mxu0 0.0
        %844 = vmatmul.mubr.f32.gmra.mrb[0].mxu0 %v678
        %v845 = vpop.f32.mrb[0].mxu0
        %v846 = vadd.f32 0.0, %v845
        %v847 = vpop.f32.mrb[0].mxu0
        %848 = vmatprep.mubr.f32.mxu0 0.0
        %849 = vmatmul.mubr.f32.gmra.mrb[0].mxu0 %v681
        %v850 = vpop.f32.mrb[0].mxu0
        %v851 = vadd.f32 0.0, %v850
        %v852 = vpop.f32.mrb[0].mxu0
        %853 = vmatprep.mubr.f32.mxu0 0.0
        %854 = vmatmul.mubr.f32.gmra.mrb[0].mxu0 %v684
        %v855 = vpop.f32.mrb[0].mxu0
        %v856 = vadd.f32 0.0, %v855
        %v857 = vpop.f32.mrb[0].mxu0
        %858 = vmatprep.mubr.f32.mxu0 0.0
        %859 = vmatmul.mubr.f32.gmra.mrb[0].mxu0 %v687
        %v860 = vpop.f32.mrb[0].mxu0
        %v861 = vadd.f32 0.0, %v860
        %v862 = vpop.f32.mrb[0].mxu0
        %863 = vmatprep.mubr.f32.mxu0 0.0
        %864 = vmatmul.mubr.f32.gmra.mrb[0].mxu0 %v690
        %v865 = vpop.f32.mrb[0].mxu0
        %v866 = vadd.f32 0.0, %v865
        %v867 = vpop.f32.mrb[0].mxu0
        %868 = vmatprep.mubr.f32.mxu0 0.0
        %869 = vmatmul.mubr.f32.gmra.mrb[0].mxu0 %v693
        %v870 = vpop.f32.mrb[0].mxu0
        %v871 = vadd.f32 0.0, %v870
        %v872 = vpop.f32.mrb[0].mxu0
        %873 = vmatprep.mubr.f32.mxu0 0.0
        %874 = vmatmul.mubr.f32.gmra.mrb[0].mxu0 %v696
        %v875 = vpop.f32.mrb[0].mxu0
        %v876 = vadd.f32 0.0, %v875
        %v877 = vpop.f32.mrb[0].mxu0
        %878 = vmatprep.mubr.f32.mxu0 0.0
        %879 = vmatmul.mubr.f32.gmra.mrb[0].mxu0 %v699
        %v880 = vpop.f32.mrb[0].mxu0
        %v881 = vadd.f32 0.0, %v880
        %v882 = vpop.f32.mrb[0].mxu0
        %883 = vmatprep.mubr.f32.mxu0 0.0
        %884 = vmatmul.mubr.f32.gmra.mrb[0].mxu0 %v702
        %v885 = vpop.f32.mrb[0].mxu0
        %v886 = vadd.f32 0.0, %v885
        %v887 = vpop.f32.mrb[0].mxu0
        %888 = vmatprep.mubr.f32.mxu0 0.0
        %889 = vmatmul.mubr.f32.gmra.mrb[0].mxu0 %v705
        %v890 = vpop.f32.mrb[0].mxu0
        %v891 = vadd.f32 0.0, %v890
        %v892 = vpop.f32.mrb[0].mxu0
        %893 = vmatprep.mubr.f32.mxu0 0.0
        %894 = vmatmul.mubr.f32.gmra.mrb[0].mxu0 %v708
        %v895 = vpop.f32.mrb[0].mxu0
        %v896 = vadd.f32 0.0, %v895
        %v897 = vpop.f32.mrb[0].mxu0
        %898 = vmatprep.mubr.f32.mxu0 0.0
        %899 = vmatmul.mubr.f32.gmra.mrb[0].mxu0 %v711
        %v900 = vpop.f32.mrb[0].mxu0
        %v901 = vadd.f32 0.0, %v900
        %v902 = vpop.f32.mrb[0].mxu0
        %903 = vmatprep.mubr.f32.mxu0 0.0
        %904 = vmatmul.mubr.f32.gmra.mrb[0].mxu0 %v714
        %v905 = vpop.f32.mrb[0].mxu0
        %v906 = vadd.f32 0.0, %v905
        %v907 = vpop.f32.mrb[0].mxu0
        %908 = vmatprep.mubr.f32.mxu0 0.0
        %909 = vmatmul.mubr.f32.gmra.mrb[0].mxu0 %v717
        %v910 = vpop.f32.mrb[0].mxu0
        %v911 = vadd.f32 0.0, %v910
        %v912 = vpop.f32.mrb[0].mxu0
        %913 = vmatprep.mubr.f32.mxu0 0.0
        %914 = vmatmul.mubr.f32.gmra.mrb[0].mxu0 %v720
        %v915 = vpop.f32.mrb[0].mxu0
        %v916 = vadd.f32 0.0, %v915
        %v917 = vpop.f32.mrb[0].mxu0
        %918 = vmatprep.mubr.f32.mxu0 0.0
        %919 = vmatmul.mubr.f32.gmra.mrb[0].mxu0 %v723
        %v920 = vpop.f32.mrb[0].mxu0
        %v921 = vadd.f32 0.0, %v920
        %v922 = vpop.f32.mrb[0].mxu0
        %923 = vmatprep.mubr.f32.mxu0 0.0
        %924 = vmatmul.mubr.f32.gmra.mrb[0].mxu0 %v726
        %v925 = vpop.f32.mrb[0].mxu0
        %v926 = vadd.f32 0.0, %v925
        %v927 = vpop.f32.mrb[0].mxu0
        %928 = vmatprep.mubr.f32.mxu0 0.0
        %929 = vmatmul.mubr.f32.gmra.mrb[0].mxu0 %v729
        %v930 = vpop.f32.mrb[0].mxu0
        %v931 = vadd.f32 0.0, %v930
        %v932 = vpop.f32.mrb[0].mxu0
        %933 = vmatprep.mubr.f32.mxu0 0.0
        %934 = vmatmul.mubr.f32.gmra.mrb[0].mxu0 %v732
        %v935 = vpop.f32.mrb[0].mxu0
        %v936 = vadd.f32 0.0, %v935
        %v937 = vpop.f32.mrb[0].mxu0
        %938 = vmatprep.mubr.f32.mxu0 0.0
        %939 = vmatmul.mubr.f32.gmra.mrb[0].mxu0 %v735
        %v940 = vpop.f32.mrb[0].mxu0
        %v941 = vadd.f32 0.0, %v940
        %v942 = vpop.f32.mrb[0].mxu0
        %943 = vmatprep.mubr.f32.mxu0 0.0
        %944 = vmatmul.mubr.f32.gmra.mrb[0].mxu0 %v738
        %v945 = vpop.f32.mrb[0].mxu0
        %v946 = vadd.f32 0.0, %v945
        %v947 = vpop.f32.mrb[0].mxu0
        %948 = vmatprep.mubr.f32.mxu0 0.0
        %949 = vmatmul.mubr.f32.gmra.mrb[0].mxu0 %v741
        %v950 = vpop.f32.mrb[0].mxu0
        %v951 = vadd.f32 0.0, %v950
        %v952 = vpop.f32.mrb[0].mxu0
        %953 = vmatprep.mubr.f32.mxu0 0.0
        %954 = vmatmul.mubr.f32.gmra.mrb[0].mxu0 %v744
        %v955 = vpop.f32.mrb[0].mxu0
        %v956 = vadd.f32 0.0, %v955
        %v957 = vpop.f32.mrb[0].mxu0
        %958 = vmatprep.mubr.f32.mxu0 0.0
        %959 = vmatmul.mubr.f32.gmra.mrb[0].mxu0 %v747
        %v960 = vpop.f32.mrb[0].mxu0
        %v961 = vadd.f32 0.0, %v960
        %v962 = vpop.f32.mrb[0].mxu0
        %963 = vmatprep.mubr.f32.mxu0 0.0
        %964 = vmatmul.mubr.f32.gmra.mrb[0].mxu0 %v750
        %v965 = vpop.f32.mrb[0].mxu0
        %v966 = vadd.f32 0.0, %v965
        %v967 = vpop.f32.mrb[0].mxu0
        %968 = vmatprep.mubr.f32.mxu0 0.0
        %969 = vmatmul.mubr.f32.gmra.mrb[0].mxu0 %v753
        %v970 = vpop.f32.mrb[0].mxu0
        %v971 = vadd.f32 0.0, %v970
        %v972 = vpop.f32.mrb[0].mxu0
        %973 = vmatprep.mubr.f32.mxu0 0.0
        %974 = vmatmul.mubr.f32.gmra.mrb[0].mxu0 %v756
        %v975 = vpop.f32.mrb[0].mxu0
        %v976 = vadd.f32 0.0, %v975
        %v977 = vpop.f32.mrb[0].mxu0
        %978 = vmatprep.mubr.f32.mxu0 0.0
        %979 = vmatmul.mubr.f32.gmra.mrb[0].mxu0 %v759
        %v980 = vpop.f32.mrb[0].mxu0
        %v981 = vadd.f32 0.0, %v980
        %v982 = vpop.f32.mrb[0].mxu0
        %983 = vmatprep.mubr.f32.mxu0 0.0
        %984 = vmatmul.mubr.f32.gmra.mrb[0].mxu0 %v762
        %v985 = vpop.f32.mrb[0].mxu0
        %v986 = vadd.f32 0.0, %v985
        %v987 = vpop.f32.mrb[0].mxu0
        %988 = vdwg.mxu0
        %989 = vst [vmem:[#allocation2] sm:$0xff] %v831
        %990 = vst [vmem:[#allocation2 + $0x8] sm:$0xff] %v836
        %991 = vst [vmem:[#allocation2 + $0x10] sm:$0xff] %v841
        %992 = vst [vmem:[#allocation2 + $0x18] sm:$0xff] %v846
        %993 = vst [vmem:[#allocation2 + $0x20] sm:$0xff] %v851
        %994 = vst [vmem:[#allocation2 + $0x28] sm:$0xff] %v856
        %995 = vst [vmem:[#allocation2 + $0x30] sm:$0xff] %v861
        %996 = vst [vmem:[#allocation2 + $0x38] sm:$0xff] %v866
        %997 = vst [vmem:[#allocation2 + $0x40] sm:$0xff] %v871
        %998 = vst [vmem:[#allocation2 + $0x48] sm:$0xff] %v876
        %999 = vst [vmem:[#allocation2 + $0x50] sm:$0xff] %v881
        %1000 = vst [vmem:[#allocation2 + $0x58] sm:$0xff] %v886
        %1001 = vst [vmem:[#allocation2 + $0x60] sm:$0xff] %v891
        %1002 = vst [vmem:[#allocation2 + $0x68] sm:$0xff] %v896
        %1003 = vst [vmem:[#allocation2 + $0x70] sm:$0xff] %v901
        %1004 = vst [vmem:[#allocation2 + $0x78] sm:$0xff] %v906
        %1005 = vst [vmem:[#allocation2 + $0x80] sm:$0xff] %v911
        %1006 = vst [vmem:[#allocation2 + $0x88] sm:$0xff] %v916
        %1007 = vst [vmem:[#allocation2 + $0x90] sm:$0xff] %v921
        %1008 = vst [vmem:[#allocation2 + $0x98] sm:$0xff] %v926
        %1009 = vst [vmem:[#allocation2 + $0xa0] sm:$0xff] %v931
        %1010 = vst [vmem:[#allocation2 + $0xa8] sm:$0xff] %v936
        %1011 = vst [vmem:[#allocation2 + $0xb0] sm:$0xff] %v941
        %1012 = vst [vmem:[#allocation2 + $0xb8] sm:$0xff] %v946
        %1013 = vst [vmem:[#allocation2 + $0xc0] sm:$0xff] %v951
        %1014 = vst [vmem:[#allocation2 + $0xc8] sm:$0xff] %v956
        %1015 = vst [vmem:[#allocation2 + $0xd0] sm:$0xff] %v961
        %1016 = vst [vmem:[#allocation2 + $0xd8] sm:$0xff] %v966
        %1017 = vst [vmem:[#allocation2 + $0xe0] sm:$0xff] %v971
        %1018 = vst [vmem:[#allocation2 + $0xe8] sm:$0xff] %v976
        %1019 = vst [vmem:[#allocation2 + $0xf0] sm:$0xff] %v981
        %1020 = vst [vmem:[#allocation2 + $0xf8] sm:$0xff] %v986
        %v1021 = vld [vmem:[%s2] sm:$0x1]
        %v1022 = vld [vmem:[%s3] sm:$0x1]
        %v1023 = vld [vmem:[%s4] sm:$0xff]
        %v1024 = vld [vmem:[%s4 + $0x8] sm:$0xff]
        %v1025 = vld [vmem:[%s4 + $0x10] sm:$0xff]
        %v1026 = vld [vmem:[%s4 + $0x18] sm:$0xff]
        %v1027 = vld [vmem:[%s4 + $0x20] sm:$0xff]
        %v1028 = vld [vmem:[%s4 + $0x28] sm:$0xff]
        %v1029 = vld [vmem:[%s4 + $0x30] sm:$0xff]
        %v1030 = vld [vmem:[%s4 + $0x38] sm:$0xff]
        %v1031 = vld [vmem:[%s5] sm:$0xff]
        %v1032 = vld [vmem:[%s5 + $0x8] sm:$0xff]
        %v1033 = vld [vmem:[%s5 + $0x10] sm:$0xff]
        %v1034 = vld [vmem:[%s5 + $0x18] sm:$0xff]
        %v1035 = vsel %vm667, %v627, 0.0
        %v1036 = vsel %vm667, %v628, 0.0
        %v1037 = vadd.f32 %v1035, %v1036
        %v1038 = vsel %vm667, %v629, 0.0
        %v1039 = vadd.f32 %v1037, %v1038
        %v1040 = vsel %vm667, %v630, 0.0
        %v1041 = vadd.f32 %v1039, %v1040
        %v1042 = vsel %vm667, %v631, 0.0
        %v1043 = vadd.f32 %v1041, %v1042
        %v1044 = vsel %vm667, %v632, 0.0
        %v1045 = vadd.f32 %v1043, %v1044
        %v1046 = vsel %vm667, %v633, 0.0
        %v1047 = vadd.f32 %v1045, %v1046
        %v1048 = vsel %vm667, %v634, 0.0
        %v1049 = vadd.f32 %v1047, %v1048
        %v1050 = vsel %vm667, %v635, 0.0
        %v1051 = vadd.f32 %v1049, %v1050
        %v1052 = vsel %vm667, %v636, 0.0
        %v1053 = vadd.f32 %v1051, %v1052
        %v1054 = vsel %vm667, %v637, 0.0
        %v1055 = vadd.f32 %v1053, %v1054
        %v1056 = vsel %vm667, %v638, 0.0
        %v1057 = vadd.f32 %v1055, %v1056
        %v1058 = vsel %vm667, %v639, 0.0
        %v1059 = vadd.f32 %v1057, %v1058
        %v1060 = vsel %vm667, %v640, 0.0
        %v1061 = vadd.f32 %v1059, %v1060
        %v1062 = vsel %vm667, %v641, 0.0
        %v1063 = vadd.f32 %v1061, %v1062
        %v1064 = vsel %vm667, %v642, 0.0
        %v1065 = vadd.f32 %v1063, %v1064
        %v1066 = vsel %vm667, %v643, 0.0
        %v1067 = vadd.f32 %v1065, %v1066
        %v1068 = vsel %vm667, %v644, 0.0
        %v1069 = vadd.f32 %v1067, %v1068
        %v1070 = vsel %vm667, %v645, 0.0
        %v1071 = vadd.f32 %v1069, %v1070
        %v1072 = vsel %vm667, %v646, 0.0
        %v1073 = vadd.f32 %v1071, %v1072
        %v1074 = vsel %vm667, %v647, 0.0
        %v1075 = vadd.f32 %v1073, %v1074
        %v1076 = vsel %vm667, %v648, 0.0
        %v1077 = vadd.f32 %v1075, %v1076
        %v1078 = vsel %vm667, %v649, 0.0
        %v1079 = vadd.f32 %v1077, %v1078
        %v1080 = vsel %vm667, %v650, 0.0
        %v1081 = vadd.f32 %v1079, %v1080
        %v1082 = vsel %vm667, %v651, 0.0
        %v1083 = vadd.f32 %v1081, %v1082
        %v1084 = vsel %vm667, %v652, 0.0
        %v1085 = vadd.f32 %v1083, %v1084
        %v1086 = vsel %vm667, %v653, 0.0
        %v1087 = vadd.f32 %v1085, %v1086
        %v1088 = vsel %vm667, %v654, 0.0
        %v1089 = vadd.f32 %v1087, %v1088
        %v1090 = vsel %vm667, %v655, 0.0
        %v1091 = vadd.f32 %v1089, %v1090
        %v1092 = vsel %vm667, %v656, 0.0
        %v1093 = vadd.f32 %v1091, %v1092
        %v1094 = vsel %vm667, %v657, 0.0
        %v1095 = vadd.f32 %v1093, %v1094
        %v1096 = vsel %vm667, %v658, 0.0
        %v1097 = vadd.f32 %v1095, %v1096
        %v1098 = vrot.slane %v1097, 4
        %v1099 = vadd.f32 %v1097, %v1098
        %v1100 = vrot.slane %v1099, 2
        %v1101 = vadd.f32 %v1099, %v1100
        %v1102 = vrot.slane %v1101, 1
        %v1103 = vadd.f32 %v1101, %v1102
        %v1104 = vmul.f32 %v627, %v627
        %v1105 = vmul.f32 %v628, %v628
        %v1106 = vmul.f32 %v629, %v629
        %v1107 = vmul.f32 %v630, %v630
        %v1108 = vmul.f32 %v631, %v631
        %v1109 = vmul.f32 %v632, %v632
        %v1110 = vmul.f32 %v633, %v633
        %v1111 = vmul.f32 %v634, %v634
        %v1112 = vmul.f32 %v635, %v635
        %v1113 = vmul.f32 %v636, %v636
        %v1114 = vmul.f32 %v637, %v637
        %v1115 = vmul.f32 %v638, %v638
        %v1116 = vmul.f32 %v639, %v639
        %v1117 = vmul.f32 %v640, %v640
        %v1118 = vmul.f32 %v641, %v641
        %v1119 = vmul.f32 %v642, %v642
        %v1120 = vmul.f32 %v643, %v643
        %v1121 = vmul.f32 %v644, %v644
        %v1122 = vmul.f32 %v645, %v645
        %v1123 = vmul.f32 %v646, %v646
        %v1124 = vmul.f32 %v647, %v647
        %v1125 = vmul.f32 %v648, %v648
        %v1126 = vmul.f32 %v649, %v649
        %v1127 = vmul.f32 %v650, %v650
        %v1128 = vmul.f32 %v651, %v651
        %v1129 = vmul.f32 %v652, %v652
        %v1130 = vmul.f32 %v653, %v653
        %v1131 = vmul.f32 %v654, %v654
        %v1132 = vmul.f32 %v655, %v655
        %v1133 = vmul.f32 %v656, %v656
        %v1134 = vmul.f32 %v657, %v657
        %v1135 = vmul.f32 %v658, %v658
        %v1136 = vsel %vm667, %v1104, 0.0
        %v1137 = vsel %vm667, %v1105, 0.0
        %v1138 = vadd.f32 %v1136, %v1137
        %v1139 = vsel %vm667, %v1106, 0.0
        %v1140 = vadd.f32 %v1138, %v1139
        %v1141 = vsel %vm667, %v1107, 0.0
        %v1142 = vadd.f32 %v1140, %v1141
        %v1143 = vsel %vm667, %v1108, 0.0
        %v1144 = vadd.f32 %v1142, %v1143
        %v1145 = vsel %vm667, %v1109, 0.0
        %v1146 = vadd.f32 %v1144, %v1145
        %v1147 = vsel %vm667, %v1110, 0.0
        %v1148 = vadd.f32 %v1146, %v1147
        %v1149 = vsel %vm667, %v1111, 0.0
        %v1150 = vadd.f32 %v1148, %v1149
        %v1151 = vsel %vm667, %v1112, 0.0
        %v1152 = vadd.f32 %v1150, %v1151
        %v1153 = vsel %vm667, %v1113, 0.0
        %v1154 = vadd.f32 %v1152, %v1153
        %v1155 = vsel %vm667, %v1114, 0.0
        %v1156 = vadd.f32 %v1154, %v1155
        %v1157 = vsel %vm667, %v1115, 0.0
        %v1158 = vadd.f32 %v1156, %v1157
        %v1159 = vsel %vm667, %v1116, 0.0
        %v1160 = vadd.f32 %v1158, %v1159
        %v1161 = vsel %vm667, %v1117, 0.0
        %v1162 = vadd.f32 %v1160, %v1161
        %v1163 = vsel %vm667, %v1118, 0.0
        %v1164 = vadd.f32 %v1162, %v1163
        %v1165 = vsel %vm667, %v1119, 0.0
        %v1166 = vadd.f32 %v1164, %v1165
        %v1167 = vsel %vm667, %v1120, 0.0
        %v1168 = vadd.f32 %v1166, %v1167
        %v1169 = vsel %vm667, %v1121, 0.0
        %v1170 = vadd.f32 %v1168, %v1169
        %v1171 = vsel %vm667, %v1122, 0.0
        %v1172 = vadd.f32 %v1170, %v1171
        %v1173 = vsel %vm667, %v1123, 0.0
        %v1174 = vadd.f32 %v1172, %v1173
        %v1175 = vsel %vm667, %v1124, 0.0
        %v1176 = vadd.f32 %v1174, %v1175
        %v1177 = vsel %vm667, %v1125, 0.0
        %v1178 = vadd.f32 %v1176, %v1177
        %v1179 = vsel %vm667, %v1126, 0.0
        %v1180 = vadd.f32 %v1178, %v1179
        %v1181 = vsel %vm667, %v1127, 0.0
        %v1182 = vadd.f32 %v1180, %v1181
        %v1183 = vsel %vm667, %v1128, 0.0
        %v1184 = vadd.f32 %v1182, %v1183
        %v1185 = vsel %vm667, %v1129, 0.0
        %v1186 = vadd.f32 %v1184, %v1185
        %v1187 = vsel %vm667, %v1130, 0.0
        %v1188 = vadd.f32 %v1186, %v1187
        %v1189 = vsel %vm667, %v1131, 0.0
        %v1190 = vadd.f32 %v1188, %v1189
        %v1191 = vsel %vm667, %v1132, 0.0
        %v1192 = vadd.f32 %v1190, %v1191
        %v1193 = vsel %vm667, %v1133, 0.0
        %v1194 = vadd.f32 %v1192, %v1193
        %v1195 = vsel %vm667, %v1134, 0.0
        %v1196 = vadd.f32 %v1194, %v1195
        %v1197 = vsel %vm667, %v1135, 0.0
        %v1198 = vadd.f32 %v1196, %v1197
        %v1199 = vrot.slane %v1198, 4
        %v1200 = vadd.f32 %v1198, %v1199
        %v1201 = vrot.slane %v1200, 2
        %v1202 = vadd.f32 %v1200, %v1201
        %v1203 = vrot.slane %v1202, 1
        %v1204 = vadd.f32 %v1202, %v1203
        %vm1205 = vcmask 1040384
        %v1206 = vsel %vm1205, %v1103, %v1204
        %v1208 = vsel %vm667, %v1206, 0
        %1210 = vmatprep.subr.mxu0 0.0
        %1211 = vmatpush1.msra.mxu0 %v1023
        %1212 = vmatprep.subr.mxu0 0.0
        %1213 = vmatpush1.msra.mxu0 %v1024
        %1214 = vmatprep.subr.mxu0 0.0
        %1215 = vmatpush1.msra.mxu0 %v1025
        %1216 = vmatprep.subr.mxu0 0.0
        %1217 = vmatpush1.msra.mxu0 %v1026
        %1218 = vmatprep.subr.mxu0 0.0
        %1219 = vmatpush1.msra.mxu0 %v1027
        %1220 = vmatprep.subr.mxu0 0.0
        %1221 = vmatpush1.msra.mxu0 %v1028
        %1222 = vmatprep.subr.mxu0 0.0
        %1223 = vmatpush1.msra.mxu0 %v1029
        %1224 = vmatprep.subr.mxu0 0.0
        %1225 = vmatpush1.msra.mxu0 %v1030
        %1226 = vmatprep.subr.mxu0 0.0
        %1227 = vmatpush1.msra.mxu0 0.0
        %1228 = vmatprep.subr.mxu0 0.0
        %1229 = vmatpush1.msra.mxu0 0.0
        %1230 = vmatprep.subr.mxu0 0.0
        %1231 = vmatpush1.msra.mxu0 0.0
        %1232 = vmatprep.subr.mxu0 0.0
        %1233 = vmatpush1.msra.mxu0 0.0
        %1234 = vmatprep.subr.mxu0 0.0
        %1235 = vmatpush1.msra.mxu0 0.0
        %1236 = vmatprep.subr.mxu0 0.0
        %1237 = vmatpush1.msra.mxu0 0.0
        %1238 = vmatprep.subr.mxu0 0.0
        %1239 = vmatpush1.msra.mxu0 0.0
        %1240 = vmatprep.subr.mxu0 0.0
        %1241 = vmatpush1.msra.mxu0 0.0
        %1242 = vmatprep.subr.mxu0 0.0
        %1243 = vmatpush1.msra.mxu0 0.0
        %1244 = vmatprep.subr.mxu0 0.0
        %1245 = vmatpush1.msra.mxu0 0.0
        %1246 = vmatprep.subr.mxu0 0.0
        %1247 = vmatpush1.msra.mxu0 0.0
        %1248 = vmatprep.subr.mxu0 0.0
        %1249 = vmatpush1.msra.mxu0 0.0
        %1250 = vmatprep.subr.mxu0 0.0
        %1251 = vmatpush1.msra.mxu0 0.0
        %1252 = vmatprep.subr.mxu0 0.0
        %1253 = vmatpush1.msra.mxu0 0.0
        %1254 = vmatprep.subr.mxu0 0.0
        %1255 = vmatpush1.msra.mxu0 0.0
        %1256 = vmatprep.subr.mxu0 0.0
        %1257 = vmatpush1.msra.mxu0 0.0
        %1258 = vmatprep.subr.mxu0 0.0
        %1259 = vmatpush1.msra.mxu0 0.0
        %1260 = vmatprep.subr.mxu0 0.0
        %1261 = vmatpush1.msra.mxu0 0.0
        %1262 = vmatprep.subr.mxu0 0.0
        %1263 = vmatpush1.msra.mxu0 0.0
        %1264 = vmatprep.subr.mxu0 0.0
        %1265 = vmatpush1.msra.mxu0 0.0
        %1266 = vmatprep.subr.mxu0 0.0
        %1267 = vmatpush1.msra.mxu0 0.0
        %1268 = vmatprep.subr.mxu0 0.0
        %1269 = vmatpush1.msra.mxu0 0.0
        %1270 = vmatprep.subr.mxu0 0.0
        %1271 = vmatpush1.msra.mxu0 0.0
        %1272 = vmatprep.subr.mxu0 0.0
        %1273 = vmatpush1.msra.mxu0 0.0
        %1274 = vmatprep.mubr.f32.mxu0 0.0
        %1275 = vmatmul.mubr.f32.gmra.mrb[0].mxu0 %v1208
        %v1276 = vpop.f32.mrb[0].mxu0
        %v1277 = vadd.f32 0.0, %v1276
        %v1278 = vpop.f32.mrb[0].mxu0
        %1279 = vdwg.mxu0
        %v1280 = vmul.f32 %v1277, 0.001953125
        %v1281 = vmul.f32 %v1280, %v1280
        %v1283 = vrot.slane %v1281, 7
        %v1285 = vsub.f32 %v1280, %v1283
        %v1286 = vmax.f32 %v1285, 0.0
        %v1287 = vadd.f32 %v1286, 1e-05
        %v1288 = vrsqrt.pop %v1287
        %v1289 = vsel %vm1205, %v1280, %v1288
        %vm1290 = vcmask 261120
        %v1292 = vsel %vm1290, %v1289, 0
        %1294 = vmatprep.subr.mxu0 0.0
        %1295 = vmatpush1.msra.mxu0 %v1031
        %1296 = vmatprep.subr.mxu0 0.0
        %1297 = vmatpush1.msra.mxu0 %v1032
        %1298 = vmatprep.subr.mxu0 0.0
        %1299 = vmatpush1.msra.mxu0 %v1033
        %1300 = vmatprep.subr.mxu0 0.0
        %1301 = vmatpush1.msra.mxu0 %v1034
        %1302 = vmatprep.subr.mxu0 0.0
        %1303 = vmatpush1.msra.mxu0 0.0
        %1304 = vmatprep.subr.mxu0 0.0
        %1305 = vmatpush1.msra.mxu0 0.0
        %1306 = vmatprep.subr.mxu0 0.0
        %1307 = vmatpush1.msra.mxu0 0.0
        %1308 = vmatprep.subr.mxu0 0.0
        %1309 = vmatpush1.msra.mxu0 0.0
        %1310 = vmatprep.subr.mxu0 0.0
        %1311 = vmatpush1.msra.mxu0 0.0
        %1312 = vmatprep.subr.mxu0 0.0
        %1313 = vmatpush1.msra.mxu0 0.0
        %1314 = vmatprep.subr.mxu0 0.0
        %1315 = vmatpush1.msra.mxu0 0.0
        %1316 = vmatprep.subr.mxu0 0.0
        %1317 = vmatpush1.msra.mxu0 0.0
        %1318 = vmatprep.subr.mxu0 0.0
        %1319 = vmatpush1.msra.mxu0 0.0
        %1320 = vmatprep.subr.mxu0 0.0
        %1321 = vmatpush1.msra.mxu0 0.0
        %1322 = vmatprep.subr.mxu0 0.0
        %1323 = vmatpush1.msra.mxu0 0.0
        %1324 = vmatprep.subr.mxu0 0.0
        %1325 = vmatpush1.msra.mxu0 0.0
        %1326 = vmatprep.subr.mxu0 0.0
        %1327 = vmatpush1.msra.mxu0 0.0
        %1328 = vmatprep.subr.mxu0 0.0
        %1329 = vmatpush1.msra.mxu0 0.0
        %1330 = vmatprep.subr.mxu0 0.0
        %1331 = vmatpush1.msra.mxu0 0.0
        %1332 = vmatprep.subr.mxu0 0.0
        %1333 = vmatpush1.msra.mxu0 0.0
        %1334 = vmatprep.subr.mxu0 0.0
        %1335 = vmatpush1.msra.mxu0 0.0
        %1336 = vmatprep.subr.mxu0 0.0
        %1337 = vmatpush1.msra.mxu0 0.0
        %1338 = vmatprep.subr.mxu0 0.0
        %1339 = vmatpush1.msra.mxu0 0.0
        %1340 = vmatprep.subr.mxu0 0.0
        %1341 = vmatpush1.msra.mxu0 0.0
        %1342 = vmatprep.subr.mxu0 0.0
        %1343 = vmatpush1.msra.mxu0 0.0
        %1344 = vmatprep.subr.mxu0 0.0
        %1345 = vmatpush1.msra.mxu0 0.0
        %1346 = vmatprep.subr.mxu0 0.0
        %1347 = vmatpush1.msra.mxu0 0.0
        %1348 = vmatprep.subr.mxu0 0.0
        %1349 = vmatpush1.msra.mxu0 0.0
        %1350 = vmatprep.subr.mxu0 0.0
        %1351 = vmatpush1.msra.mxu0 0.0
        %1352 = vmatprep.subr.mxu0 0.0
        %1353 = vmatpush1.msra.mxu0 0.0
        %1354 = vmatprep.subr.mxu0 0.0
        %1355 = vmatpush1.msra.mxu0 0.0
        %1356 = vmatprep.subr.mxu0 0.0
        %1357 = vmatpush1.msra.mxu0 0.0
        %1358 = vmatprep.mubr.f32.mxu0 0.0
        %1359 = vmatmul.mubr.f32.gmra.mrb[0].mxu0 %v1292
        %v1360 = vpop.f32.mrb[0].mxu0
        %v1361 = vadd.f32 0.0, %v1360
        %v1362 = vpop.f32.mrb[0].mxu0
        %1363 = vdwg.mxu0
        %v1365 = vlaneseq
        %v1366 = vshrl.u32 %v1365, 7
        %v1367 = vsub.s32 0, %v1366
        %v1368 = vrot.slane %v1021, %v1367
        %v1370 = vmul.f32 %v1361, %v1368
        %v1372 = vrot.slane %v1370, 1
        %v1374 = vmul.f32 %v1361, %v1372
        %v1375 = vsub.f32 %v1022, %v1374
        %v1376 = vlaneseq
        %v1377 = vshrl.u32 %v1376, 7
        %v1378 = vsub.s32 1, %v1377
        %v1379 = vrot.slane %v1370, %v1378
        %v1380 = vmul.f32 %v627, %v1379
        %v1381 = vmul.f32 %v628, %v1379
        %v1382 = vmul.f32 %v629, %v1379
        %v1383 = vmul.f32 %v630, %v1379
        %v1384 = vmul.f32 %v631, %v1379
        %v1385 = vmul.f32 %v632, %v1379
        %v1386 = vmul.f32 %v633, %v1379
        %v1387 = vmul.f32 %v634, %v1379
        %v1388 = vmul.f32 %v635, %v1379
        %v1389 = vmul.f32 %v636, %v1379
        %v1390 = vmul.f32 %v637, %v1379
        %v1391 = vmul.f32 %v638, %v1379
        %v1392 = vmul.f32 %v639, %v1379
        %v1393 = vmul.f32 %v640, %v1379
        %v1394 = vmul.f32 %v641, %v1379
        %v1395 = vmul.f32 %v642, %v1379
        %v1396 = vmul.f32 %v643, %v1379
        %v1397 = vmul.f32 %v644, %v1379
        %v1398 = vmul.f32 %v645, %v1379
        %v1399 = vmul.f32 %v646, %v1379
        %v1400 = vmul.f32 %v647, %v1379
        %v1401 = vmul.f32 %v648, %v1379
        %v1402 = vmul.f32 %v649, %v1379
        %v1403 = vmul.f32 %v650, %v1379
        %v1404 = vmul.f32 %v651, %v1379
        %v1405 = vmul.f32 %v652, %v1379
        %v1406 = vmul.f32 %v653, %v1379
        %v1407 = vmul.f32 %v654, %v1379
        %v1408 = vmul.f32 %v655, %v1379
        %v1409 = vmul.f32 %v656, %v1379
        %v1410 = vmul.f32 %v657, %v1379
        %v1411 = vmul.f32 %v658, %v1379
        %v1413 = vlaneseq
        %v1414 = vshrl.u32 %v1413, 7
        %v1415 = vsub.s32 0, %v1414
        %v1416 = vrot.slane %v1375, %v1415
        %v1418 = vadd.f32 %v1380, %v1416
        %v1419 = vadd.f32 %v1381, %v1416
        %v1420 = vadd.f32 %v1382, %v1416
        %v1421 = vadd.f32 %v1383, %v1416
        %v1422 = vadd.f32 %v1384, %v1416
        %v1423 = vadd.f32 %v1385, %v1416
        %v1424 = vadd.f32 %v1386, %v1416
        %v1425 = vadd.f32 %v1387, %v1416
        %v1426 = vadd.f32 %v1388, %v1416
        %v1427 = vadd.f32 %v1389, %v1416
        %v1428 = vadd.f32 %v1390, %v1416
        %v1429 = vadd.f32 %v1391, %v1416
        %v1430 = vadd.f32 %v1392, %v1416
        %v1431 = vadd.f32 %v1393, %v1416
        %v1432 = vadd.f32 %v1394, %v1416
        %v1433 = vadd.f32 %v1395, %v1416
        %v1434 = vadd.f32 %v1396, %v1416
        %v1435 = vadd.f32 %v1397, %v1416
        %v1436 = vadd.f32 %v1398, %v1416
        %v1437 = vadd.f32 %v1399, %v1416
        %v1438 = vadd.f32 %v1400, %v1416
        %v1439 = vadd.f32 %v1401, %v1416
        %v1440 = vadd.f32 %v1402, %v1416
        %v1441 = vadd.f32 %v1403, %v1416
        %v1442 = vadd.f32 %v1404, %v1416
        %v1443 = vadd.f32 %v1405, %v1416
        %v1444 = vadd.f32 %v1406, %v1416
        %v1445 = vadd.f32 %v1407, %v1416
        %v1446 = vadd.f32 %v1408, %v1416
        %v1447 = vadd.f32 %v1409, %v1416
        %v1448 = vadd.f32 %v1410, %v1416
        %v1449 = vadd.f32 %v1411, %v1416
        %v1450 = vxor.u32 %v1418, 2147483648
        %v1451 = vxor.u32 %v1419, 2147483648
        %v1452 = vxor.u32 %v1420, 2147483648
        %v1453 = vxor.u32 %v1421, 2147483648
        %v1454 = vxor.u32 %v1422, 2147483648
        %v1455 = vxor.u32 %v1423, 2147483648
        %v1456 = vxor.u32 %v1424, 2147483648
        %v1457 = vxor.u32 %v1425, 2147483648
        %v1458 = vxor.u32 %v1426, 2147483648
        %v1459 = vxor.u32 %v1427, 2147483648
        %v1460 = vxor.u32 %v1428, 2147483648
        %v1461 = vxor.u32 %v1429, 2147483648
        %v1462 = vxor.u32 %v1430, 2147483648
        %v1463 = vxor.u32 %v1431, 2147483648
        %v1464 = vxor.u32 %v1432, 2147483648
        %v1465 = vxor.u32 %v1433, 2147483648
        %v1466 = vxor.u32 %v1434, 2147483648
        %v1467 = vxor.u32 %v1435, 2147483648
        %v1468 = vxor.u32 %v1436, 2147483648
        %v1469 = vxor.u32 %v1437, 2147483648
        %v1470 = vxor.u32 %v1438, 2147483648
        %v1471 = vxor.u32 %v1439, 2147483648
        %v1472 = vxor.u32 %v1440, 2147483648
        %v1473 = vxor.u32 %v1441, 2147483648
        %v1474 = vxor.u32 %v1442, 2147483648
        %v1475 = vxor.u32 %v1443, 2147483648
        %v1476 = vxor.u32 %v1444, 2147483648
        %v1477 = vxor.u32 %v1445, 2147483648
        %v1478 = vxor.u32 %v1446, 2147483648
        %v1479 = vxor.u32 %v1447, 2147483648
        %v1480 = vxor.u32 %v1448, 2147483648
        %v1481 = vxor.u32 %v1449, 2147483648
        %v1482 = vmul.f32 %v1450, 1.442695
        %v1483 = vpow.pop %v1482
        %v1484 = vmul.f32 %v1451, 1.442695
        %v1485 = vpow.pop %v1484
        %v1486 = vmul.f32 %v1452, 1.442695
        %v1487 = vpow.pop %v1486
        %v1488 = vmul.f32 %v1453, 1.442695
        %v1489 = vpow.pop %v1488
        %v1490 = vmul.f32 %v1454, 1.442695
        %v1491 = vpow.pop %v1490
        %v1492 = vmul.f32 %v1455, 1.442695
        %v1493 = vpow.pop %v1492
        %v1494 = vmul.f32 %v1456, 1.442695
        %v1495 = vpow.pop %v1494
        %v1496 = vmul.f32 %v1457, 1.442695
        %v1497 = vpow.pop %v1496
        %v1498 = vmul.f32 %v1458, 1.442695
        %v1499 = vpow.pop %v1498
        %v1500 = vmul.f32 %v1459, 1.442695
        %v1501 = vpow.pop %v1500
        %v1502 = vmul.f32 %v1460, 1.442695
        %v1503 = vpow.pop %v1502
        %v1504 = vmul.f32 %v1461, 1.442695
        %v1505 = vpow.pop %v1504
        %v1506 = vmul.f32 %v1462, 1.442695
        %v1507 = vpow.pop %v1506
        %v1508 = vmul.f32 %v1463, 1.442695
        %v1509 = vpow.pop %v1508
        %v1510 = vmul.f32 %v1464, 1.442695
        %v1511 = vpow.pop %v1510
        %v1512 = vmul.f32 %v1465, 1.442695
        %v1513 = vpow.pop %v1512
        %v1514 = vmul.f32 %v1466, 1.442695
        %v1515 = vpow.pop %v1514
        %v1516 = vmul.f32 %v1467, 1.442695
        %v1517 = vpow.pop %v1516
        %v1518 = vmul.f32 %v1468, 1.442695
        %v1519 = vpow.pop %v1518
        %v1520 = vmul.f32 %v1469, 1.442695
        %v1521 = vpow.pop %v1520
        %v1522 = vmul.f32 %v1470, 1.442695
        %v1523 = vpow.pop %v1522
        %v1524 = vmul.f32 %v1471, 1.442695
        %v1525 = vpow.pop %v1524
        %v1526 = vmul.f32 %v1472, 1.442695
        %v1527 = vpow.pop %v1526
        %v1528 = vmul.f32 %v1473, 1.442695
        %v1529 = vpow.pop %v1528
        %v1530 = vmul.f32 %v1474, 1.442695
        %v1531 = vpow.pop %v1530
        %v1532 = vmul.f32 %v1475, 1.442695
        %v1533 = vpow.pop %v1532
        %v1534 = vmul.f32 %v1476, 1.442695
        %v1535 = vpow.pop %v1534
        %v1536 = vmul.f32 %v1477, 1.442695
        %v1537 = vpow.pop %v1536
        %v1538 = vmul.f32 %v1478, 1.442695
        %v1539 = vpow.pop %v1538
        %v1540 = vmul.f32 %v1479, 1.442695
        %v1541 = vpow.pop %v1540
        %v1542 = vmul.f32 %v1480, 1.442695
        %v1543 = vpow.pop %v1542
        %v1544 = vmul.f32 %v1481, 1.442695
        %v1545 = vpow.pop %v1544
        %v1546 = vadd.f32 %v1483, 1.0
        %v1547 = vadd.f32 %v1485, 1.0
        %v1548 = vadd.f32 %v1487, 1.0
        %v1549 = vadd.f32 %v1489, 1.0
        %v1550 = vadd.f32 %v1491, 1.0
        %v1551 = vadd.f32 %v1493, 1.0
        %v1552 = vadd.f32 %v1495, 1.0
        %v1553 = vadd.f32 %v1497, 1.0
        %v1554 = vadd.f32 %v1499, 1.0
        %v1555 = vadd.f32 %v1501, 1.0
        %v1556 = vadd.f32 %v1503, 1.0
        %v1557 = vadd.f32 %v1505, 1.0
        %v1558 = vadd.f32 %v1507, 1.0
        %v1559 = vadd.f32 %v1509, 1.0
        %v1560 = vadd.f32 %v1511, 1.0
        %v1561 = vadd.f32 %v1513, 1.0
        %v1562 = vadd.f32 %v1515, 1.0
        %v1563 = vadd.f32 %v1517, 1.0
        %v1564 = vadd.f32 %v1519, 1.0
        %v1565 = vadd.f32 %v1521, 1.0
        %v1566 = vadd.f32 %v1523, 1.0
        %v1567 = vadd.f32 %v1525, 1.0
        %v1568 = vadd.f32 %v1527, 1.0
        %v1569 = vadd.f32 %v1529, 1.0
        %v1570 = vadd.f32 %v1531, 1.0
        %v1571 = vadd.f32 %v1533, 1.0
        %v1572 = vadd.f32 %v1535, 1.0
        %v1573 = vadd.f32 %v1537, 1.0
        %v1574 = vadd.f32 %v1539, 1.0
        %v1575 = vadd.f32 %v1541, 1.0
        %v1576 = vadd.f32 %v1543, 1.0
        %v1577 = vadd.f32 %v1545, 1.0
        %v1578 = vrcp.pop %v1546
        %v1579 = vmul.f32 1.0, %v1578
        %v1580 = vrcp.pop %v1547
        %v1581 = vmul.f32 1.0, %v1580
        %v1582 = vrcp.pop %v1548
        %v1583 = vmul.f32 1.0, %v1582
        %v1584 = vrcp.pop %v1549
        %v1585 = vmul.f32 1.0, %v1584
        %v1586 = vrcp.pop %v1550
        %v1587 = vmul.f32 1.0, %v1586
        %v1588 = vrcp.pop %v1551
        %v1589 = vmul.f32 1.0, %v1588
        %v1590 = vrcp.pop %v1552
        %v1591 = vmul.f32 1.0, %v1590
        %v1592 = vrcp.pop %v1553
        %v1593 = vmul.f32 1.0, %v1592
        %v1594 = vrcp.pop %v1554
        %v1595 = vmul.f32 1.0, %v1594
        %v1596 = vrcp.pop %v1555
        %v1597 = vmul.f32 1.0, %v1596
        %v1598 = vrcp.pop %v1556
        %v1599 = vmul.f32 1.0, %v1598
        %v1600 = vrcp.pop %v1557
        %v1601 = vmul.f32 1.0, %v1600
        %v1602 = vrcp.pop %v1558
        %v1603 = vmul.f32 1.0, %v1602
        %v1604 = vrcp.pop %v1559
        %v1605 = vmul.f32 1.0, %v1604
        %v1606 = vrcp.pop %v1560
        %v1607 = vmul.f32 1.0, %v1606
        %v1608 = vrcp.pop %v1561
        %v1609 = vmul.f32 1.0, %v1608
        %v1610 = vrcp.pop %v1562
        %v1611 = vmul.f32 1.0, %v1610
        %v1612 = vrcp.pop %v1563
        %v1613 = vmul.f32 1.0, %v1612
        %v1614 = vrcp.pop %v1564
        %v1615 = vmul.f32 1.0, %v1614
        %v1616 = vrcp.pop %v1565
        %v1617 = vmul.f32 1.0, %v1616
        %v1618 = vrcp.pop %v1566
        %v1619 = vmul.f32 1.0, %v1618
        %v1620 = vrcp.pop %v1567
        %v1621 = vmul.f32 1.0, %v1620
        %v1622 = vrcp.pop %v1568
        %v1623 = vmul.f32 1.0, %v1622
        %v1624 = vrcp.pop %v1569
        %v1625 = vmul.f32 1.0, %v1624
        %v1626 = vrcp.pop %v1570
        %v1627 = vmul.f32 1.0, %v1626
        %v1628 = vrcp.pop %v1571
        %v1629 = vmul.f32 1.0, %v1628
        %v1630 = vrcp.pop %v1572
        %v1631 = vmul.f32 1.0, %v1630
        %v1632 = vrcp.pop %v1573
        %v1633 = vmul.f32 1.0, %v1632
        %v1634 = vrcp.pop %v1574
        %v1635 = vmul.f32 1.0, %v1634
        %v1636 = vrcp.pop %v1575
        %v1637 = vmul.f32 1.0, %v1636
        %v1638 = vrcp.pop %v1576
        %v1639 = vmul.f32 1.0, %v1638
        %v1640 = vrcp.pop %v1577
        %v1641 = vmul.f32 1.0, %v1640
        %v1642 = vmul.f32 %v1418, %v1579
        %v1643 = vmul.f32 %v1419, %v1581
        %v1644 = vmul.f32 %v1420, %v1583
        %v1645 = vmul.f32 %v1421, %v1585
        %v1646 = vmul.f32 %v1422, %v1587
        %v1647 = vmul.f32 %v1423, %v1589
        %v1648 = vmul.f32 %v1424, %v1591
        %v1649 = vmul.f32 %v1425, %v1593
        %v1650 = vmul.f32 %v1426, %v1595
        %v1651 = vmul.f32 %v1427, %v1597
        %v1652 = vmul.f32 %v1428, %v1599
        %v1653 = vmul.f32 %v1429, %v1601
        %v1654 = vmul.f32 %v1430, %v1603
        %v1655 = vmul.f32 %v1431, %v1605
        %v1656 = vmul.f32 %v1432, %v1607
        %v1657 = vmul.f32 %v1433, %v1609
        %v1658 = vmul.f32 %v1434, %v1611
        %v1659 = vmul.f32 %v1435, %v1613
        %v1660 = vmul.f32 %v1436, %v1615
        %v1661 = vmul.f32 %v1437, %v1617
        %v1662 = vmul.f32 %v1438, %v1619
        %v1663 = vmul.f32 %v1439, %v1621
        %v1664 = vmul.f32 %v1440, %v1623
        %v1665 = vmul.f32 %v1441, %v1625
        %v1666 = vmul.f32 %v1442, %v1627
        %v1667 = vmul.f32 %v1443, %v1629
        %v1668 = vmul.f32 %v1444, %v1631
        %v1669 = vmul.f32 %v1445, %v1633
        %v1670 = vmul.f32 %v1446, %v1635
        %v1671 = vmul.f32 %v1447, %v1637
        %v1672 = vmul.f32 %v1448, %v1639
        %v1673 = vmul.f32 %v1449, %v1641
        %s1674 = scalar_lea.vmem %s1, %s34
        %v1675 = vld [vmem:[%s1674] sm:$0x1]
        %v1676 = vrot.slane %v1642, 7
        %v1677 = vrot.slane %v1643, 7
        %v1678 = vrot.slane %v1644, 7
        %v1679 = vrot.slane %v1645, 7
        %v1680 = vrot.slane %v1646, 7
        %v1681 = vrot.slane %v1647, 7
        %v1682 = vrot.slane %v1648, 7
        %v1683 = vrot.slane %v1649, 7
        %v1684 = vrot.slane %v1650, 7
        %v1685 = vrot.slane %v1651, 7
        %v1686 = vrot.slane %v1652, 7
        %v1687 = vrot.slane %v1653, 7
        %v1688 = vrot.slane %v1654, 7
        %v1689 = vrot.slane %v1655, 7
        %v1690 = vrot.slane %v1656, 7
        %v1691 = vrot.slane %v1657, 7
        %v1692 = vrot.slane %v1658, 7
        %v1693 = vrot.slane %v1659, 7
        %v1694 = vrot.slane %v1660, 7
        %v1695 = vrot.slane %v1661, 7
        %v1696 = vrot.slane %v1662, 7
        %v1697 = vrot.slane %v1663, 7
        %v1698 = vrot.slane %v1664, 7
        %v1699 = vrot.slane %v1665, 7
        %v1700 = vrot.slane %v1666, 7
        %v1701 = vrot.slane %v1667, 7
        %v1702 = vrot.slane %v1668, 7
        %v1703 = vrot.slane %v1669, 7
        %v1704 = vrot.slane %v1670, 7
        %v1705 = vrot.slane %v1671, 7
        %v1706 = vrot.slane %v1672, 7
        %v1707 = vrot.slane %v1673, 7
        %v1708 = vlaneseq
        %v1709 = vshrl.u32 %v1708, 7
        %vm1710 = vcmp.lt.s32.totalorder %v1709, 1
        %v1711 = vsel %vm1710, %v1707, 0.0
        %v1712 = vsel %vm1710, %v1706, %v1707
        %v1713 = vsel %vm1710, %v1705, %v1706
        %v1714 = vsel %vm1710, %v1704, %v1705
        %v1715 = vsel %vm1710, %v1703, %v1704
        %v1716 = vsel %vm1710, %v1702, %v1703
        %v1717 = vsel %vm1710, %v1701, %v1702
        %v1718 = vsel %vm1710, %v1700, %v1701
        %v1719 = vsel %vm1710, %v1699, %v1700
        %v1720 = vsel %vm1710, %v1698, %v1699
        %v1721 = vsel %vm1710, %v1697, %v1698
        %v1722 = vsel %vm1710, %v1696, %v1697
        %v1723 = vsel %vm1710, %v1695, %v1696
        %v1724 = vsel %vm1710, %v1694, %v1695
        %v1725 = vsel %vm1710, %v1693, %v1694
        %v1726 = vsel %vm1710, %v1692, %v1693
        %v1727 = vsel %vm1710, %v1691, %v1692
        %v1728 = vsel %vm1710, %v1690, %v1691
        %v1729 = vsel %vm1710, %v1689, %v1690
        %v1730 = vsel %vm1710, %v1688, %v1689
        %v1731 = vsel %vm1710, %v1687, %v1688
        %v1732 = vsel %vm1710, %v1686, %v1687
        %v1733 = vsel %vm1710, %v1685, %v1686
        %v1734 = vsel %vm1710, %v1684, %v1685
        %v1735 = vsel %vm1710, %v1683, %v1684
        %v1736 = vsel %vm1710, %v1682, %v1683
        %v1737 = vsel %vm1710, %v1681, %v1682
        %v1738 = vsel %vm1710, %v1680, %v1681
        %v1739 = vsel %vm1710, %v1679, %v1680
        %v1740 = vsel %vm1710, %v1678, %v1679
        %v1741 = vsel %vm1710, %v1677, %v1678
        %v1742 = vsel %vm1710, %v1676, %v1677
        %v1743 = vsel %vm1710, 0.0, %v1676
        %1745 = vset.pattern.permute.xlu0 0
        %1746 = vperm.xlu0 %1745, %v555
        %v1747 = vpop.permute.xlu0 %1746
        %1750 = vset.pattern.permute.xlu0 0
        %1751 = vperm.xlu0 %1750, %v556
        %v1752 = vpop.permute.xlu0 %1751
        %1755 = vset.pattern.permute.xlu0 0
        %1756 = vperm.xlu0 %1755, %v557
        %v1757 = vpop.permute.xlu0 %1756
        %1760 = vset.pattern.permute.xlu0 0
        %1761 = vperm.xlu0 %1760, %v558
        %v1762 = vpop.permute.xlu0 %1761
        %1765 = vset.pattern.permute.xlu0 0
        %1766 = vperm.xlu0 %1765, %v559
        %v1767 = vpop.permute.xlu0 %1766
        %1770 = vset.pattern.permute.xlu0 0
        %1771 = vperm.xlu0 %1770, %v560
        %v1772 = vpop.permute.xlu0 %1771
        %1775 = vset.pattern.permute.xlu0 0
        %1776 = vperm.xlu0 %1775, %v561
        %v1777 = vpop.permute.xlu0 %1776
        %1780 = vset.pattern.permute.xlu0 0
        %1781 = vperm.xlu0 %1780, %v562
        %v1782 = vpop.permute.xlu0 %1781
        %1785 = vset.pattern.permute.xlu0 0
        %1786 = vperm.xlu0 %1785, %v563
        %v1787 = vpop.permute.xlu0 %1786
        %1790 = vset.pattern.permute.xlu0 0
        %1791 = vperm.xlu0 %1790, %v564
        %v1792 = vpop.permute.xlu0 %1791
        %1795 = vset.pattern.permute.xlu0 0
        %1796 = vperm.xlu0 %1795, %v565
        %v1797 = vpop.permute.xlu0 %1796
        %1800 = vset.pattern.permute.xlu0 0
        %1801 = vperm.xlu0 %1800, %v566
        %v1802 = vpop.permute.xlu0 %1801
        %1805 = vset.pattern.permute.xlu0 0
        %1806 = vperm.xlu0 %1805, %v567
        %v1807 = vpop.permute.xlu0 %1806
        %1810 = vset.pattern.permute.xlu0 0
        %1811 = vperm.xlu0 %1810, %v568
        %v1812 = vpop.permute.xlu0 %1811
        %1815 = vset.pattern.permute.xlu0 0
        %1816 = vperm.xlu0 %1815, %v569
        %v1817 = vpop.permute.xlu0 %1816
        %1820 = vset.pattern.permute.xlu0 0
        %1821 = vperm.xlu0 %1820, %v570
        %v1822 = vpop.permute.xlu0 %1821
        %1825 = vset.pattern.permute.xlu0 0
        %1826 = vperm.xlu0 %1825, %v571
        %v1827 = vpop.permute.xlu0 %1826
        %1830 = vset.pattern.permute.xlu0 0
        %1831 = vperm.xlu0 %1830, %v572
        %v1832 = vpop.permute.xlu0 %1831
        %1835 = vset.pattern.permute.xlu0 0
        %1836 = vperm.xlu0 %1835, %v573
        %v1837 = vpop.permute.xlu0 %1836
        %1840 = vset.pattern.permute.xlu0 0
        %1841 = vperm.xlu0 %1840, %v574
        %v1842 = vpop.permute.xlu0 %1841
        %1845 = vset.pattern.permute.xlu0 0
        %1846 = vperm.xlu0 %1845, %v575
        %v1847 = vpop.permute.xlu0 %1846
        %1850 = vset.pattern.permute.xlu0 0
        %1851 = vperm.xlu0 %1850, %v576
        %v1852 = vpop.permute.xlu0 %1851
        %1855 = vset.pattern.permute.xlu0 0
        %1856 = vperm.xlu0 %1855, %v577
        %v1857 = vpop.permute.xlu0 %1856
        %1860 = vset.pattern.permute.xlu0 0
        %1861 = vperm.xlu0 %1860, %v578
        %v1862 = vpop.permute.xlu0 %1861
        %1865 = vset.pattern.permute.xlu0 0
        %1866 = vperm.xlu0 %1865, %v579
        %v1867 = vpop.permute.xlu0 %1866
        %1870 = vset.pattern.permute.xlu0 0
        %1871 = vperm.xlu0 %1870, %v580
        %v1872 = vpop.permute.xlu0 %1871
        %1875 = vset.pattern.permute.xlu0 0
        %1876 = vperm.xlu0 %1875, %v581
        %v1877 = vpop.permute.xlu0 %1876
        %1880 = vset.pattern.permute.xlu0 0
        %1881 = vperm.xlu0 %1880, %v582
        %v1882 = vpop.permute.xlu0 %1881
        %1885 = vset.pattern.permute.xlu0 0
        %1886 = vperm.xlu0 %1885, %v583
        %v1887 = vpop.permute.xlu0 %1886
        %1890 = vset.pattern.permute.xlu0 0
        %1891 = vperm.xlu0 %1890, %v584
        %v1892 = vpop.permute.xlu0 %1891
        %1895 = vset.pattern.permute.xlu0 0
        %1896 = vperm.xlu0 %1895, %v585
        %v1897 = vpop.permute.xlu0 %1896
        %1900 = vset.pattern.permute.xlu0 0
        %1901 = vperm.xlu0 %1900, %v586
        %v1902 = vpop.permute.xlu0 %1901
        %1905 = vset.pattern.permute.xlu0 0
        %1906 = vperm.xlu0 %1905, %v587
        %v1907 = vpop.permute.xlu0 %1906
        %1910 = vset.pattern.permute.xlu0 0
        %1911 = vperm.xlu0 %1910, %v588
        %v1912 = vpop.permute.xlu0 %1911
        %1915 = vset.pattern.permute.xlu0 0
        %1916 = vperm.xlu0 %1915, %v589
        %v1917 = vpop.permute.xlu0 %1916
        %1920 = vset.pattern.permute.xlu0 0
        %1921 = vperm.xlu0 %1920, %v590
        %v1922 = vpop.permute.xlu0 %1921
        %v1924 = vmul.f32 0.0, %v1747
        %v1925 = vmul.f32 0.0, %v1752
        %v1926 = vmul.f32 %v1743, %v1757
        %v1927 = vmul.f32 %v1742, %v1762
        %v1928 = vmul.f32 %v1741, %v1767
        %v1929 = vmul.f32 %v1740, %v1772
        %v1930 = vmul.f32 %v1739, %v1777
        %v1931 = vmul.f32 %v1738, %v1782
        %v1932 = vmul.f32 %v1737, %v1787
        %v1933 = vmul.f32 %v1736, %v1792
        %v1934 = vmul.f32 %v1735, %v1797
        %v1935 = vmul.f32 %v1734, %v1802
        %v1936 = vmul.f32 %v1733, %v1807
        %v1937 = vmul.f32 %v1732, %v1812
        %v1938 = vmul.f32 %v1731, %v1817
        %v1939 = vmul.f32 %v1730, %v1822
        %v1940 = vmul.f32 %v1729, %v1827
        %v1941 = vmul.f32 %v1728, %v1832
        %v1942 = vmul.f32 %v1727, %v1837
        %v1943 = vmul.f32 %v1726, %v1842
        %v1944 = vmul.f32 %v1725, %v1847
        %v1945 = vmul.f32 %v1724, %v1852
        %v1946 = vmul.f32 %v1723, %v1857
        %v1947 = vmul.f32 %v1722, %v1862
        %v1948 = vmul.f32 %v1721, %v1867
        %v1949 = vmul.f32 %v1720, %v1872
        %v1950 = vmul.f32 %v1719, %v1877
        %v1951 = vmul.f32 %v1718, %v1882
        %v1952 = vmul.f32 %v1717, %v1887
        %v1953 = vmul.f32 %v1716, %v1892
        %v1954 = vmul.f32 %v1715, %v1897
        %v1955 = vmul.f32 %v1714, %v1902
        %v1956 = vmul.f32 %v1713, %v1907
        %v1957 = vmul.f32 %v1712, %v1912
        %v1958 = vmul.f32 %v1711, %v1917
        %v1959 = vmul.f32 0.0, %v1922
        %v1960 = vrot.slane %v1642, 1
        %v1961 = vrot.slane %v1643, 1
        %v1962 = vrot.slane %v1644, 1
        %v1963 = vrot.slane %v1645, 1
        %v1964 = vrot.slane %v1646, 1
        %v1965 = vrot.slane %v1647, 1
        %v1966 = vrot.slane %v1648, 1
        %v1967 = vrot.slane %v1649, 1
        %v1968 = vrot.slane %v1650, 1
        %v1969 = vrot.slane %v1651, 1
        %v1970 = vrot.slane %v1652, 1
        %v1971 = vrot.slane %v1653, 1
        %v1972 = vrot.slane %v1654, 1
        %v1973 = vrot.slane %v1655, 1
        %v1974 = vrot.slane %v1656, 1
        %v1975 = vrot.slane %v1657, 1
        %v1976 = vrot.slane %v1658, 1
        %v1977 = vrot.slane %v1659, 1
        %v1978 = vrot.slane %v1660, 1
        %v1979 = vrot.slane %v1661, 1
        %v1980 = vrot.slane %v1662, 1
        %v1981 = vrot.slane %v1663, 1
        %v1982 = vrot.slane %v1664, 1
        %v1983 = vrot.slane %v1665, 1
        %v1984 = vrot.slane %v1666, 1
        %v1985 = vrot.slane %v1667, 1
        %v1986 = vrot.slane %v1668, 1
        %v1987 = vrot.slane %v1669, 1
        %v1988 = vrot.slane %v1670, 1
        %v1989 = vrot.slane %v1671, 1
        %v1990 = vrot.slane %v1672, 1
        %v1991 = vrot.slane %v1673, 1
        %vm1992 = vcmp.lt.s32.totalorder %v1709, 7
        %v1993 = vsel %vm1992, %v1991, 0.0
        %v1994 = vsel %vm1992, %v1990, %v1991
        %v1995 = vsel %vm1992, %v1989, %v1990
        %v1996 = vsel %vm1992, %v1988, %v1989
        %v1997 = vsel %vm1992, %v1987, %v1988
        %v1998 = vsel %vm1992, %v1986, %v1987
        %v1999 = vsel %vm1992, %v1985, %v1986
        %v2000 = vsel %vm1992, %v1984, %v1985
        %v2001 = vsel %vm1992, %v1983, %v1984
        %v2002 = vsel %vm1992, %v1982, %v1983
        %v2003 = vsel %vm1992, %v1981, %v1982
        %v2004 = vsel %vm1992, %v1980, %v1981
        %v2005 = vsel %vm1992, %v1979, %v1980
        %v2006 = vsel %vm1992, %v1978, %v1979
        %v2007 = vsel %vm1992, %v1977, %v1978
        %v2008 = vsel %vm1992, %v1976, %v1977
        %v2009 = vsel %vm1992, %v1975, %v1976
        %v2010 = vsel %vm1992, %v1974, %v1975
        %v2011 = vsel %vm1992, %v1973, %v1974
        %v2012 = vsel %vm1992, %v1972, %v1973
        %v2013 = vsel %vm1992, %v1971, %v1972
        %v2014 = vsel %vm1992, %v1970, %v1971
        %v2015 = vsel %vm1992, %v1969, %v1970
        %v2016 = vsel %vm1992, %v1968, %v1969
        %v2017 = vsel %vm1992, %v1967, %v1968
        %v2018 = vsel %vm1992, %v1966, %v1967
        %v2019 = vsel %vm1992, %v1965, %v1966
        %v2020 = vsel %vm1992, %v1964, %v1965
        %v2021 = vsel %vm1992, %v1963, %v1964
        %v2022 = vsel %vm1992, %v1962, %v1963
        %v2023 = vsel %vm1992, %v1961, %v1962
        %v2024 = vsel %vm1992, %v1960, %v1961
        %v2025 = vsel %vm1992, 0.0, %v1960
        %2027 = vset.pattern.permute.xlu0 0
        %2028 = vperm.xlu0 %2027, %v591
        %v2029 = vpop.permute.xlu0 %2028
        %2032 = vset.pattern.permute.xlu0 0
        %2033 = vperm.xlu0 %2032, %v592
        %v2034 = vpop.permute.xlu0 %2033
        %2037 = vset.pattern.permute.xlu0 0
        %2038 = vperm.xlu0 %2037, %v593
        %v2039 = vpop.permute.xlu0 %2038
        %2042 = vset.pattern.permute.xlu0 0
        %2043 = vperm.xlu0 %2042, %v594
        %v2044 = vpop.permute.xlu0 %2043
        %2047 = vset.pattern.permute.xlu0 0
        %2048 = vperm.xlu0 %2047, %v595
        %v2049 = vpop.permute.xlu0 %2048
        %2052 = vset.pattern.permute.xlu0 0
        %2053 = vperm.xlu0 %2052, %v596
        %v2054 = vpop.permute.xlu0 %2053
        %2057 = vset.pattern.permute.xlu0 0
        %2058 = vperm.xlu0 %2057, %v597
        %v2059 = vpop.permute.xlu0 %2058
        %2062 = vset.pattern.permute.xlu0 0
        %2063 = vperm.xlu0 %2062, %v598
        %v2064 = vpop.permute.xlu0 %2063
        %2067 = vset.pattern.permute.xlu0 0
        %2068 = vperm.xlu0 %2067, %v599
        %v2069 = vpop.permute.xlu0 %2068
        %2072 = vset.pattern.permute.xlu0 0
        %2073 = vperm.xlu0 %2072, %v600
        %v2074 = vpop.permute.xlu0 %2073
        %2077 = vset.pattern.permute.xlu0 0
        %2078 = vperm.xlu0 %2077, %v601
        %v2079 = vpop.permute.xlu0 %2078
        %2082 = vset.pattern.permute.xlu0 0
        %2083 = vperm.xlu0 %2082, %v602
        %v2084 = vpop.permute.xlu0 %2083
        %2087 = vset.pattern.permute.xlu0 0
        %2088 = vperm.xlu0 %2087, %v603
        %v2089 = vpop.permute.xlu0 %2088
        %2092 = vset.pattern.permute.xlu0 0
        %2093 = vperm.xlu0 %2092, %v604
        %v2094 = vpop.permute.xlu0 %2093
        %2097 = vset.pattern.permute.xlu0 0
        %2098 = vperm.xlu0 %2097, %v605
        %v2099 = vpop.permute.xlu0 %2098
        %2102 = vset.pattern.permute.xlu0 0
        %2103 = vperm.xlu0 %2102, %v606
        %v2104 = vpop.permute.xlu0 %2103
        %2107 = vset.pattern.permute.xlu0 0
        %2108 = vperm.xlu0 %2107, %v607
        %v2109 = vpop.permute.xlu0 %2108
        %2112 = vset.pattern.permute.xlu0 0
        %2113 = vperm.xlu0 %2112, %v608
        %v2114 = vpop.permute.xlu0 %2113
        %2117 = vset.pattern.permute.xlu0 0
        %2118 = vperm.xlu0 %2117, %v609
        %v2119 = vpop.permute.xlu0 %2118
        %2122 = vset.pattern.permute.xlu0 0
        %2123 = vperm.xlu0 %2122, %v610
        %v2124 = vpop.permute.xlu0 %2123
        %2127 = vset.pattern.permute.xlu0 0
        %2128 = vperm.xlu0 %2127, %v611
        %v2129 = vpop.permute.xlu0 %2128
        %2132 = vset.pattern.permute.xlu0 0
        %2133 = vperm.xlu0 %2132, %v612
        %v2134 = vpop.permute.xlu0 %2133
        %2137 = vset.pattern.permute.xlu0 0
        %2138 = vperm.xlu0 %2137, %v613
        %v2139 = vpop.permute.xlu0 %2138
        %2142 = vset.pattern.permute.xlu0 0
        %2143 = vperm.xlu0 %2142, %v614
        %v2144 = vpop.permute.xlu0 %2143
        %2147 = vset.pattern.permute.xlu0 0
        %2148 = vperm.xlu0 %2147, %v615
        %v2149 = vpop.permute.xlu0 %2148
        %2152 = vset.pattern.permute.xlu0 0
        %2153 = vperm.xlu0 %2152, %v616
        %v2154 = vpop.permute.xlu0 %2153
        %2157 = vset.pattern.permute.xlu0 0
        %2158 = vperm.xlu0 %2157, %v617
        %v2159 = vpop.permute.xlu0 %2158
        %2162 = vset.pattern.permute.xlu0 0
        %2163 = vperm.xlu0 %2162, %v618
        %v2164 = vpop.permute.xlu0 %2163
        %2167 = vset.pattern.permute.xlu0 0
        %2168 = vperm.xlu0 %2167, %v619
        %v2169 = vpop.permute.xlu0 %2168
        %2172 = vset.pattern.permute.xlu0 0
        %2173 = vperm.xlu0 %2172, %v620
        %v2174 = vpop.permute.xlu0 %2173
        %2177 = vset.pattern.permute.xlu0 0
        %2178 = vperm.xlu0 %2177, %v621
        %v2179 = vpop.permute.xlu0 %2178
        %2182 = vset.pattern.permute.xlu0 0
        %2183 = vperm.xlu0 %2182, %v622
        %v2184 = vpop.permute.xlu0 %2183
        %2187 = vset.pattern.permute.xlu0 0
        %2188 = vperm.xlu0 %2187, %v623
        %v2189 = vpop.permute.xlu0 %2188
        %2192 = vset.pattern.permute.xlu0 0
        %2193 = vperm.xlu0 %2192, %v624
        %v2194 = vpop.permute.xlu0 %2193
        %2197 = vset.pattern.permute.xlu0 0
        %2198 = vperm.xlu0 %2197, %v625
        %v2199 = vpop.permute.xlu0 %2198
        %2202 = vset.pattern.permute.xlu0 0
        %2203 = vperm.xlu0 %2202, %v626
        %v2204 = vpop.permute.xlu0 %2203
        %v2206 = vmul.f32 0.0, %v2029
        %v2207 = vmul.f32 %v2025, %v2034
        %v2208 = vmul.f32 %v2024, %v2039
        %v2209 = vmul.f32 %v2023, %v2044
        %v2210 = vmul.f32 %v2022, %v2049
        %v2211 = vmul.f32 %v2021, %v2054
        %v2212 = vmul.f32 %v2020, %v2059
        %v2213 = vmul.f32 %v2019, %v2064
        %v2214 = vmul.f32 %v2018, %v2069
        %v2215 = vmul.f32 %v2017, %v2074
        %v2216 = vmul.f32 %v2016, %v2079
        %v2217 = vmul.f32 %v2015, %v2084
        %v2218 = vmul.f32 %v2014, %v2089
        %v2219 = vmul.f32 %v2013, %v2094
        %v2220 = vmul.f32 %v2012, %v2099
        %v2221 = vmul.f32 %v2011, %v2104
        %v2222 = vmul.f32 %v2010, %v2109
        %v2223 = vmul.f32 %v2009, %v2114
        %v2224 = vmul.f32 %v2008, %v2119
        %v2225 = vmul.f32 %v2007, %v2124
        %v2226 = vmul.f32 %v2006, %v2129
        %v2227 = vmul.f32 %v2005, %v2134
        %v2228 = vmul.f32 %v2004, %v2139
        %v2229 = vmul.f32 %v2003, %v2144
        %v2230 = vmul.f32 %v2002, %v2149
        %v2231 = vmul.f32 %v2001, %v2154
        %v2232 = vmul.f32 %v2000, %v2159
        %v2233 = vmul.f32 %v1999, %v2164
        %v2234 = vmul.f32 %v1998, %v2169
        %v2235 = vmul.f32 %v1997, %v2174
        %v2236 = vmul.f32 %v1996, %v2179
        %v2237 = vmul.f32 %v1995, %v2184
        %v2238 = vmul.f32 %v1994, %v2189
        %v2239 = vmul.f32 %v1993, %v2194
        %v2240 = vmul.f32 0.0, %v2199
        %v2241 = vmul.f32 0.0, %v2204
        %2275 = vrot.lane.b32.xlu0 0.0, 64
        %v2276 = vpop.permute.xlu0 %2275
        %2277 = vrot.lane.b32.xlu0 %v1642, 64
        %v2278 = vpop.permute.xlu0 %2277
        %2279 = vrot.lane.b32.xlu0 %v1643, 64
        %v2280 = vpop.permute.xlu0 %2279
        %2281 = vrot.lane.b32.xlu0 %v1644, 64
        %v2282 = vpop.permute.xlu0 %2281
        %2283 = vrot.lane.b32.xlu0 %v1645, 64
        %v2284 = vpop.permute.xlu0 %2283
        %2285 = vrot.lane.b32.xlu0 %v1646, 64
        %v2286 = vpop.permute.xlu0 %2285
        %2287 = vrot.lane.b32.xlu0 %v1647, 64
        %v2288 = vpop.permute.xlu0 %2287
        %2289 = vrot.lane.b32.xlu0 %v1648, 64
        %v2290 = vpop.permute.xlu0 %2289
        %2291 = vrot.lane.b32.xlu0 %v1649, 64
        %v2292 = vpop.permute.xlu0 %2291
        %2293 = vrot.lane.b32.xlu0 %v1650, 64
        %v2294 = vpop.permute.xlu0 %2293
        %2295 = vrot.lane.b32.xlu0 %v1651, 64
        %v2296 = vpop.permute.xlu0 %2295
        %2297 = vrot.lane.b32.xlu0 %v1652, 64
        %v2298 = vpop.permute.xlu0 %2297
        %2299 = vrot.lane.b32.xlu0 %v1653, 64
        %v2300 = vpop.permute.xlu0 %2299
        %2301 = vrot.lane.b32.xlu0 %v1654, 64
        %v2302 = vpop.permute.xlu0 %2301
        %2303 = vrot.lane.b32.xlu0 %v1655, 64
        %v2304 = vpop.permute.xlu0 %2303
        %2305 = vrot.lane.b32.xlu0 %v1656, 64
        %v2306 = vpop.permute.xlu0 %2305
        %2307 = vrot.lane.b32.xlu0 %v1657, 64
        %v2308 = vpop.permute.xlu0 %2307
        %2309 = vrot.lane.b32.xlu0 %v1658, 64
        %v2310 = vpop.permute.xlu0 %2309
        %2311 = vrot.lane.b32.xlu0 %v1659, 64
        %v2312 = vpop.permute.xlu0 %2311
        %2313 = vrot.lane.b32.xlu0 %v1660, 64
        %v2314 = vpop.permute.xlu0 %2313
        %2315 = vrot.lane.b32.xlu0 %v1661, 64
        %v2316 = vpop.permute.xlu0 %2315
        %2317 = vrot.lane.b32.xlu0 %v1662, 64
        %v2318 = vpop.permute.xlu0 %2317
        %2319 = vrot.lane.b32.xlu0 %v1663, 64
        %v2320 = vpop.permute.xlu0 %2319
        %2321 = vrot.lane.b32.xlu0 %v1664, 64
        %v2322 = vpop.permute.xlu0 %2321
        %2323 = vrot.lane.b32.xlu0 %v1665, 64
        %v2324 = vpop.permute.xlu0 %2323
        %2325 = vrot.lane.b32.xlu0 %v1666, 64
        %v2326 = vpop.permute.xlu0 %2325
        %2327 = vrot.lane.b32.xlu0 %v1667, 64
        %v2328 = vpop.permute.xlu0 %2327
        %2329 = vrot.lane.b32.xlu0 %v1668, 64
        %v2330 = vpop.permute.xlu0 %2329
        %2331 = vrot.lane.b32.xlu0 %v1669, 64
        %v2332 = vpop.permute.xlu0 %2331
        %2333 = vrot.lane.b32.xlu0 %v1670, 64
        %v2334 = vpop.permute.xlu0 %2333
        %2335 = vrot.lane.b32.xlu0 %v1671, 64
        %v2336 = vpop.permute.xlu0 %2335
        %2337 = vrot.lane.b32.xlu0 %v1672, 64
        %v2338 = vpop.permute.xlu0 %2337
        %2339 = vrot.lane.b32.xlu0 %v1673, 64
        %v2340 = vpop.permute.xlu0 %2339
        %v2374 = vsel %vm667, %v1924, %v2276
        %v2375 = vsel %vm667, %v1925, %v2276
        %v2376 = vsel %vm667, %v1926, %v2278
        %v2377 = vsel %vm667, %v1927, %v2280
        %v2378 = vsel %vm667, %v1928, %v2282
        %v2379 = vsel %vm667, %v1929, %v2284
        %v2380 = vsel %vm667, %v1930, %v2286
        %v2381 = vsel %vm667, %v1931, %v2288
        %v2382 = vsel %vm667, %v1932, %v2290
        %v2383 = vsel %vm667, %v1933, %v2292
        %v2384 = vsel %vm667, %v1934, %v2294
        %v2385 = vsel %vm667, %v1935, %v2296
        %v2386 = vsel %vm667, %v1936, %v2298
        %v2387 = vsel %vm667, %v1937, %v2300
        %v2388 = vsel %vm667, %v1938, %v2302
        %v2389 = vsel %vm667, %v1939, %v2304
        %v2390 = vsel %vm667, %v1940, %v2306
        %v2391 = vsel %vm667, %v1941, %v2308
        %v2392 = vsel %vm667, %v1942, %v2310
        %v2393 = vsel %vm667, %v1943, %v2312
        %v2394 = vsel %vm667, %v1944, %v2314
        %v2395 = vsel %vm667, %v1945, %v2316
        %v2396 = vsel %vm667, %v1946, %v2318
        %v2397 = vsel %vm667, %v1947, %v2320
        %v2398 = vsel %vm667, %v1948, %v2322
        %v2399 = vsel %vm667, %v1949, %v2324
        %v2400 = vsel %vm667, %v1950, %v2326
        %v2401 = vsel %vm667, %v1951, %v2328
        %v2402 = vsel %vm667, %v1952, %v2330
        %v2403 = vsel %vm667, %v1953, %v2332
        %v2404 = vsel %vm667, %v1954, %v2334
        %v2405 = vsel %vm667, %v1955, %v2336
        %v2406 = vsel %vm667, %v1956, %v2338
        %v2407 = vsel %vm667, %v1957, %v2340
        %v2408 = vsel %vm667, %v1958, %v2276
        %v2409 = vsel %vm667, %v1959, %v2276
        %v2410 = vld [vmem:[%s10] sm:$0xff]
        %v2411 = vld [vmem:[%s10 + $0x8] sm:$0xff]
        %v2412 = vld [vmem:[%s10 + $0x10] sm:$0xff]
        %v2413 = vld [vmem:[%s10 + $0x18] sm:$0xff]
        %v2414 = vld [vmem:[%s10 + $0x20] sm:$0xff]
        %v2415 = vld [vmem:[%s10 + $0x28] sm:$0xff]
        %v2416 = vld [vmem:[%s10 + $0x30] sm:$0xff]
        %v2417 = vld [vmem:[%s10 + $0x38] sm:$0xff]
        %v2418 = vld [vmem:[%s10 + $0x40] sm:$0xff]
        %v2419 = vld [vmem:[%s10 + $0x48] sm:$0xff]
        %v2420 = vld [vmem:[%s10 + $0x50] sm:$0xff]
        %v2421 = vld [vmem:[%s10 + $0x58] sm:$0xff]
        %v2422 = vld [vmem:[%s10 + $0x60] sm:$0xff]
        %v2423 = vld [vmem:[%s10 + $0x68] sm:$0xff]
        %v2424 = vld [vmem:[%s10 + $0x70] sm:$0xff]
        %v2425 = vld [vmem:[%s10 + $0x78] sm:$0xff]
        %v2426 = vld [vmem:[%s10 + $0x80] sm:$0xff]
        %v2427 = vld [vmem:[%s10 + $0x88] sm:$0xff]
        %v2428 = vld [vmem:[%s10 + $0x90] sm:$0xff]
        %v2429 = vld [vmem:[%s10 + $0x98] sm:$0xff]
        %v2430 = vld [vmem:[%s10 + $0xa0] sm:$0xff]
        %v2431 = vld [vmem:[%s10 + $0xa8] sm:$0xff]
        %v2432 = vld [vmem:[%s10 + $0xb0] sm:$0xff]
        %v2433 = vld [vmem:[%s10 + $0xb8] sm:$0xff]
        %v2435 = vsel %vm667, %v2206, 0
        %v2438 = vsel %vm667, %v2207, 0
        %v2441 = vsel %vm667, %v2208, 0
        %v2444 = vsel %vm667, %v2209, 0
        %v2447 = vsel %vm667, %v2210, 0
        %v2450 = vsel %vm667, %v2211, 0
        %v2453 = vsel %vm667, %v2212, 0
        %v2456 = vsel %vm667, %v2213, 0
        %v2459 = vsel %vm667, %v2214, 0
        %v2462 = vsel %vm667, %v2215, 0
        %v2465 = vsel %vm667, %v2216, 0
        %v2468 = vsel %vm667, %v2217, 0
        %v2471 = vsel %vm667, %v2218, 0
        %v2474 = vsel %vm667, %v2219, 0
        %v2477 = vsel %vm667, %v2220, 0
        %v2480 = vsel %vm667, %v2221, 0
        %v2483 = vsel %vm667, %v2222, 0
        %v2486 = vsel %vm667, %v2223, 0
        %v2489 = vsel %vm667, %v2224, 0
        %v2492 = vsel %vm667, %v2225, 0
        %v2495 = vsel %vm667, %v2226, 0
        %v2498 = vsel %vm667, %v2227, 0
        %v2501 = vsel %vm667, %v2228, 0
        %v2504 = vsel %vm667, %v2229, 0
        %v2507 = vsel %vm667, %v2230, 0
        %v2510 = vsel %vm667, %v2231, 0
        %v2513 = vsel %vm667, %v2232, 0
        %v2516 = vsel %vm667, %v2233, 0
        %v2519 = vsel %vm667, %v2234, 0
        %v2522 = vsel %vm667, %v2235, 0
        %v2525 = vsel %vm667, %v2236, 0
        %v2528 = vsel %vm667, %v2237, 0
        %2530 = vmatprep.subr.mxu0 0.0
        %2531 = vmatpush1.msra.mxu0 %v2410
        %2532 = vmatprep.subr.mxu0 0.0
        %2533 = vmatpush1.msra.mxu0 %v2411
        %2534 = vmatprep.subr.mxu0 0.0
        %2535 = vmatpush1.msra.mxu0 %v2412
        %2536 = vmatprep.subr.mxu0 0.0
        %2537 = vmatpush1.msra.mxu0 %v2413
        %2538 = vmatprep.subr.mxu0 0.0
        %2539 = vmatpush1.msra.mxu0 %v2414
        %2540 = vmatprep.subr.mxu0 0.0
        %2541 = vmatpush1.msra.mxu0 %v2415
        %2542 = vmatprep.subr.mxu0 0.0
        %2543 = vmatpush1.msra.mxu0 %v2416
        %2544 = vmatprep.subr.mxu0 0.0
        %2545 = vmatpush1.msra.mxu0 %v2417
        %2546 = vmatprep.subr.mxu0 0.0
        %2547 = vmatpush1.msra.mxu0 %v2418
        %2548 = vmatprep.subr.mxu0 0.0
        %2549 = vmatpush1.msra.mxu0 %v2419
        %2550 = vmatprep.subr.mxu0 0.0
        %2551 = vmatpush1.msra.mxu0 %v2420
        %2552 = vmatprep.subr.mxu0 0.0
        %2553 = vmatpush1.msra.mxu0 %v2421
        %2554 = vmatprep.subr.mxu0 0.0
        %2555 = vmatpush1.msra.mxu0 %v2422
        %2556 = vmatprep.subr.mxu0 0.0
        %2557 = vmatpush1.msra.mxu0 %v2423
        %2558 = vmatprep.subr.mxu0 0.0
        %2559 = vmatpush1.msra.mxu0 %v2424
        %2560 = vmatprep.subr.mxu0 0.0
        %2561 = vmatpush1.msra.mxu0 %v2425
        %2562 = vmatprep.subr.mxu0 0.0
        %2563 = vmatpush1.msra.mxu0 %v2426
        %2564 = vmatprep.subr.mxu0 0.0
        %2565 = vmatpush1.msra.mxu0 %v2427
        %2566 = vmatprep.subr.mxu0 0.0
        %2567 = vmatpush1.msra.mxu0 %v2428
        %2568 = vmatprep.subr.mxu0 0.0
        %2569 = vmatpush1.msra.mxu0 %v2429
        %2570 = vmatprep.subr.mxu0 0.0
        %2571 = vmatpush1.msra.mxu0 %v2430
        %2572 = vmatprep.subr.mxu0 0.0
        %2573 = vmatpush1.msra.mxu0 %v2431
        %2574 = vmatprep.subr.mxu0 0.0
        %2575 = vmatpush1.msra.mxu0 %v2432
        %2576 = vmatprep.subr.mxu0 0.0
        %2577 = vmatpush1.msra.mxu0 %v2433
        %2578 = vmatprep.subr.mxu0 0.0
        %2579 = vmatpush1.msra.mxu0 0.0
        %2580 = vmatprep.subr.mxu0 0.0
        %2581 = vmatpush1.msra.mxu0 0.0
        %2582 = vmatprep.subr.mxu0 0.0
        %2583 = vmatpush1.msra.mxu0 0.0
        %2584 = vmatprep.subr.mxu0 0.0
        %2585 = vmatpush1.msra.mxu0 0.0
        %2586 = vmatprep.subr.mxu0 0.0
        %2587 = vmatpush1.msra.mxu0 0.0
        %2588 = vmatprep.subr.mxu0 0.0
        %2589 = vmatpush1.msra.mxu0 0.0
        %2590 = vmatprep.subr.mxu0 0.0
        %2591 = vmatpush1.msra.mxu0 0.0
        %2592 = vmatprep.subr.mxu0 0.0
        %2593 = vmatpush1.msra.mxu0 0.0
        %2594 = vmatprep.mubr.f32.mxu0 %v2435
        %2595 = vmatmul.mubr.f32.gmra.mrb[0].mxu0 %v2374
        %v2596 = vpop.f32.mrb[0].mxu0
        %v2597 = vadd.f32 0.0, %v2596
        %v2598 = vpop.f32.mrb[0].mxu0
        %2599 = vmatprep.mubr.f32.mxu0 %v2438
        %2600 = vmatmul.mubr.f32.gmra.mrb[0].mxu0 %v2375
        %v2601 = vpop.f32.mrb[0].mxu0
        %v2602 = vadd.f32 0.0, %v2601
        %v2603 = vpop.f32.mrb[0].mxu0
        %2604 = vmatprep.mubr.f32.mxu0 %v2441
        %2605 = vmatmul.mubr.f32.gmra.mrb[0].mxu0 %v2376
        %v2606 = vpop.f32.mrb[0].mxu0
        %v2607 = vadd.f32 0.0, %v2606
        %v2608 = vpop.f32.mrb[0].mxu0
        %2609 = vmatprep.mubr.f32.mxu0 %v2444
        %2610 = vmatmul.mubr.f32.gmra.mrb[0].mxu0 %v2377
        %v2611 = vpop.f32.mrb[0].mxu0
        %v2612 = vadd.f32 0.0, %v2611
        %v2613 = vpop.f32.mrb[0].mxu0
        %2614 = vmatprep.mubr.f32.mxu0 %v2447
        %2615 = vmatmul.mubr.f32.gmra.mrb[0].mxu0 %v2378
        %v2616 = vpop.f32.mrb[0].mxu0
        %v2617 = vadd.f32 0.0, %v2616
        %v2618 = vpop.f32.mrb[0].mxu0
        %2619 = vmatprep.mubr.f32.mxu0 %v2450
        %2620 = vmatmul.mubr.f32.gmra.mrb[0].mxu0 %v2379
        %v2621 = vpop.f32.mrb[0].mxu0
        %v2622 = vadd.f32 0.0, %v2621
        %v2623 = vpop.f32.mrb[0].mxu0
        %2624 = vmatprep.mubr.f32.mxu0 %v2453
        %2625 = vmatmul.mubr.f32.gmra.mrb[0].mxu0 %v2380
        %v2626 = vpop.f32.mrb[0].mxu0
        %v2627 = vadd.f32 0.0, %v2626
        %v2628 = vpop.f32.mrb[0].mxu0
        %2629 = vmatprep.mubr.f32.mxu0 %v2456
        %2630 = vmatmul.mubr.f32.gmra.mrb[0].mxu0 %v2381
        %v2631 = vpop.f32.mrb[0].mxu0
        %v2632 = vadd.f32 0.0, %v2631
        %v2633 = vpop.f32.mrb[0].mxu0
        %2634 = vmatprep.mubr.f32.mxu0 %v2459
        %2635 = vmatmul.mubr.f32.gmra.mrb[0].mxu0 %v2382
        %v2636 = vpop.f32.mrb[0].mxu0
        %v2637 = vadd.f32 0.0, %v2636
        %v2638 = vpop.f32.mrb[0].mxu0
        %2639 = vmatprep.mubr.f32.mxu0 %v2462
        %2640 = vmatmul.mubr.f32.gmra.mrb[0].mxu0 %v2383
        %v2641 = vpop.f32.mrb[0].mxu0
        %v2642 = vadd.f32 0.0, %v2641
        %v2643 = vpop.f32.mrb[0].mxu0
        %2644 = vmatprep.mubr.f32.mxu0 %v2465
        %2645 = vmatmul.mubr.f32.gmra.mrb[0].mxu0 %v2384
        %v2646 = vpop.f32.mrb[0].mxu0
        %v2647 = vadd.f32 0.0, %v2646
        %v2648 = vpop.f32.mrb[0].mxu0
        %2649 = vmatprep.mubr.f32.mxu0 %v2468
        %2650 = vmatmul.mubr.f32.gmra.mrb[0].mxu0 %v2385
        %v2651 = vpop.f32.mrb[0].mxu0
        %v2652 = vadd.f32 0.0, %v2651
        %v2653 = vpop.f32.mrb[0].mxu0
        %2654 = vmatprep.mubr.f32.mxu0 %v2471
        %2655 = vmatmul.mubr.f32.gmra.mrb[0].mxu0 %v2386
        %v2656 = vpop.f32.mrb[0].mxu0
        %v2657 = vadd.f32 0.0, %v2656
        %v2658 = vpop.f32.mrb[0].mxu0
        %2659 = vmatprep.mubr.f32.mxu0 %v2474
        %2660 = vmatmul.mubr.f32.gmra.mrb[0].mxu0 %v2387
        %v2661 = vpop.f32.mrb[0].mxu0
        %v2662 = vadd.f32 0.0, %v2661
        %v2663 = vpop.f32.mrb[0].mxu0
        %2664 = vmatprep.mubr.f32.mxu0 %v2477
        %2665 = vmatmul.mubr.f32.gmra.mrb[0].mxu0 %v2388
        %v2666 = vpop.f32.mrb[0].mxu0
        %v2667 = vadd.f32 0.0, %v2666
        %v2668 = vpop.f32.mrb[0].mxu0
        %2669 = vmatprep.mubr.f32.mxu0 %v2480
        %2670 = vmatmul.mubr.f32.gmra.mrb[0].mxu0 %v2389
        %v2671 = vpop.f32.mrb[0].mxu0
        %v2672 = vadd.f32 0.0, %v2671
        %v2673 = vpop.f32.mrb[0].mxu0
        %2674 = vmatprep.mubr.f32.mxu0 %v2483
        %2675 = vmatmul.mubr.f32.gmra.mrb[0].mxu0 %v2390
        %v2676 = vpop.f32.mrb[0].mxu0
        %v2677 = vadd.f32 0.0, %v2676
        %v2678 = vpop.f32.mrb[0].mxu0
        %2679 = vmatprep.mubr.f32.mxu0 %v2486
        %2680 = vmatmul.mubr.f32.gmra.mrb[0].mxu0 %v2391
        %v2681 = vpop.f32.mrb[0].mxu0
        %v2682 = vadd.f32 0.0, %v2681
        %v2683 = vpop.f32.mrb[0].mxu0
        %2684 = vmatprep.mubr.f32.mxu0 %v2489
        %2685 = vmatmul.mubr.f32.gmra.mrb[0].mxu0 %v2392
        %v2686 = vpop.f32.mrb[0].mxu0
        %v2687 = vadd.f32 0.0, %v2686
        %v2688 = vpop.f32.mrb[0].mxu0
        %2689 = vmatprep.mubr.f32.mxu0 %v2492
        %2690 = vmatmul.mubr.f32.gmra.mrb[0].mxu0 %v2393
        %v2691 = vpop.f32.mrb[0].mxu0
        %v2692 = vadd.f32 0.0, %v2691
        %v2693 = vpop.f32.mrb[0].mxu0
        %2694 = vmatprep.mubr.f32.mxu0 %v2495
        %2695 = vmatmul.mubr.f32.gmra.mrb[0].mxu0 %v2394
        %v2696 = vpop.f32.mrb[0].mxu0
        %v2697 = vadd.f32 0.0, %v2696
        %v2698 = vpop.f32.mrb[0].mxu0
        %2699 = vmatprep.mubr.f32.mxu0 %v2498
        %2700 = vmatmul.mubr.f32.gmra.mrb[0].mxu0 %v2395
        %v2701 = vpop.f32.mrb[0].mxu0
        %v2702 = vadd.f32 0.0, %v2701
        %v2703 = vpop.f32.mrb[0].mxu0
        %2704 = vmatprep.mubr.f32.mxu0 %v2501
        %2705 = vmatmul.mubr.f32.gmra.mrb[0].mxu0 %v2396
        %v2706 = vpop.f32.mrb[0].mxu0
        %v2707 = vadd.f32 0.0, %v2706
        %v2708 = vpop.f32.mrb[0].mxu0
        %2709 = vmatprep.mubr.f32.mxu0 %v2504
        %2710 = vmatmul.mubr.f32.gmra.mrb[0].mxu0 %v2397
        %v2711 = vpop.f32.mrb[0].mxu0
        %v2712 = vadd.f32 0.0, %v2711
        %v2713 = vpop.f32.mrb[0].mxu0
        %2714 = vmatprep.mubr.f32.mxu0 %v2507
        %2715 = vmatmul.mubr.f32.gmra.mrb[0].mxu0 %v2398
        %v2716 = vpop.f32.mrb[0].mxu0
        %v2717 = vadd.f32 0.0, %v2716
        %v2718 = vpop.f32.mrb[0].mxu0
        %2719 = vmatprep.mubr.f32.mxu0 %v2510
        %2720 = vmatmul.mubr.f32.gmra.mrb[0].mxu0 %v2399
        %v2721 = vpop.f32.mrb[0].mxu0
        %v2722 = vadd.f32 0.0, %v2721
        %v2723 = vpop.f32.mrb[0].mxu0
        %2724 = vmatprep.mubr.f32.mxu0 %v2513
        %2725 = vmatmul.mubr.f32.gmra.mrb[0].mxu0 %v2400
        %v2726 = vpop.f32.mrb[0].mxu0
        %v2727 = vadd.f32 0.0, %v2726
        %v2728 = vpop.f32.mrb[0].mxu0
        %2729 = vmatprep.mubr.f32.mxu0 %v2516
        %2730 = vmatmul.mubr.f32.gmra.mrb[0].mxu0 %v2401
        %v2731 = vpop.f32.mrb[0].mxu0
        %v2732 = vadd.f32 0.0, %v2731
        %v2733 = vpop.f32.mrb[0].mxu0
        %2734 = vmatprep.mubr.f32.mxu0 %v2519
        %2735 = vmatmul.mubr.f32.gmra.mrb[0].mxu0 %v2402
        %v2736 = vpop.f32.mrb[0].mxu0
        %v2737 = vadd.f32 0.0, %v2736
        %v2738 = vpop.f32.mrb[0].mxu0
        %2739 = vmatprep.mubr.f32.mxu0 %v2522
        %2740 = vmatmul.mubr.f32.gmra.mrb[0].mxu0 %v2403
        %v2741 = vpop.f32.mrb[0].mxu0
        %v2742 = vadd.f32 0.0, %v2741
        %v2743 = vpop.f32.mrb[0].mxu0
        %2744 = vmatprep.mubr.f32.mxu0 %v2525
        %2745 = vmatmul.mubr.f32.gmra.mrb[0].mxu0 %v2404
        %v2746 = vpop.f32.mrb[0].mxu0
        %v2747 = vadd.f32 0.0, %v2746
        %v2748 = vpop.f32.mrb[0].mxu0
        %2749 = vmatprep.mubr.f32.mxu0 %v2528
        %2750 = vmatmul.mubr.f32.gmra.mrb[0].mxu0 %v2405
        %v2751 = vpop.f32.mrb[0].mxu0
        %v2752 = vadd.f32 0.0, %v2751
        %v2753 = vpop.f32.mrb[0].mxu0
        %2754 = vdwg.mxu0
        %v2755 = vlaneseq
        %v2756 = vshrl.u32 %v2755, 7
        %v2757 = vsub.s32 0, %v2756
        %v2758 = vrot.slane %v1675, %v2757
        %v2759 = vadd.f32 %v2758, %v2597
        %v2760 = vadd.f32 %v2758, %v2602
        %v2761 = vadd.f32 %v2758, %v2607
        %v2762 = vadd.f32 %v2758, %v2612
        %v2763 = vadd.f32 %v2758, %v2617
        %v2764 = vadd.f32 %v2758, %v2622
        %v2765 = vadd.f32 %v2758, %v2627
        %v2766 = vadd.f32 %v2758, %v2632
        %v2767 = vadd.f32 %v2758, %v2637
        %v2768 = vadd.f32 %v2758, %v2642
        %v2769 = vadd.f32 %v2758, %v2647
        %v2770 = vadd.f32 %v2758, %v2652
        %v2771 = vadd.f32 %v2758, %v2657
        %v2772 = vadd.f32 %v2758, %v2662
        %v2773 = vadd.f32 %v2758, %v2667
        %v2774 = vadd.f32 %v2758, %v2672
        %v2775 = vadd.f32 %v2758, %v2677
        %v2776 = vadd.f32 %v2758, %v2682
        %v2777 = vadd.f32 %v2758, %v2687
        %v2778 = vadd.f32 %v2758, %v2692
        %v2779 = vadd.f32 %v2758, %v2697
        %v2780 = vadd.f32 %v2758, %v2702
        %v2781 = vadd.f32 %v2758, %v2707
        %v2782 = vadd.f32 %v2758, %v2712
        %v2783 = vadd.f32 %v2758, %v2717
        %v2784 = vadd.f32 %v2758, %v2722
        %v2785 = vadd.f32 %v2758, %v2727
        %v2786 = vadd.f32 %v2758, %v2732
        %v2787 = vadd.f32 %v2758, %v2737
        %v2788 = vadd.f32 %v2758, %v2742
        %v2789 = vadd.f32 %v2758, %v2747
        %v2790 = vadd.f32 %v2758, %v2752
        %s2791 = scalar_lea.vmem %s10, 192
        %v2792 = vld [vmem:[%s2791] sm:$0xff]
        %v2793 = vld [vmem:[%s2791 + $0x8] sm:$0xff]
        %v2794 = vld [vmem:[%s2791 + $0x10] sm:$0xff]
        %v2795 = vld [vmem:[%s2791 + $0x18] sm:$0xff]
        %v2796 = vld [vmem:[%s2791 + $0x20] sm:$0xff]
        %v2797 = vld [vmem:[%s2791 + $0x28] sm:$0xff]
        %v2798 = vld [vmem:[%s2791 + $0x30] sm:$0xff]
        %v2799 = vld [vmem:[%s2791 + $0x38] sm:$0xff]
        %v2800 = vld [vmem:[%s2791 + $0x40] sm:$0xff]
        %v2801 = vld [vmem:[%s2791 + $0x48] sm:$0xff]
        %v2802 = vld [vmem:[%s2791 + $0x50] sm:$0xff]
        %v2803 = vld [vmem:[%s2791 + $0x58] sm:$0xff]
        %v2804 = vld [vmem:[%s2791 + $0x60] sm:$0xff]
        %v2805 = vld [vmem:[%s2791 + $0x68] sm:$0xff]
        %v2806 = vld [vmem:[%s2791 + $0x70] sm:$0xff]
        %v2807 = vld [vmem:[%s2791 + $0x78] sm:$0xff]
        %v2808 = vld [vmem:[%s2791 + $0x80] sm:$0xff]
        %v2809 = vld [vmem:[%s2791 + $0x88] sm:$0xff]
        %v2810 = vld [vmem:[%s2791 + $0x90] sm:$0xff]
        %v2811 = vld [vmem:[%s2791 + $0x98] sm:$0xff]
        %v2812 = vld [vmem:[%s2791 + $0xa0] sm:$0xff]
        %v2813 = vld [vmem:[%s2791 + $0xa8] sm:$0xff]
        %v2814 = vld [vmem:[%s2791 + $0xb0] sm:$0xff]
        %v2815 = vld [vmem:[%s2791 + $0xb8] sm:$0xff]
        %v2817 = vsel %vm667, %v2238, 0
        %v2820 = vsel %vm667, %v2239, 0
        %2822 = vmatprep.subr.mxu0 0.0
        %2823 = vmatpush1.msra.mxu0 %v2792
        %2824 = vmatprep.subr.mxu0 0.0
        %2825 = vmatpush1.msra.mxu0 %v2793
        %2826 = vmatprep.subr.mxu0 0.0
        %2827 = vmatpush1.msra.mxu0 %v2794
        %2828 = vmatprep.subr.mxu0 0.0
        %2829 = vmatpush1.msra.mxu0 %v2795
        %2830 = vmatprep.subr.mxu0 0.0
        %2831 = vmatpush1.msra.mxu0 %v2796
        %2832 = vmatprep.subr.mxu0 0.0
        %2833 = vmatpush1.msra.mxu0 %v2797
        %2834 = vmatprep.subr.mxu0 0.0
        %2835 = vmatpush1.msra.mxu0 %v2798
        %2836 = vmatprep.subr.mxu0 0.0
        %2837 = vmatpush1.msra.mxu0 %v2799
        %2838 = vmatprep.subr.mxu0 0.0
        %2839 = vmatpush1.msra.mxu0 %v2800
        %2840 = vmatprep.subr.mxu0 0.0
        %2841 = vmatpush1.msra.mxu0 %v2801
        %2842 = vmatprep.subr.mxu0 0.0
        %2843 = vmatpush1.msra.mxu0 %v2802
        %2844 = vmatprep.subr.mxu0 0.0
        %2845 = vmatpush1.msra.mxu0 %v2803
        %2846 = vmatprep.subr.mxu0 0.0
        %2847 = vmatpush1.msra.mxu0 %v2804
        %2848 = vmatprep.subr.mxu0 0.0
        %2849 = vmatpush1.msra.mxu0 %v2805
        %2850 = vmatprep.subr.mxu0 0.0
        %2851 = vmatpush1.msra.mxu0 %v2806
        %2852 = vmatprep.subr.mxu0 0.0
        %2853 = vmatpush1.msra.mxu0 %v2807
        %2854 = vmatprep.subr.mxu0 0.0
        %2855 = vmatpush1.msra.mxu0 %v2808
        %2856 = vmatprep.subr.mxu0 0.0
        %2857 = vmatpush1.msra.mxu0 %v2809
        %2858 = vmatprep.subr.mxu0 0.0
        %2859 = vmatpush1.msra.mxu0 %v2810
        %2860 = vmatprep.subr.mxu0 0.0
        %2861 = vmatpush1.msra.mxu0 %v2811
        %2862 = vmatprep.subr.mxu0 0.0
        %2863 = vmatpush1.msra.mxu0 %v2812
        %2864 = vmatprep.subr.mxu0 0.0
        %2865 = vmatpush1.msra.mxu0 %v2813
        %2866 = vmatprep.subr.mxu0 0.0
        %2867 = vmatpush1.msra.mxu0 %v2814
        %2868 = vmatprep.subr.mxu0 0.0
        %2869 = vmatpush1.msra.mxu0 %v2815
        %2870 = vmatprep.subr.mxu0 0.0
        %2871 = vmatpush1.msra.mxu0 0.0
        %2872 = vmatprep.subr.mxu0 0.0
        %2873 = vmatpush1.msra.mxu0 0.0
        %2874 = vmatprep.subr.mxu0 0.0
        %2875 = vmatpush1.msra.mxu0 0.0
        %2876 = vmatprep.subr.mxu0 0.0
        %2877 = vmatpush1.msra.mxu0 0.0
        %2878 = vmatprep.subr.mxu0 0.0
        %2879 = vmatpush1.msra.mxu0 0.0
        %2880 = vmatprep.subr.mxu0 0.0
        %2881 = vmatpush1.msra.mxu0 0.0
        %2882 = vmatprep.subr.mxu0 0.0
        %2883 = vmatpush1.msra.mxu0 0.0
        %2884 = vmatprep.subr.mxu0 0.0
        %2885 = vmatpush1.msra.mxu0 0.0
        %2886 = vmatprep.mubr.f32.mxu0 %v2441
        %2887 = vmatmul.mubr.f32.gmra.mrb[0].mxu0 %v2376
        %v2888 = vpop.f32.mrb[0].mxu0
        %v2889 = vadd.f32 0.0, %v2888
        %v2890 = vpop.f32.mrb[0].mxu0
        %2891 = vmatprep.mubr.f32.mxu0 %v2444
        %2892 = vmatmul.mubr.f32.gmra.mrb[0].mxu0 %v2377
        %v2893 = vpop.f32.mrb[0].mxu0
        %v2894 = vadd.f32 0.0, %v2893
        %v2895 = vpop.f32.mrb[0].mxu0
        %2896 = vmatprep.mubr.f32.mxu0 %v2447
        %2897 = vmatmul.mubr.f32.gmra.mrb[0].mxu0 %v2378
        %v2898 = vpop.f32.mrb[0].mxu0
        %v2899 = vadd.f32 0.0, %v2898
        %v2900 = vpop.f32.mrb[0].mxu0
        %2901 = vmatprep.mubr.f32.mxu0 %v2450
        %2902 = vmatmul.mubr.f32.gmra.mrb[0].mxu0 %v2379
        %v2903 = vpop.f32.mrb[0].mxu0
        %v2904 = vadd.f32 0.0, %v2903
        %v2905 = vpop.f32.mrb[0].mxu0
        %2906 = vmatprep.mubr.f32.mxu0 %v2453
        %2907 = vmatmul.mubr.f32.gmra.mrb[0].mxu0 %v2380
        %v2908 = vpop.f32.mrb[0].mxu0
        %v2909 = vadd.f32 0.0, %v2908
        %v2910 = vpop.f32.mrb[0].mxu0
        %2911 = vmatprep.mubr.f32.mxu0 %v2456
        %2912 = vmatmul.mubr.f32.gmra.mrb[0].mxu0 %v2381
        %v2913 = vpop.f32.mrb[0].mxu0
        %v2914 = vadd.f32 0.0, %v2913
        %v2915 = vpop.f32.mrb[0].mxu0
        %2916 = vmatprep.mubr.f32.mxu0 %v2459
        %2917 = vmatmul.mubr.f32.gmra.mrb[0].mxu0 %v2382
        %v2918 = vpop.f32.mrb[0].mxu0
        %v2919 = vadd.f32 0.0, %v2918
        %v2920 = vpop.f32.mrb[0].mxu0
        %2921 = vmatprep.mubr.f32.mxu0 %v2462
        %2922 = vmatmul.mubr.f32.gmra.mrb[0].mxu0 %v2383
        %v2923 = vpop.f32.mrb[0].mxu0
        %v2924 = vadd.f32 0.0, %v2923
        %v2925 = vpop.f32.mrb[0].mxu0
        %2926 = vmatprep.mubr.f32.mxu0 %v2465
        %2927 = vmatmul.mubr.f32.gmra.mrb[0].mxu0 %v2384
        %v2928 = vpop.f32.mrb[0].mxu0
        %v2929 = vadd.f32 0.0, %v2928
        %v2930 = vpop.f32.mrb[0].mxu0
        %2931 = vmatprep.mubr.f32.mxu0 %v2468
        %2932 = vmatmul.mubr.f32.gmra.mrb[0].mxu0 %v2385
        %v2933 = vpop.f32.mrb[0].mxu0
        %v2934 = vadd.f32 0.0, %v2933
        %v2935 = vpop.f32.mrb[0].mxu0
        %2936 = vmatprep.mubr.f32.mxu0 %v2471
        %2937 = vmatmul.mubr.f32.gmra.mrb[0].mxu0 %v2386
        %v2938 = vpop.f32.mrb[0].mxu0
        %v2939 = vadd.f32 0.0, %v2938
        %v2940 = vpop.f32.mrb[0].mxu0
        %2941 = vmatprep.mubr.f32.mxu0 %v2474
        %2942 = vmatmul.mubr.f32.gmra.mrb[0].mxu0 %v2387
        %v2943 = vpop.f32.mrb[0].mxu0
        %v2944 = vadd.f32 0.0, %v2943
        %v2945 = vpop.f32.mrb[0].mxu0
        %2946 = vmatprep.mubr.f32.mxu0 %v2477
        %2947 = vmatmul.mubr.f32.gmra.mrb[0].mxu0 %v2388
        %v2948 = vpop.f32.mrb[0].mxu0
        %v2949 = vadd.f32 0.0, %v2948
        %v2950 = vpop.f32.mrb[0].mxu0
        %2951 = vmatprep.mubr.f32.mxu0 %v2480
        %2952 = vmatmul.mubr.f32.gmra.mrb[0].mxu0 %v2389
        %v2953 = vpop.f32.mrb[0].mxu0
        %v2954 = vadd.f32 0.0, %v2953
        %v2955 = vpop.f32.mrb[0].mxu0
        %2956 = vmatprep.mubr.f32.mxu0 %v2483
        %2957 = vmatmul.mubr.f32.gmra.mrb[0].mxu0 %v2390
        %v2958 = vpop.f32.mrb[0].mxu0
        %v2959 = vadd.f32 0.0, %v2958
        %v2960 = vpop.f32.mrb[0].mxu0
        %2961 = vmatprep.mubr.f32.mxu0 %v2486
        %2962 = vmatmul.mubr.f32.gmra.mrb[0].mxu0 %v2391
        %v2963 = vpop.f32.mrb[0].mxu0
        %v2964 = vadd.f32 0.0, %v2963
        %v2965 = vpop.f32.mrb[0].mxu0
        %2966 = vmatprep.mubr.f32.mxu0 %v2489
        %2967 = vmatmul.mubr.f32.gmra.mrb[0].mxu0 %v2392
        %v2968 = vpop.f32.mrb[0].mxu0
        %v2969 = vadd.f32 0.0, %v2968
        %v2970 = vpop.f32.mrb[0].mxu0
        %2971 = vmatprep.mubr.f32.mxu0 %v2492
        %2972 = vmatmul.mubr.f32.gmra.mrb[0].mxu0 %v2393
        %v2973 = vpop.f32.mrb[0].mxu0
        %v2974 = vadd.f32 0.0, %v2973
        %v2975 = vpop.f32.mrb[0].mxu0
        %2976 = vmatprep.mubr.f32.mxu0 %v2495
        %2977 = vmatmul.mubr.f32.gmra.mrb[0].mxu0 %v2394
        %v2978 = vpop.f32.mrb[0].mxu0
        %v2979 = vadd.f32 0.0, %v2978
        %v2980 = vpop.f32.mrb[0].mxu0
        %2981 = vmatprep.mubr.f32.mxu0 %v2498
        %2982 = vmatmul.mubr.f32.gmra.mrb[0].mxu0 %v2395
        %v2983 = vpop.f32.mrb[0].mxu0
        %v2984 = vadd.f32 0.0, %v2983
        %v2985 = vpop.f32.mrb[0].mxu0
        %2986 = vmatprep.mubr.f32.mxu0 %v2501
        %2987 = vmatmul.mubr.f32.gmra.mrb[0].mxu0 %v2396
        %v2988 = vpop.f32.mrb[0].mxu0
        %v2989 = vadd.f32 0.0, %v2988
        %v2990 = vpop.f32.mrb[0].mxu0
        %2991 = vmatprep.mubr.f32.mxu0 %v2504
        %2992 = vmatmul.mubr.f32.gmra.mrb[0].mxu0 %v2397
        %v2993 = vpop.f32.mrb[0].mxu0
        %v2994 = vadd.f32 0.0, %v2993
        %v2995 = vpop.f32.mrb[0].mxu0
        %2996 = vmatprep.mubr.f32.mxu0 %v2507
        %2997 = vmatmul.mubr.f32.gmra.mrb[0].mxu0 %v2398
        %v2998 = vpop.f32.mrb[0].mxu0
        %v2999 = vadd.f32 0.0, %v2998
        %v3000 = vpop.f32.mrb[0].mxu0
        %3001 = vmatprep.mubr.f32.mxu0 %v2510
        %3002 = vmatmul.mubr.f32.gmra.mrb[0].mxu0 %v2399
        %v3003 = vpop.f32.mrb[0].mxu0
        %v3004 = vadd.f32 0.0, %v3003
        %v3005 = vpop.f32.mrb[0].mxu0
        %3006 = vmatprep.mubr.f32.mxu0 %v2513
        %3007 = vmatmul.mubr.f32.gmra.mrb[0].mxu0 %v2400
        %v3008 = vpop.f32.mrb[0].mxu0
        %v3009 = vadd.f32 0.0, %v3008
        %v3010 = vpop.f32.mrb[0].mxu0
        %3011 = vmatprep.mubr.f32.mxu0 %v2516
        %3012 = vmatmul.mubr.f32.gmra.mrb[0].mxu0 %v2401
        %v3013 = vpop.f32.mrb[0].mxu0
        %v3014 = vadd.f32 0.0, %v3013
        %v3015 = vpop.f32.mrb[0].mxu0
        %3016 = vmatprep.mubr.f32.mxu0 %v2519
        %3017 = vmatmul.mubr.f32.gmra.mrb[0].mxu0 %v2402
        %v3018 = vpop.f32.mrb[0].mxu0
        %v3019 = vadd.f32 0.0, %v3018
        %v3020 = vpop.f32.mrb[0].mxu0
        %3021 = vmatprep.mubr.f32.mxu0 %v2522
        %3022 = vmatmul.mubr.f32.gmra.mrb[0].mxu0 %v2403
        %v3023 = vpop.f32.mrb[0].mxu0
        %v3024 = vadd.f32 0.0, %v3023
        %v3025 = vpop.f32.mrb[0].mxu0
        %3026 = vmatprep.mubr.f32.mxu0 %v2525
        %3027 = vmatmul.mubr.f32.gmra.mrb[0].mxu0 %v2404
        %v3028 = vpop.f32.mrb[0].mxu0
        %v3029 = vadd.f32 0.0, %v3028
        %v3030 = vpop.f32.mrb[0].mxu0
        %3031 = vmatprep.mubr.f32.mxu0 %v2528
        %3032 = vmatmul.mubr.f32.gmra.mrb[0].mxu0 %v2405
        %v3033 = vpop.f32.mrb[0].mxu0
        %v3034 = vadd.f32 0.0, %v3033
        %v3035 = vpop.f32.mrb[0].mxu0
        %3036 = vmatprep.mubr.f32.mxu0 %v2817
        %3037 = vmatmul.mubr.f32.gmra.mrb[0].mxu0 %v2406
        %v3038 = vpop.f32.mrb[0].mxu0
        %v3039 = vadd.f32 0.0, %v3038
        %v3040 = vpop.f32.mrb[0].mxu0
        %3041 = vmatprep.mubr.f32.mxu0 %v2820
        %3042 = vmatmul.mubr.f32.gmra.mrb[0].mxu0 %v2407
        %v3043 = vpop.f32.mrb[0].mxu0
        %v3044 = vadd.f32 0.0, %v3043
        %v3045 = vpop.f32.mrb[0].mxu0
        %3046 = vdwg.mxu0
        %v3047 = vadd.f32 %v2759, %v2889
        %v3048 = vadd.f32 %v2760, %v2894
        %v3049 = vadd.f32 %v2761, %v2899
        %v3050 = vadd.f32 %v2762, %v2904
        %v3051 = vadd.f32 %v2763, %v2909
        %v3052 = vadd.f32 %v2764, %v2914
        %v3053 = vadd.f32 %v2765, %v2919
        %v3054 = vadd.f32 %v2766, %v2924
        %v3055 = vadd.f32 %v2767, %v2929
        %v3056 = vadd.f32 %v2768, %v2934
        %v3057 = vadd.f32 %v2769, %v2939
        %v3058 = vadd.f32 %v2770, %v2944
        %v3059 = vadd.f32 %v2771, %v2949
        %v3060 = vadd.f32 %v2772, %v2954
        %v3061 = vadd.f32 %v2773, %v2959
        %v3062 = vadd.f32 %v2774, %v2964
        %v3063 = vadd.f32 %v2775, %v2969
        %v3064 = vadd.f32 %v2776, %v2974
        %v3065 = vadd.f32 %v2777, %v2979
        %v3066 = vadd.f32 %v2778, %v2984
        %v3067 = vadd.f32 %v2779, %v2989
        %v3068 = vadd.f32 %v2780, %v2994
        %v3069 = vadd.f32 %v2781, %v2999
        %v3070 = vadd.f32 %v2782, %v3004
        %v3071 = vadd.f32 %v2783, %v3009
        %v3072 = vadd.f32 %v2784, %v3014
        %v3073 = vadd.f32 %v2785, %v3019
        %v3074 = vadd.f32 %v2786, %v3024
        %v3075 = vadd.f32 %v2787, %v3029
        %v3076 = vadd.f32 %v2788, %v3034
        %v3077 = vadd.f32 %v2789, %v3039
        %v3078 = vadd.f32 %v2790, %v3044
        %s3079 = scalar_lea.vmem %s10, 384
        %v3080 = vld [vmem:[%s3079] sm:$0xff]
        %v3081 = vld [vmem:[%s3079 + $0x8] sm:$0xff]
        %v3082 = vld [vmem:[%s3079 + $0x10] sm:$0xff]
        %v3083 = vld [vmem:[%s3079 + $0x18] sm:$0xff]
        %v3084 = vld [vmem:[%s3079 + $0x20] sm:$0xff]
        %v3085 = vld [vmem:[%s3079 + $0x28] sm:$0xff]
        %v3086 = vld [vmem:[%s3079 + $0x30] sm:$0xff]
        %v3087 = vld [vmem:[%s3079 + $0x38] sm:$0xff]
        %v3088 = vld [vmem:[%s3079 + $0x40] sm:$0xff]
        %v3089 = vld [vmem:[%s3079 + $0x48] sm:$0xff]
        %v3090 = vld [vmem:[%s3079 + $0x50] sm:$0xff]
        %v3091 = vld [vmem:[%s3079 + $0x58] sm:$0xff]
        %v3092 = vld [vmem:[%s3079 + $0x60] sm:$0xff]
        %v3093 = vld [vmem:[%s3079 + $0x68] sm:$0xff]
        %v3094 = vld [vmem:[%s3079 + $0x70] sm:$0xff]
        %v3095 = vld [vmem:[%s3079 + $0x78] sm:$0xff]
        %v3096 = vld [vmem:[%s3079 + $0x80] sm:$0xff]
        %v3097 = vld [vmem:[%s3079 + $0x88] sm:$0xff]
        %v3098 = vld [vmem:[%s3079 + $0x90] sm:$0xff]
        %v3099 = vld [vmem:[%s3079 + $0x98] sm:$0xff]
        %v3100 = vld [vmem:[%s3079 + $0xa0] sm:$0xff]
        %v3101 = vld [vmem:[%s3079 + $0xa8] sm:$0xff]
        %v3102 = vld [vmem:[%s3079 + $0xb0] sm:$0xff]
        %v3103 = vld [vmem:[%s3079 + $0xb8] sm:$0xff]
        %v3105 = vsel %vm667, %v2240, 0
        %v3108 = vsel %vm667, %v2241, 0
        %3110 = vmatprep.subr.mxu0 0.0
        %3111 = vmatpush1.msra.mxu0 %v3080
        %3112 = vmatprep.subr.mxu0 0.0
        %3113 = vmatpush1.msra.mxu0 %v3081
        %3114 = vmatprep.subr.mxu0 0.0
        %3115 = vmatpush1.msra.mxu0 %v3082
        %3116 = vmatprep.subr.mxu0 0.0
        %3117 = vmatpush1.msra.mxu0 %v3083
        %3118 = vmatprep.subr.mxu0 0.0
        %3119 = vmatpush1.msra.mxu0 %v3084
        %3120 = vmatprep.subr.mxu0 0.0
        %3121 = vmatpush1.msra.mxu0 %v3085
        %3122 = vmatprep.subr.mxu0 0.0
        %3123 = vmatpush1.msra.mxu0 %v3086
        %3124 = vmatprep.subr.mxu0 0.0
        %3125 = vmatpush1.msra.mxu0 %v3087
        %3126 = vmatprep.subr.mxu0 0.0
        %3127 = vmatpush1.msra.mxu0 %v3088
        %3128 = vmatprep.subr.mxu0 0.0
        %3129 = vmatpush1.msra.mxu0 %v3089
        %3130 = vmatprep.subr.mxu0 0.0
        %3131 = vmatpush1.msra.mxu0 %v3090
        %3132 = vmatprep.subr.mxu0 0.0
        %3133 = vmatpush1.msra.mxu0 %v3091
        %3134 = vmatprep.subr.mxu0 0.0
        %3135 = vmatpush1.msra.mxu0 %v3092
        %3136 = vmatprep.subr.mxu0 0.0
        %3137 = vmatpush1.msra.mxu0 %v3093
        %3138 = vmatprep.subr.mxu0 0.0
        %3139 = vmatpush1.msra.mxu0 %v3094
        %3140 = vmatprep.subr.mxu0 0.0
        %3141 = vmatpush1.msra.mxu0 %v3095
        %3142 = vmatprep.subr.mxu0 0.0
        %3143 = vmatpush1.msra.mxu0 %v3096
        %3144 = vmatprep.subr.mxu0 0.0
        %3145 = vmatpush1.msra.mxu0 %v3097
        %3146 = vmatprep.subr.mxu0 0.0
        %3147 = vmatpush1.msra.mxu0 %v3098
        %3148 = vmatprep.subr.mxu0 0.0
        %3149 = vmatpush1.msra.mxu0 %v3099
        %3150 = vmatprep.subr.mxu0 0.0
        %3151 = vmatpush1.msra.mxu0 %v3100
        %3152 = vmatprep.subr.mxu0 0.0
        %3153 = vmatpush1.msra.mxu0 %v3101
        %3154 = vmatprep.subr.mxu0 0.0
        %3155 = vmatpush1.msra.mxu0 %v3102
        %3156 = vmatprep.subr.mxu0 0.0
        %3157 = vmatpush1.msra.mxu0 %v3103
        %3158 = vmatprep.subr.mxu0 0.0
        %3159 = vmatpush1.msra.mxu0 0.0
        %3160 = vmatprep.subr.mxu0 0.0
        %3161 = vmatpush1.msra.mxu0 0.0
        %3162 = vmatprep.subr.mxu0 0.0
        %3163 = vmatpush1.msra.mxu0 0.0
        %3164 = vmatprep.subr.mxu0 0.0
        %3165 = vmatpush1.msra.mxu0 0.0
        %3166 = vmatprep.subr.mxu0 0.0
        %3167 = vmatpush1.msra.mxu0 0.0
        %3168 = vmatprep.subr.mxu0 0.0
        %3169 = vmatpush1.msra.mxu0 0.0
        %3170 = vmatprep.subr.mxu0 0.0
        %3171 = vmatpush1.msra.mxu0 0.0
        %3172 = vmatprep.subr.mxu0 0.0
        %3173 = vmatpush1.msra.mxu0 0.0
        %3174 = vmatprep.mubr.f32.mxu0 %v2447
        %3175 = vmatmul.mubr.f32.gmra.mrb[0].mxu0 %v2378
        %v3176 = vpop.f32.mrb[0].mxu0
        %v3177 = vadd.f32 0.0, %v3176
        %v3178 = vpop.f32.mrb[0].mxu0
        %3179 = vmatprep.mubr.f32.mxu0 %v2450
        %3180 = vmatmul.mubr.f32.gmra.mrb[0].mxu0 %v2379
        %v3181 = vpop.f32.mrb[0].mxu0
        %v3182 = vadd.f32 0.0, %v3181
        %v3183 = vpop.f32.mrb[0].mxu0
        %3184 = vmatprep.mubr.f32.mxu0 %v2453
        %3185 = vmatmul.mubr.f32.gmra.mrb[0].mxu0 %v2380
        %v3186 = vpop.f32.mrb[0].mxu0
        %v3187 = vadd.f32 0.0, %v3186
        %v3188 = vpop.f32.mrb[0].mxu0
        %3189 = vmatprep.mubr.f32.mxu0 %v2456
        %3190 = vmatmul.mubr.f32.gmra.mrb[0].mxu0 %v2381
        %v3191 = vpop.f32.mrb[0].mxu0
        %v3192 = vadd.f32 0.0, %v3191
        %v3193 = vpop.f32.mrb[0].mxu0
        %3194 = vmatprep.mubr.f32.mxu0 %v2459
        %3195 = vmatmul.mubr.f32.gmra.mrb[0].mxu0 %v2382
        %v3196 = vpop.f32.mrb[0].mxu0
        %v3197 = vadd.f32 0.0, %v3196
        %v3198 = vpop.f32.mrb[0].mxu0
        %3199 = vmatprep.mubr.f32.mxu0 %v2462
        %3200 = vmatmul.mubr.f32.gmra.mrb[0].mxu0 %v2383
        %v3201 = vpop.f32.mrb[0].mxu0
        %v3202 = vadd.f32 0.0, %v3201
        %v3203 = vpop.f32.mrb[0].mxu0
        %3204 = vmatprep.mubr.f32.mxu0 %v2465
        %3205 = vmatmul.mubr.f32.gmra.mrb[0].mxu0 %v2384
        %v3206 = vpop.f32.mrb[0].mxu0
        %v3207 = vadd.f32 0.0, %v3206
        %v3208 = vpop.f32.mrb[0].mxu0
        %3209 = vmatprep.mubr.f32.mxu0 %v2468
        %3210 = vmatmul.mubr.f32.gmra.mrb[0].mxu0 %v2385
        %v3211 = vpop.f32.mrb[0].mxu0
        %v3212 = vadd.f32 0.0, %v3211
        %v3213 = vpop.f32.mrb[0].mxu0
        %3214 = vmatprep.mubr.f32.mxu0 %v2471
        %3215 = vmatmul.mubr.f32.gmra.mrb[0].mxu0 %v2386
        %v3216 = vpop.f32.mrb[0].mxu0
        %v3217 = vadd.f32 0.0, %v3216
        %v3218 = vpop.f32.mrb[0].mxu0
        %3219 = vmatprep.mubr.f32.mxu0 %v2474
        %3220 = vmatmul.mubr.f32.gmra.mrb[0].mxu0 %v2387
        %v3221 = vpop.f32.mrb[0].mxu0
        %v3222 = vadd.f32 0.0, %v3221
        %v3223 = vpop.f32.mrb[0].mxu0
        %3224 = vmatprep.mubr.f32.mxu0 %v2477
        %3225 = vmatmul.mubr.f32.gmra.mrb[0].mxu0 %v2388
        %v3226 = vpop.f32.mrb[0].mxu0
        %v3227 = vadd.f32 0.0, %v3226
        %v3228 = vpop.f32.mrb[0].mxu0
        %3229 = vmatprep.mubr.f32.mxu0 %v2480
        %3230 = vmatmul.mubr.f32.gmra.mrb[0].mxu0 %v2389
        %v3231 = vpop.f32.mrb[0].mxu0
        %v3232 = vadd.f32 0.0, %v3231
        %v3233 = vpop.f32.mrb[0].mxu0
        %3234 = vmatprep.mubr.f32.mxu0 %v2483
        %3235 = vmatmul.mubr.f32.gmra.mrb[0].mxu0 %v2390
        %v3236 = vpop.f32.mrb[0].mxu0
        %v3237 = vadd.f32 0.0, %v3236
        %v3238 = vpop.f32.mrb[0].mxu0
        %3239 = vmatprep.mubr.f32.mxu0 %v2486
        %3240 = vmatmul.mubr.f32.gmra.mrb[0].mxu0 %v2391
        %v3241 = vpop.f32.mrb[0].mxu0
        %v3242 = vadd.f32 0.0, %v3241
        %v3243 = vpop.f32.mrb[0].mxu0
        %3244 = vmatprep.mubr.f32.mxu0 %v2489
        %3245 = vmatmul.mubr.f32.gmra.mrb[0].mxu0 %v2392
        %v3246 = vpop.f32.mrb[0].mxu0
        %v3247 = vadd.f32 0.0, %v3246
        %v3248 = vpop.f32.mrb[0].mxu0
        %3249 = vmatprep.mubr.f32.mxu0 %v2492
        %3250 = vmatmul.mubr.f32.gmra.mrb[0].mxu0 %v2393
        %v3251 = vpop.f32.mrb[0].mxu0
        %v3252 = vadd.f32 0.0, %v3251
        %v3253 = vpop.f32.mrb[0].mxu0
        %3254 = vmatprep.mubr.f32.mxu0 %v2495
        %3255 = vmatmul.mubr.f32.gmra.mrb[0].mxu0 %v2394
        %v3256 = vpop.f32.mrb[0].mxu0
        %v3257 = vadd.f32 0.0, %v3256
        %v3258 = vpop.f32.mrb[0].mxu0
        %3259 = vmatprep.mubr.f32.mxu0 %v2498
        %3260 = vmatmul.mubr.f32.gmra.mrb[0].mxu0 %v2395
        %v3261 = vpop.f32.mrb[0].mxu0
        %v3262 = vadd.f32 0.0, %v3261
        %v3263 = vpop.f32.mrb[0].mxu0
        %3264 = vmatprep.mubr.f32.mxu0 %v2501
        %3265 = vmatmul.mubr.f32.gmra.mrb[0].mxu0 %v2396
        %v3266 = vpop.f32.mrb[0].mxu0
        %v3267 = vadd.f32 0.0, %v3266
        %v3268 = vpop.f32.mrb[0].mxu0
        %3269 = vmatprep.mubr.f32.mxu0 %v2504
        %3270 = vmatmul.mubr.f32.gmra.mrb[0].mxu0 %v2397
        %v3271 = vpop.f32.mrb[0].mxu0
        %v3272 = vadd.f32 0.0, %v3271
        %v3273 = vpop.f32.mrb[0].mxu0
        %3274 = vmatprep.mubr.f32.mxu0 %v2507
        %3275 = vmatmul.mubr.f32.gmra.mrb[0].mxu0 %v2398
        %v3276 = vpop.f32.mrb[0].mxu0
        %v3277 = vadd.f32 0.0, %v3276
        %v3278 = vpop.f32.mrb[0].mxu0
        %3279 = vmatprep.mubr.f32.mxu0 %v2510
        %3280 = vmatmul.mubr.f32.gmra.mrb[0].mxu0 %v2399
        %v3281 = vpop.f32.mrb[0].mxu0
        %v3282 = vadd.f32 0.0, %v3281
        %v3283 = vpop.f32.mrb[0].mxu0
        %3284 = vmatprep.mubr.f32.mxu0 %v2513
        %3285 = vmatmul.mubr.f32.gmra.mrb[0].mxu0 %v2400
        %v3286 = vpop.f32.mrb[0].mxu0
        %v3287 = vadd.f32 0.0, %v3286
        %v3288 = vpop.f32.mrb[0].mxu0
        %3289 = vmatprep.mubr.f32.mxu0 %v2516
        %3290 = vmatmul.mubr.f32.gmra.mrb[0].mxu0 %v2401
        %v3291 = vpop.f32.mrb[0].mxu0
        %v3292 = vadd.f32 0.0, %v3291
        %v3293 = vpop.f32.mrb[0].mxu0
        %3294 = vmatprep.mubr.f32.mxu0 %v2519
        %3295 = vmatmul.mubr.f32.gmra.mrb[0].mxu0 %v2402
        %v3296 = vpop.f32.mrb[0].mxu0
        %v3297 = vadd.f32 0.0, %v3296
        %v3298 = vpop.f32.mrb[0].mxu0
        %3299 = vmatprep.mubr.f32.mxu0 %v2522
        %3300 = vmatmul.mubr.f32.gmra.mrb[0].mxu0 %v2403
        %v3301 = vpop.f32.mrb[0].mxu0
        %v3302 = vadd.f32 0.0, %v3301
        %v3303 = vpop.f32.mrb[0].mxu0
        %3304 = vmatprep.mubr.f32.mxu0 %v2525
        %3305 = vmatmul.mubr.f32.gmra.mrb[0].mxu0 %v2404
        %v3306 = vpop.f32.mrb[0].mxu0
        %v3307 = vadd.f32 0.0, %v3306
        %v3308 = vpop.f32.mrb[0].mxu0
        %3309 = vmatprep.mubr.f32.mxu0 %v2528
        %3310 = vmatmul.mubr.f32.gmra.mrb[0].mxu0 %v2405
        %v3311 = vpop.f32.mrb[0].mxu0
        %v3312 = vadd.f32 0.0, %v3311
        %v3313 = vpop.f32.mrb[0].mxu0
        %3314 = vmatprep.mubr.f32.mxu0 %v2817
        %3315 = vmatmul.mubr.f32.gmra.mrb[0].mxu0 %v2406
        %v3316 = vpop.f32.mrb[0].mxu0
        %v3317 = vadd.f32 0.0, %v3316
        %v3318 = vpop.f32.mrb[0].mxu0
        %3319 = vmatprep.mubr.f32.mxu0 %v2820
        %3320 = vmatmul.mubr.f32.gmra.mrb[0].mxu0 %v2407
        %v3321 = vpop.f32.mrb[0].mxu0
        %v3322 = vadd.f32 0.0, %v3321
        %v3323 = vpop.f32.mrb[0].mxu0
        %3324 = vmatprep.mubr.f32.mxu0 %v3105
        %3325 = vmatmul.mubr.f32.gmra.mrb[0].mxu0 %v2408
        %v3326 = vpop.f32.mrb[0].mxu0
        %v3327 = vadd.f32 0.0, %v3326
        %v3328 = vpop.f32.mrb[0].mxu0
        %3329 = vmatprep.mubr.f32.mxu0 %v3108
        %3330 = vmatmul.mubr.f32.gmra.mrb[0].mxu0 %v2409
        %v3331 = vpop.f32.mrb[0].mxu0
        %v3332 = vadd.f32 0.0, %v3331
        %v3333 = vpop.f32.mrb[0].mxu0
        %3334 = vdwg.mxu0
        %v3335 = vadd.f32 %v3047, %v3177
        %v3336 = vadd.f32 %v3048, %v3182
        %v3337 = vadd.f32 %v3049, %v3187
        %v3338 = vadd.f32 %v3050, %v3192
        %v3339 = vadd.f32 %v3051, %v3197
        %v3340 = vadd.f32 %v3052, %v3202
        %v3341 = vadd.f32 %v3053, %v3207
        %v3342 = vadd.f32 %v3054, %v3212
        %v3343 = vadd.f32 %v3055, %v3217
        %v3344 = vadd.f32 %v3056, %v3222
        %v3345 = vadd.f32 %v3057, %v3227
        %v3346 = vadd.f32 %v3058, %v3232
        %v3347 = vadd.f32 %v3059, %v3237
        %v3348 = vadd.f32 %v3060, %v3242
        %v3349 = vadd.f32 %v3061, %v3247
        %v3350 = vadd.f32 %v3062, %v3252
        %v3351 = vadd.f32 %v3063, %v3257
        %v3352 = vadd.f32 %v3064, %v3262
        %v3353 = vadd.f32 %v3065, %v3267
        %v3354 = vadd.f32 %v3066, %v3272
        %v3355 = vadd.f32 %v3067, %v3277
        %v3356 = vadd.f32 %v3068, %v3282
        %v3357 = vadd.f32 %v3069, %v3287
        %v3358 = vadd.f32 %v3070, %v3292
        %v3359 = vadd.f32 %v3071, %v3297
        %v3360 = vadd.f32 %v3072, %v3302
        %v3361 = vadd.f32 %v3073, %v3307
        %v3362 = vadd.f32 %v3074, %v3312
        %v3363 = vadd.f32 %v3075, %v3317
        %v3364 = vadd.f32 %v3076, %v3322
        %v3365 = vadd.f32 %v3077, %v3327
        %v3366 = vadd.f32 %v3078, %v3332
        %v3367 = vld [vmem:[%s6] sm:$0x1]
        %v3368 = vld [vmem:[%s7] sm:$0x1]
        %v3369 = vld [vmem:[%s8] sm:$0xff]
        %v3370 = vld [vmem:[%s8 + $0x8] sm:$0xff]
        %v3371 = vld [vmem:[%s8 + $0x10] sm:$0xff]
        %v3372 = vld [vmem:[%s8 + $0x18] sm:$0xff]
        %v3373 = vld [vmem:[%s8 + $0x20] sm:$0xff]
        %v3374 = vld [vmem:[%s8 + $0x28] sm:$0xff]
        %v3375 = vld [vmem:[%s8 + $0x30] sm:$0xff]
        %v3376 = vld [vmem:[%s8 + $0x38] sm:$0xff]
        %v3377 = vld [vmem:[%s8 + $0x40] sm:$0xff]
        %v3378 = vld [vmem:[%s8 + $0x48] sm:$0xff]
        %v3379 = vld [vmem:[%s8 + $0x50] sm:$0xff]
        %v3380 = vld [vmem:[%s8 + $0x58] sm:$0xff]
        %v3381 = vld [vmem:[%s8 + $0x60] sm:$0xff]
        %v3382 = vld [vmem:[%s8 + $0x68] sm:$0xff]
        %v3383 = vld [vmem:[%s8 + $0x70] sm:$0xff]
        %v3384 = vld [vmem:[%s8 + $0x78] sm:$0xff]
        %v3385 = vld [vmem:[%s9] sm:$0xff]
        %v3386 = vld [vmem:[%s9 + $0x8] sm:$0xff]
        %v3387 = vld [vmem:[%s9 + $0x10] sm:$0xff]
        %v3388 = vld [vmem:[%s9 + $0x18] sm:$0xff]
        %v3389 = vadd.f32 %v3335, %v3336
        %v3390 = vadd.f32 %v3389, %v3337
        %v3391 = vadd.f32 %v3390, %v3338
        %v3392 = vadd.f32 %v3391, %v3339
        %v3393 = vadd.f32 %v3392, %v3340
        %v3394 = vadd.f32 %v3393, %v3341
        %v3395 = vadd.f32 %v3394, %v3342
        %v3396 = vadd.f32 %v3395, %v3343
        %v3397 = vadd.f32 %v3396, %v3344
        %v3398 = vadd.f32 %v3397, %v3345
        %v3399 = vadd.f32 %v3398, %v3346
        %v3400 = vadd.f32 %v3399, %v3347
        %v3401 = vadd.f32 %v3400, %v3348
        %v3402 = vadd.f32 %v3401, %v3349
        %v3403 = vadd.f32 %v3402, %v3350
        %v3404 = vadd.f32 %v3403, %v3351
        %v3405 = vadd.f32 %v3404, %v3352
        %v3406 = vadd.f32 %v3405, %v3353
        %v3407 = vadd.f32 %v3406, %v3354
        %v3408 = vadd.f32 %v3407, %v3355
        %v3409 = vadd.f32 %v3408, %v3356
        %v3410 = vadd.f32 %v3409, %v3357
        %v3411 = vadd.f32 %v3410, %v3358
        %v3412 = vadd.f32 %v3411, %v3359
        %v3413 = vadd.f32 %v3412, %v3360
        %v3414 = vadd.f32 %v3413, %v3361
        %v3415 = vadd.f32 %v3414, %v3362
        %v3416 = vadd.f32 %v3415, %v3363
        %v3417 = vadd.f32 %v3416, %v3364
        %v3418 = vadd.f32 %v3417, %v3365
        %v3419 = vadd.f32 %v3418, %v3366
        %v3420 = vrot.slane %v3419, 4
        %v3421 = vadd.f32 %v3419, %v3420
        %v3422 = vrot.slane %v3421, 2
        %v3423 = vadd.f32 %v3421, %v3422
        %v3424 = vrot.slane %v3423, 1
        %v3425 = vadd.f32 %v3423, %v3424
        %v3426 = vmul.f32 %v3335, %v3335
        %v3427 = vmul.f32 %v3336, %v3336
        %v3428 = vmul.f32 %v3337, %v3337
        %v3429 = vmul.f32 %v3338, %v3338
        %v3430 = vmul.f32 %v3339, %v3339
        %v3431 = vmul.f32 %v3340, %v3340
        %v3432 = vmul.f32 %v3341, %v3341
        %v3433 = vmul.f32 %v3342, %v3342
        %v3434 = vmul.f32 %v3343, %v3343
        %v3435 = vmul.f32 %v3344, %v3344
        %v3436 = vmul.f32 %v3345, %v3345
        %v3437 = vmul.f32 %v3346, %v3346
        %v3438 = vmul.f32 %v3347, %v3347
        %v3439 = vmul.f32 %v3348, %v3348
        %v3440 = vmul.f32 %v3349, %v3349
        %v3441 = vmul.f32 %v3350, %v3350
        %v3442 = vmul.f32 %v3351, %v3351
        %v3443 = vmul.f32 %v3352, %v3352
        %v3444 = vmul.f32 %v3353, %v3353
        %v3445 = vmul.f32 %v3354, %v3354
        %v3446 = vmul.f32 %v3355, %v3355
        %v3447 = vmul.f32 %v3356, %v3356
        %v3448 = vmul.f32 %v3357, %v3357
        %v3449 = vmul.f32 %v3358, %v3358
        %v3450 = vmul.f32 %v3359, %v3359
        %v3451 = vmul.f32 %v3360, %v3360
        %v3452 = vmul.f32 %v3361, %v3361
        %v3453 = vmul.f32 %v3362, %v3362
        %v3454 = vmul.f32 %v3363, %v3363
        %v3455 = vmul.f32 %v3364, %v3364
        %v3456 = vmul.f32 %v3365, %v3365
        %v3457 = vmul.f32 %v3366, %v3366
        %v3458 = vadd.f32 %v3426, %v3427
        %v3459 = vadd.f32 %v3458, %v3428
        %v3460 = vadd.f32 %v3459, %v3429
        %v3461 = vadd.f32 %v3460, %v3430
        %v3462 = vadd.f32 %v3461, %v3431
        %v3463 = vadd.f32 %v3462, %v3432
        %v3464 = vadd.f32 %v3463, %v3433
        %v3465 = vadd.f32 %v3464, %v3434
        %v3466 = vadd.f32 %v3465, %v3435
        %v3467 = vadd.f32 %v3466, %v3436
        %v3468 = vadd.f32 %v3467, %v3437
        %v3469 = vadd.f32 %v3468, %v3438
        %v3470 = vadd.f32 %v3469, %v3439
        %v3471 = vadd.f32 %v3470, %v3440
        %v3472 = vadd.f32 %v3471, %v3441
        %v3473 = vadd.f32 %v3472, %v3442
        %v3474 = vadd.f32 %v3473, %v3443
        %v3475 = vadd.f32 %v3474, %v3444
        %v3476 = vadd.f32 %v3475, %v3445
        %v3477 = vadd.f32 %v3476, %v3446
        %v3478 = vadd.f32 %v3477, %v3447
        %v3479 = vadd.f32 %v3478, %v3448
        %v3480 = vadd.f32 %v3479, %v3449
        %v3481 = vadd.f32 %v3480, %v3450
        %v3482 = vadd.f32 %v3481, %v3451
        %v3483 = vadd.f32 %v3482, %v3452
        %v3484 = vadd.f32 %v3483, %v3453
        %v3485 = vadd.f32 %v3484, %v3454
        %v3486 = vadd.f32 %v3485, %v3455
        %v3487 = vadd.f32 %v3486, %v3456
        %v3488 = vadd.f32 %v3487, %v3457
        %v3489 = vrot.slane %v3488, 4
        %v3490 = vadd.f32 %v3488, %v3489
        %v3491 = vrot.slane %v3490, 2
        %v3492 = vadd.f32 %v3490, %v3491
        %v3493 = vrot.slane %v3492, 1
        %v3494 = vadd.f32 %v3492, %v3493
        %v3495 = vsel %vm1205, %v3425, %v3494
        %3496 = vmatprep.subr.mxu0 0.0
        %3497 = vmatpush1.msra.mxu0 %v3369
        %3498 = vmatprep.subr.mxu0 0.0
        %3499 = vmatpush1.msra.mxu0 %v3370
        %3500 = vmatprep.subr.mxu0 0.0
        %3501 = vmatpush1.msra.mxu0 %v3371
        %3502 = vmatprep.subr.mxu0 0.0
        %3503 = vmatpush1.msra.mxu0 %v3372
        %3504 = vmatprep.subr.mxu0 0.0
        %3505 = vmatpush1.msra.mxu0 %v3373
        %3506 = vmatprep.subr.mxu0 0.0
        %3507 = vmatpush1.msra.mxu0 %v3374
        %3508 = vmatprep.subr.mxu0 0.0
        %3509 = vmatpush1.msra.mxu0 %v3375
        %3510 = vmatprep.subr.mxu0 0.0
        %3511 = vmatpush1.msra.mxu0 %v3376
        %3512 = vmatprep.subr.mxu0 0.0
        %3513 = vmatpush1.msra.mxu0 %v3377
        %3514 = vmatprep.subr.mxu0 0.0
        %3515 = vmatpush1.msra.mxu0 %v3378
        %3516 = vmatprep.subr.mxu0 0.0
        %3517 = vmatpush1.msra.mxu0 %v3379
        %3518 = vmatprep.subr.mxu0 0.0
        %3519 = vmatpush1.msra.mxu0 %v3380
        %3520 = vmatprep.subr.mxu0 0.0
        %3521 = vmatpush1.msra.mxu0 %v3381
        %3522 = vmatprep.subr.mxu0 0.0
        %3523 = vmatpush1.msra.mxu0 %v3382
        %3524 = vmatprep.subr.mxu0 0.0
        %3525 = vmatpush1.msra.mxu0 %v3383
        %3526 = vmatprep.subr.mxu0 0.0
        %3527 = vmatpush1.msra.mxu0 %v3384
        %3528 = vmatprep.subr.mxu0 0.0
        %3529 = vmatpush1.msra.mxu0 0.0
        %3530 = vmatprep.subr.mxu0 0.0
        %3531 = vmatpush1.msra.mxu0 0.0
        %3532 = vmatprep.subr.mxu0 0.0
        %3533 = vmatpush1.msra.mxu0 0.0
        %3534 = vmatprep.subr.mxu0 0.0
        %3535 = vmatpush1.msra.mxu0 0.0
        %3536 = vmatprep.subr.mxu0 0.0
        %3537 = vmatpush1.msra.mxu0 0.0
        %3538 = vmatprep.subr.mxu0 0.0
        %3539 = vmatpush1.msra.mxu0 0.0
        %3540 = vmatprep.subr.mxu0 0.0
        %3541 = vmatpush1.msra.mxu0 0.0
        %3542 = vmatprep.subr.mxu0 0.0
        %3543 = vmatpush1.msra.mxu0 0.0
        %3544 = vmatprep.subr.mxu0 0.0
        %3545 = vmatpush1.msra.mxu0 0.0
        %3546 = vmatprep.subr.mxu0 0.0
        %3547 = vmatpush1.msra.mxu0 0.0
        %3548 = vmatprep.subr.mxu0 0.0
        %3549 = vmatpush1.msra.mxu0 0.0
        %3550 = vmatprep.subr.mxu0 0.0
        %3551 = vmatpush1.msra.mxu0 0.0
        %3552 = vmatprep.subr.mxu0 0.0
        %3553 = vmatpush1.msra.mxu0 0.0
        %3554 = vmatprep.subr.mxu0 0.0
        %3555 = vmatpush1.msra.mxu0 0.0
        %3556 = vmatprep.subr.mxu0 0.0
        %3557 = vmatpush1.msra.mxu0 0.0
        %3558 = vmatprep.subr.mxu0 0.0
        %3559 = vmatpush1.msra.mxu0 0.0
        %3560 = vmatprep.mubr.f32.mxu0 0.0
        %3561 = vmatmul.mubr.f32.gmra.mrb[0].mxu0 %v3495
        %v3562 = vpop.f32.mrb[0].mxu0
        %v3563 = vadd.f32 0.0, %v3562
        %v3564 = vpop.f32.mrb[0].mxu0
        %3565 = vdwg.mxu0
        %v3566 = vmul.f32 %v3563, 0.0009765625
        %v3567 = vmul.f32 %v3566, %v3566
        %v3569 = vrot.slane %v3567, 7
        %v3571 = vsub.f32 %v3566, %v3569
        %v3572 = vmax.f32 %v3571, 0.0
        %v3573 = vadd.f32 %v3572, 1e-05
        %v3574 = vrsqrt.pop %v3573
        %v3575 = vsel %vm1205, %v3566, %v3574
        %v3577 = vsel %vm1290, %v3575, 0
        %3579 = vmatprep.subr.mxu0 0.0
        %3580 = vmatpush1.msra.mxu0 %v3385
        %3581 = vmatprep.subr.mxu0 0.0
        %3582 = vmatpush1.msra.mxu0 %v3386
        %3583 = vmatprep.subr.mxu0 0.0
        %3584 = vmatpush1.msra.mxu0 %v3387
        %3585 = vmatprep.subr.mxu0 0.0
        %3586 = vmatpush1.msra.mxu0 %v3388
        %3587 = vmatprep.subr.mxu0 0.0
        %3588 = vmatpush1.msra.mxu0 0.0
        %3589 = vmatprep.subr.mxu0 0.0
        %3590 = vmatpush1.msra.mxu0 0.0
        %3591 = vmatprep.subr.mxu0 0.0
        %3592 = vmatpush1.msra.mxu0 0.0
        %3593 = vmatprep.subr.mxu0 0.0
        %3594 = vmatpush1.msra.mxu0 0.0
        %3595 = vmatprep.subr.mxu0 0.0
        %3596 = vmatpush1.msra.mxu0 0.0
        %3597 = vmatprep.subr.mxu0 0.0
        %3598 = vmatpush1.msra.mxu0 0.0
        %3599 = vmatprep.subr.mxu0 0.0
        %3600 = vmatpush1.msra.mxu0 0.0
        %3601 = vmatprep.subr.mxu0 0.0
        %3602 = vmatpush1.msra.mxu0 0.0
        %3603 = vmatprep.subr.mxu0 0.0
        %3604 = vmatpush1.msra.mxu0 0.0
        %3605 = vmatprep.subr.mxu0 0.0
        %3606 = vmatpush1.msra.mxu0 0.0
        %3607 = vmatprep.subr.mxu0 0.0
        %3608 = vmatpush1.msra.mxu0 0.0
        %3609 = vmatprep.subr.mxu0 0.0
        %3610 = vmatpush1.msra.mxu0 0.0
        %3611 = vmatprep.subr.mxu0 0.0
        %3612 = vmatpush1.msra.mxu0 0.0
        %3613 = vmatprep.subr.mxu0 0.0
        %3614 = vmatpush1.msra.mxu0 0.0
        %3615 = vmatprep.subr.mxu0 0.0
        %3616 = vmatpush1.msra.mxu0 0.0
        %3617 = vmatprep.subr.mxu0 0.0
        %3618 = vmatpush1.msra.mxu0 0.0
        %3619 = vmatprep.subr.mxu0 0.0
        %3620 = vmatpush1.msra.mxu0 0.0
        %3621 = vmatprep.subr.mxu0 0.0
        %3622 = vmatpush1.msra.mxu0 0.0
        %3623 = vmatprep.subr.mxu0 0.0
        %3624 = vmatpush1.msra.mxu0 0.0
        %3625 = vmatprep.subr.mxu0 0.0
        %3626 = vmatpush1.msra.mxu0 0.0
        %3627 = vmatprep.subr.mxu0 0.0
        %3628 = vmatpush1.msra.mxu0 0.0
        %3629 = vmatprep.subr.mxu0 0.0
        %3630 = vmatpush1.msra.mxu0 0.0
        %3631 = vmatprep.subr.mxu0 0.0
        %3632 = vmatpush1.msra.mxu0 0.0
        %3633 = vmatprep.subr.mxu0 0.0
        %3634 = vmatpush1.msra.mxu0 0.0
        %3635 = vmatprep.subr.mxu0 0.0
        %3636 = vmatpush1.msra.mxu0 0.0
        %3637 = vmatprep.subr.mxu0 0.0
        %3638 = vmatpush1.msra.mxu0 0.0
        %3639 = vmatprep.subr.mxu0 0.0
        %3640 = vmatpush1.msra.mxu0 0.0
        %3641 = vmatprep.subr.mxu0 0.0
        %3642 = vmatpush1.msra.mxu0 0.0
        %3643 = vmatprep.mubr.f32.mxu0 0.0
        %3644 = vmatmul.mubr.f32.gmra.mrb[0].mxu0 %v3577
        %v3645 = vpop.f32.mrb[0].mxu0
        %v3646 = vadd.f32 0.0, %v3645
        %v3647 = vpop.f32.mrb[0].mxu0
        %3648 = vdwg.mxu0
        %v3650 = vlaneseq
        %v3651 = vshrl.u32 %v3650, 7
        %v3652 = vsub.s32 0, %v3651
        %v3653 = vrot.slane %v3367, %v3652
        %v3655 = vmul.f32 %v3646, %v3653
        %v3657 = vrot.slane %v3655, 1
        %v3659 = vmul.f32 %v3646, %v3657
        %v3660 = vsub.f32 %v3368, %v3659
        %v3661 = vlaneseq
        %v3662 = vshrl.u32 %v3661, 7
        %v3663 = vsub.s32 1, %v3662
        %v3664 = vrot.slane %v3655, %v3663
        %v3665 = vmul.f32 %v3335, %v3664
        %v3666 = vmul.f32 %v3336, %v3664
        %v3667 = vmul.f32 %v3337, %v3664
        %v3668 = vmul.f32 %v3338, %v3664
        %v3669 = vmul.f32 %v3339, %v3664
        %v3670 = vmul.f32 %v3340, %v3664
        %v3671 = vmul.f32 %v3341, %v3664
        %v3672 = vmul.f32 %v3342, %v3664
        %v3673 = vmul.f32 %v3343, %v3664
        %v3674 = vmul.f32 %v3344, %v3664
        %v3675 = vmul.f32 %v3345, %v3664
        %v3676 = vmul.f32 %v3346, %v3664
        %v3677 = vmul.f32 %v3347, %v3664
        %v3678 = vmul.f32 %v3348, %v3664
        %v3679 = vmul.f32 %v3349, %v3664
        %v3680 = vmul.f32 %v3350, %v3664
        %v3681 = vmul.f32 %v3351, %v3664
        %v3682 = vmul.f32 %v3352, %v3664
        %v3683 = vmul.f32 %v3353, %v3664
        %v3684 = vmul.f32 %v3354, %v3664
        %v3685 = vmul.f32 %v3355, %v3664
        %v3686 = vmul.f32 %v3356, %v3664
        %v3687 = vmul.f32 %v3357, %v3664
        %v3688 = vmul.f32 %v3358, %v3664
        %v3689 = vmul.f32 %v3359, %v3664
        %v3690 = vmul.f32 %v3360, %v3664
        %v3691 = vmul.f32 %v3361, %v3664
        %v3692 = vmul.f32 %v3362, %v3664
        %v3693 = vmul.f32 %v3363, %v3664
        %v3694 = vmul.f32 %v3364, %v3664
        %v3695 = vmul.f32 %v3365, %v3664
        %v3696 = vmul.f32 %v3366, %v3664
        %v3698 = vlaneseq
        %v3699 = vshrl.u32 %v3698, 7
        %v3700 = vsub.s32 0, %v3699
        %v3701 = vrot.slane %v3660, %v3700
        %v3703 = vadd.f32 %v3665, %v3701
        %v3704 = vadd.f32 %v3666, %v3701
        %v3705 = vadd.f32 %v3667, %v3701
        %v3706 = vadd.f32 %v3668, %v3701
        %v3707 = vadd.f32 %v3669, %v3701
        %v3708 = vadd.f32 %v3670, %v3701
        %v3709 = vadd.f32 %v3671, %v3701
        %v3710 = vadd.f32 %v3672, %v3701
        %v3711 = vadd.f32 %v3673, %v3701
        %v3712 = vadd.f32 %v3674, %v3701
        %v3713 = vadd.f32 %v3675, %v3701
        %v3714 = vadd.f32 %v3676, %v3701
        %v3715 = vadd.f32 %v3677, %v3701
        %v3716 = vadd.f32 %v3678, %v3701
        %v3717 = vadd.f32 %v3679, %v3701
        %v3718 = vadd.f32 %v3680, %v3701
        %v3719 = vadd.f32 %v3681, %v3701
        %v3720 = vadd.f32 %v3682, %v3701
        %v3721 = vadd.f32 %v3683, %v3701
        %v3722 = vadd.f32 %v3684, %v3701
        %v3723 = vadd.f32 %v3685, %v3701
        %v3724 = vadd.f32 %v3686, %v3701
        %v3725 = vadd.f32 %v3687, %v3701
        %v3726 = vadd.f32 %v3688, %v3701
        %v3727 = vadd.f32 %v3689, %v3701
        %v3728 = vadd.f32 %v3690, %v3701
        %v3729 = vadd.f32 %v3691, %v3701
        %v3730 = vadd.f32 %v3692, %v3701
        %v3731 = vadd.f32 %v3693, %v3701
        %v3732 = vadd.f32 %v3694, %v3701
        %v3733 = vadd.f32 %v3695, %v3701
        %v3734 = vadd.f32 %v3696, %v3701
        %v3735 = vxor.u32 %v3703, 2147483648
        %v3736 = vxor.u32 %v3704, 2147483648
        %v3737 = vxor.u32 %v3705, 2147483648
        %v3738 = vxor.u32 %v3706, 2147483648
        %v3739 = vxor.u32 %v3707, 2147483648
        %v3740 = vxor.u32 %v3708, 2147483648
        %v3741 = vxor.u32 %v3709, 2147483648
        %v3742 = vxor.u32 %v3710, 2147483648
        %v3743 = vxor.u32 %v3711, 2147483648
        %v3744 = vxor.u32 %v3712, 2147483648
        %v3745 = vxor.u32 %v3713, 2147483648
        %v3746 = vxor.u32 %v3714, 2147483648
        %v3747 = vxor.u32 %v3715, 2147483648
        %v3748 = vxor.u32 %v3716, 2147483648
        %v3749 = vxor.u32 %v3717, 2147483648
        %v3750 = vxor.u32 %v3718, 2147483648
        %v3751 = vxor.u32 %v3719, 2147483648
        %v3752 = vxor.u32 %v3720, 2147483648
        %v3753 = vxor.u32 %v3721, 2147483648
        %v3754 = vxor.u32 %v3722, 2147483648
        %v3755 = vxor.u32 %v3723, 2147483648
        %v3756 = vxor.u32 %v3724, 2147483648
        %v3757 = vxor.u32 %v3725, 2147483648
        %v3758 = vxor.u32 %v3726, 2147483648
        %v3759 = vxor.u32 %v3727, 2147483648
        %v3760 = vxor.u32 %v3728, 2147483648
        %v3761 = vxor.u32 %v3729, 2147483648
        %v3762 = vxor.u32 %v3730, 2147483648
        %v3763 = vxor.u32 %v3731, 2147483648
        %v3764 = vxor.u32 %v3732, 2147483648
        %v3765 = vxor.u32 %v3733, 2147483648
        %v3766 = vxor.u32 %v3734, 2147483648
        %v3767 = vmul.f32 %v3735, 1.442695
        %v3768 = vpow.pop %v3767
        %v3769 = vmul.f32 %v3736, 1.442695
        %v3770 = vpow.pop %v3769
        %v3771 = vmul.f32 %v3737, 1.442695
        %v3772 = vpow.pop %v3771
        %v3773 = vmul.f32 %v3738, 1.442695
        %v3774 = vpow.pop %v3773
        %v3775 = vmul.f32 %v3739, 1.442695
        %v3776 = vpow.pop %v3775
        %v3777 = vmul.f32 %v3740, 1.442695
        %v3778 = vpow.pop %v3777
        %v3779 = vmul.f32 %v3741, 1.442695
        %v3780 = vpow.pop %v3779
        %v3781 = vmul.f32 %v3742, 1.442695
        %v3782 = vpow.pop %v3781
        %v3783 = vmul.f32 %v3743, 1.442695
        %v3784 = vpow.pop %v3783
        %v3785 = vmul.f32 %v3744, 1.442695
        %v3786 = vpow.pop %v3785
        %v3787 = vmul.f32 %v3745, 1.442695
        %v3788 = vpow.pop %v3787
        %v3789 = vmul.f32 %v3746, 1.442695
        %v3790 = vpow.pop %v3789
        %v3791 = vmul.f32 %v3747, 1.442695
        %v3792 = vpow.pop %v3791
        %v3793 = vmul.f32 %v3748, 1.442695
        %v3794 = vpow.pop %v3793
        %v3795 = vmul.f32 %v3749, 1.442695
        %v3796 = vpow.pop %v3795
        %v3797 = vmul.f32 %v3750, 1.442695
        %v3798 = vpow.pop %v3797
        %v3799 = vmul.f32 %v3751, 1.442695
        %v3800 = vpow.pop %v3799
        %v3801 = vmul.f32 %v3752, 1.442695
        %v3802 = vpow.pop %v3801
        %v3803 = vmul.f32 %v3753, 1.442695
        %v3804 = vpow.pop %v3803
        %v3805 = vmul.f32 %v3754, 1.442695
        %v3806 = vpow.pop %v3805
        %v3807 = vmul.f32 %v3755, 1.442695
        %v3808 = vpow.pop %v3807
        %v3809 = vmul.f32 %v3756, 1.442695
        %v3810 = vpow.pop %v3809
        %v3811 = vmul.f32 %v3757, 1.442695
        %v3812 = vpow.pop %v3811
        %v3813 = vmul.f32 %v3758, 1.442695
        %v3814 = vpow.pop %v3813
        %v3815 = vmul.f32 %v3759, 1.442695
        %v3816 = vpow.pop %v3815
        %v3817 = vmul.f32 %v3760, 1.442695
        %v3818 = vpow.pop %v3817
        %v3819 = vmul.f32 %v3761, 1.442695
        %v3820 = vpow.pop %v3819
        %v3821 = vmul.f32 %v3762, 1.442695
        %v3822 = vpow.pop %v3821
        %v3823 = vmul.f32 %v3763, 1.442695
        %v3824 = vpow.pop %v3823
        %v3825 = vmul.f32 %v3764, 1.442695
        %v3826 = vpow.pop %v3825
        %v3827 = vmul.f32 %v3765, 1.442695
        %v3828 = vpow.pop %v3827
        %v3829 = vmul.f32 %v3766, 1.442695
        %v3830 = vpow.pop %v3829
        %v3831 = vadd.f32 %v3768, 1.0
        %v3832 = vadd.f32 %v3770, 1.0
        %v3833 = vadd.f32 %v3772, 1.0
        %v3834 = vadd.f32 %v3774, 1.0
        %v3835 = vadd.f32 %v3776, 1.0
        %v3836 = vadd.f32 %v3778, 1.0
        %v3837 = vadd.f32 %v3780, 1.0
        %v3838 = vadd.f32 %v3782, 1.0
        %v3839 = vadd.f32 %v3784, 1.0
        %v3840 = vadd.f32 %v3786, 1.0
        %v3841 = vadd.f32 %v3788, 1.0
        %v3842 = vadd.f32 %v3790, 1.0
        %v3843 = vadd.f32 %v3792, 1.0
        %v3844 = vadd.f32 %v3794, 1.0
        %v3845 = vadd.f32 %v3796, 1.0
        %v3846 = vadd.f32 %v3798, 1.0
        %v3847 = vadd.f32 %v3800, 1.0
        %v3848 = vadd.f32 %v3802, 1.0
        %v3849 = vadd.f32 %v3804, 1.0
        %v3850 = vadd.f32 %v3806, 1.0
        %v3851 = vadd.f32 %v3808, 1.0
        %v3852 = vadd.f32 %v3810, 1.0
        %v3853 = vadd.f32 %v3812, 1.0
        %v3854 = vadd.f32 %v3814, 1.0
        %v3855 = vadd.f32 %v3816, 1.0
        %v3856 = vadd.f32 %v3818, 1.0
        %v3857 = vadd.f32 %v3820, 1.0
        %v3858 = vadd.f32 %v3822, 1.0
        %v3859 = vadd.f32 %v3824, 1.0
        %v3860 = vadd.f32 %v3826, 1.0
        %v3861 = vadd.f32 %v3828, 1.0
        %v3862 = vadd.f32 %v3830, 1.0
        %v3863 = vrcp.pop %v3831
        %v3864 = vmul.f32 1.0, %v3863
        %v3865 = vrcp.pop %v3832
        %v3866 = vmul.f32 1.0, %v3865
        %v3867 = vrcp.pop %v3833
        %v3868 = vmul.f32 1.0, %v3867
        %v3869 = vrcp.pop %v3834
        %v3870 = vmul.f32 1.0, %v3869
        %v3871 = vrcp.pop %v3835
        %v3872 = vmul.f32 1.0, %v3871
        %v3873 = vrcp.pop %v3836
        %v3874 = vmul.f32 1.0, %v3873
        %v3875 = vrcp.pop %v3837
        %v3876 = vmul.f32 1.0, %v3875
        %v3877 = vrcp.pop %v3838
        %v3878 = vmul.f32 1.0, %v3877
        %v3879 = vrcp.pop %v3839
        %v3880 = vmul.f32 1.0, %v3879
        %v3881 = vrcp.pop %v3840
        %v3882 = vmul.f32 1.0, %v3881
        %v3883 = vrcp.pop %v3841
        %v3884 = vmul.f32 1.0, %v3883
        %v3885 = vrcp.pop %v3842
        %v3886 = vmul.f32 1.0, %v3885
        %v3887 = vrcp.pop %v3843
        %v3888 = vmul.f32 1.0, %v3887
        %v3889 = vrcp.pop %v3844
        %v3890 = vmul.f32 1.0, %v3889
        %v3891 = vrcp.pop %v3845
        %v3892 = vmul.f32 1.0, %v3891
        %v3893 = vrcp.pop %v3846
        %v3894 = vmul.f32 1.0, %v3893
        %v3895 = vrcp.pop %v3847
        %v3896 = vmul.f32 1.0, %v3895
        %v3897 = vrcp.pop %v3848
        %v3898 = vmul.f32 1.0, %v3897
        %v3899 = vrcp.pop %v3849
        %v3900 = vmul.f32 1.0, %v3899
        %v3901 = vrcp.pop %v3850
        %v3902 = vmul.f32 1.0, %v3901
        %v3903 = vrcp.pop %v3851
        %v3904 = vmul.f32 1.0, %v3903
        %v3905 = vrcp.pop %v3852
        %v3906 = vmul.f32 1.0, %v3905
        %v3907 = vrcp.pop %v3853
        %v3908 = vmul.f32 1.0, %v3907
        %v3909 = vrcp.pop %v3854
        %v3910 = vmul.f32 1.0, %v3909
        %v3911 = vrcp.pop %v3855
        %v3912 = vmul.f32 1.0, %v3911
        %v3913 = vrcp.pop %v3856
        %v3914 = vmul.f32 1.0, %v3913
        %v3915 = vrcp.pop %v3857
        %v3916 = vmul.f32 1.0, %v3915
        %v3917 = vrcp.pop %v3858
        %v3918 = vmul.f32 1.0, %v3917
        %v3919 = vrcp.pop %v3859
        %v3920 = vmul.f32 1.0, %v3919
        %v3921 = vrcp.pop %v3860
        %v3922 = vmul.f32 1.0, %v3921
        %v3923 = vrcp.pop %v3861
        %v3924 = vmul.f32 1.0, %v3923
        %v3925 = vrcp.pop %v3862
        %v3926 = vmul.f32 1.0, %v3925
        %v3927 = vmul.f32 %v3703, %v3864
        %v3928 = vmul.f32 %v3704, %v3866
        %v3929 = vmul.f32 %v3705, %v3868
        %v3930 = vmul.f32 %v3706, %v3870
        %v3931 = vmul.f32 %v3707, %v3872
        %v3932 = vmul.f32 %v3708, %v3874
        %v3933 = vmul.f32 %v3709, %v3876
        %v3934 = vmul.f32 %v3710, %v3878
        %v3935 = vmul.f32 %v3711, %v3880
        %v3936 = vmul.f32 %v3712, %v3882
        %v3937 = vmul.f32 %v3713, %v3884
        %v3938 = vmul.f32 %v3714, %v3886
        %v3939 = vmul.f32 %v3715, %v3888
        %v3940 = vmul.f32 %v3716, %v3890
        %v3941 = vmul.f32 %v3717, %v3892
        %v3942 = vmul.f32 %v3718, %v3894
        %v3943 = vmul.f32 %v3719, %v3896
        %v3944 = vmul.f32 %v3720, %v3898
        %v3945 = vmul.f32 %v3721, %v3900
        %v3946 = vmul.f32 %v3722, %v3902
        %v3947 = vmul.f32 %v3723, %v3904
        %v3948 = vmul.f32 %v3724, %v3906
        %v3949 = vmul.f32 %v3725, %v3908
        %v3950 = vmul.f32 %v3726, %v3910
        %v3951 = vmul.f32 %v3727, %v3912
        %v3952 = vmul.f32 %v3728, %v3914
        %v3953 = vmul.f32 %v3729, %v3916
        %v3954 = vmul.f32 %v3730, %v3918
        %v3955 = vmul.f32 %v3731, %v3920
        %v3956 = vmul.f32 %v3732, %v3922
        %v3957 = vmul.f32 %v3733, %v3924
        %v3958 = vmul.f32 %v3734, %v3926
        %v3959 = vld [vmem:[#allocation2] sm:$0xff]
        %v3960 = vld [vmem:[#allocation2 + $0x8] sm:$0xff]
        %v3961 = vld [vmem:[#allocation2 + $0x10] sm:$0xff]
        %v3962 = vld [vmem:[#allocation2 + $0x18] sm:$0xff]
        %v3963 = vld [vmem:[#allocation2 + $0x20] sm:$0xff]
        %v3964 = vld [vmem:[#allocation2 + $0x28] sm:$0xff]
        %v3965 = vld [vmem:[#allocation2 + $0x30] sm:$0xff]
        %v3966 = vld [vmem:[#allocation2 + $0x38] sm:$0xff]
        %v3967 = vld [vmem:[#allocation2 + $0x40] sm:$0xff]
        %v3968 = vld [vmem:[#allocation2 + $0x48] sm:$0xff]
        %v3969 = vld [vmem:[#allocation2 + $0x50] sm:$0xff]
        %v3970 = vld [vmem:[#allocation2 + $0x58] sm:$0xff]
        %v3971 = vld [vmem:[#allocation2 + $0x60] sm:$0xff]
        %v3972 = vld [vmem:[#allocation2 + $0x68] sm:$0xff]
        %v3973 = vld [vmem:[#allocation2 + $0x70] sm:$0xff]
        %v3974 = vld [vmem:[#allocation2 + $0x78] sm:$0xff]
        %v3975 = vld [vmem:[#allocation2 + $0x80] sm:$0xff]
        %v3976 = vld [vmem:[#allocation2 + $0x88] sm:$0xff]
        %v3977 = vld [vmem:[#allocation2 + $0x90] sm:$0xff]
        %v3978 = vld [vmem:[#allocation2 + $0x98] sm:$0xff]
        %v3979 = vld [vmem:[#allocation2 + $0xa0] sm:$0xff]
        %v3980 = vld [vmem:[#allocation2 + $0xa8] sm:$0xff]
        %v3981 = vld [vmem:[#allocation2 + $0xb0] sm:$0xff]
        %v3982 = vld [vmem:[#allocation2 + $0xb8] sm:$0xff]
        %v3983 = vld [vmem:[#allocation2 + $0xc0] sm:$0xff]
        %v3984 = vld [vmem:[#allocation2 + $0xc8] sm:$0xff]
        %v3985 = vld [vmem:[#allocation2 + $0xd0] sm:$0xff]
        %v3986 = vld [vmem:[#allocation2 + $0xd8] sm:$0xff]
        %v3987 = vld [vmem:[#allocation2 + $0xe0] sm:$0xff]
        %v3988 = vld [vmem:[#allocation2 + $0xe8] sm:$0xff]
        %v3989 = vld [vmem:[#allocation2 + $0xf0] sm:$0xff]
        %v3990 = vld [vmem:[#allocation2 + $0xf8] sm:$0xff]
        %v3991 = vld [vmem:[%s12] sm:$0x1]
        %v3993 = vlaneseq
        %v3994 = vshrl.u32 %v3993, 7
        %v3995 = vsub.s32 0, %v3994
        %v3996 = vrot.slane %v3991, %v3995
        %v3998 = vadd.f32 %v3959, %v3996
        %v3999 = vadd.f32 %v3960, %v3996
        %v4000 = vadd.f32 %v3961, %v3996
        %v4001 = vadd.f32 %v3962, %v3996
        %v4002 = vadd.f32 %v3963, %v3996
        %v4003 = vadd.f32 %v3964, %v3996
        %v4004 = vadd.f32 %v3965, %v3996
        %v4005 = vadd.f32 %v3966, %v3996
        %v4006 = vadd.f32 %v3967, %v3996
        %v4007 = vadd.f32 %v3968, %v3996
        %v4008 = vadd.f32 %v3969, %v3996
        %v4009 = vadd.f32 %v3970, %v3996
        %v4010 = vadd.f32 %v3971, %v3996
        %v4011 = vadd.f32 %v3972, %v3996
        %v4012 = vadd.f32 %v3973, %v3996
        %v4013 = vadd.f32 %v3974, %v3996
        %v4014 = vadd.f32 %v3975, %v3996
        %v4015 = vadd.f32 %v3976, %v3996
        %v4016 = vadd.f32 %v3977, %v3996
        %v4017 = vadd.f32 %v3978, %v3996
        %v4018 = vadd.f32 %v3979, %v3996
        %v4019 = vadd.f32 %v3980, %v3996
        %v4020 = vadd.f32 %v3981, %v3996
        %v4021 = vadd.f32 %v3982, %v3996
        %v4022 = vadd.f32 %v3983, %v3996
        %v4023 = vadd.f32 %v3984, %v3996
        %v4024 = vadd.f32 %v3985, %v3996
        %v4025 = vadd.f32 %v3986, %v3996
        %v4026 = vadd.f32 %v3987, %v3996
        %v4027 = vadd.f32 %v3988, %v3996
        %v4028 = vadd.f32 %v3989, %v3996
        %v4029 = vadd.f32 %v3990, %v3996
        %v4030 = vrot.slane %v3927, 7
        %v4031 = vrot.slane %v3928, 7
        %v4032 = vrot.slane %v3929, 7
        %v4033 = vrot.slane %v3930, 7
        %v4034 = vrot.slane %v3931, 7
        %v4035 = vrot.slane %v3932, 7
        %v4036 = vrot.slane %v3933, 7
        %v4037 = vrot.slane %v3934, 7
        %v4038 = vrot.slane %v3935, 7
        %v4039 = vrot.slane %v3936, 7
        %v4040 = vrot.slane %v3937, 7
        %v4041 = vrot.slane %v3938, 7
        %v4042 = vrot.slane %v3939, 7
        %v4043 = vrot.slane %v3940, 7
        %v4044 = vrot.slane %v3941, 7
        %v4045 = vrot.slane %v3942, 7
        %v4046 = vrot.slane %v3943, 7
        %v4047 = vrot.slane %v3944, 7
        %v4048 = vrot.slane %v3945, 7
        %v4049 = vrot.slane %v3946, 7
        %v4050 = vrot.slane %v3947, 7
        %v4051 = vrot.slane %v3948, 7
        %v4052 = vrot.slane %v3949, 7
        %v4053 = vrot.slane %v3950, 7
        %v4054 = vrot.slane %v3951, 7
        %v4055 = vrot.slane %v3952, 7
        %v4056 = vrot.slane %v3953, 7
        %v4057 = vrot.slane %v3954, 7
        %v4058 = vrot.slane %v3955, 7
        %v4059 = vrot.slane %v3956, 7
        %v4060 = vrot.slane %v3957, 7
        %v4061 = vrot.slane %v3958, 7
        %v4062 = vsel %vm1710, %v4061, 0.0
        %v4063 = vsel %vm1710, %v4060, %v4061
        %v4064 = vsel %vm1710, %v4059, %v4060
        %v4065 = vsel %vm1710, %v4058, %v4059
        %v4066 = vsel %vm1710, %v4057, %v4058
        %v4067 = vsel %vm1710, %v4056, %v4057
        %v4068 = vsel %vm1710, %v4055, %v4056
        %v4069 = vsel %vm1710, %v4054, %v4055
        %v4070 = vsel %vm1710, %v4053, %v4054
        %v4071 = vsel %vm1710, %v4052, %v4053
        %v4072 = vsel %vm1710, %v4051, %v4052
        %v4073 = vsel %vm1710, %v4050, %v4051
        %v4074 = vsel %vm1710, %v4049, %v4050
        %v4075 = vsel %vm1710, %v4048, %v4049
        %v4076 = vsel %vm1710, %v4047, %v4048
        %v4077 = vsel %vm1710, %v4046, %v4047
        %v4078 = vsel %vm1710, %v4045, %v4046
        %v4079 = vsel %vm1710, %v4044, %v4045
        %v4080 = vsel %vm1710, %v4043, %v4044
        %v4081 = vsel %vm1710, %v4042, %v4043
        %v4082 = vsel %vm1710, %v4041, %v4042
        %v4083 = vsel %vm1710, %v4040, %v4041
        %v4084 = vsel %vm1710, %v4039, %v4040
        %v4085 = vsel %vm1710, %v4038, %v4039
        %v4086 = vsel %vm1710, %v4037, %v4038
        %v4087 = vsel %vm1710, %v4036, %v4037
        %v4088 = vsel %vm1710, %v4035, %v4036
        %v4089 = vsel %vm1710, %v4034, %v4035
        %v4090 = vsel %vm1710, %v4033, %v4034
        %v4091 = vsel %vm1710, %v4032, %v4033
        %v4092 = vsel %vm1710, %v4031, %v4032
        %v4093 = vsel %vm1710, %v4030, %v4031
        %v4094 = vsel %vm1710, 0.0, %v4030
        %v4095 = vmul.f32 %v4094, %v1757
        %v4096 = vmul.f32 %v4093, %v1762
        %v4097 = vmul.f32 %v4092, %v1767
        %v4098 = vmul.f32 %v4091, %v1772
        %v4099 = vmul.f32 %v4090, %v1777
        %v4100 = vmul.f32 %v4089, %v1782
        %v4101 = vmul.f32 %v4088, %v1787
        %v4102 = vmul.f32 %v4087, %v1792
        %v4103 = vmul.f32 %v4086, %v1797
        %v4104 = vmul.f32 %v4085, %v1802
        %v4105 = vmul.f32 %v4084, %v1807
        %v4106 = vmul.f32 %v4083, %v1812
        %v4107 = vmul.f32 %v4082, %v1817
        %v4108 = vmul.f32 %v4081, %v1822
        %v4109 = vmul.f32 %v4080, %v1827
        %v4110 = vmul.f32 %v4079, %v1832
        %v4111 = vmul.f32 %v4078, %v1837
        %v4112 = vmul.f32 %v4077, %v1842
        %v4113 = vmul.f32 %v4076, %v1847
        %v4114 = vmul.f32 %v4075, %v1852
        %v4115 = vmul.f32 %v4074, %v1857
        %v4116 = vmul.f32 %v4073, %v1862
        %v4117 = vmul.f32 %v4072, %v1867
        %v4118 = vmul.f32 %v4071, %v1872
        %v4119 = vmul.f32 %v4070, %v1877
        %v4120 = vmul.f32 %v4069, %v1882
        %v4121 = vmul.f32 %v4068, %v1887
        %v4122 = vmul.f32 %v4067, %v1892
        %v4123 = vmul.f32 %v4066, %v1897
        %v4124 = vmul.f32 %v4065, %v1902
        %v4125 = vmul.f32 %v4064, %v1907
        %v4126 = vmul.f32 %v4063, %v1912
        %v4127 = vmul.f32 %v4062, %v1917
        %v4128 = vrot.slane %v3927, 1
        %v4129 = vrot.slane %v3928, 1
        %v4130 = vrot.slane %v3929, 1
        %v4131 = vrot.slane %v3930, 1
        %v4132 = vrot.slane %v3931, 1
        %v4133 = vrot.slane %v3932, 1
        %v4134 = vrot.slane %v3933, 1
        %v4135 = vrot.slane %v3934, 1
        %v4136 = vrot.slane %v3935, 1
        %v4137 = vrot.slane %v3936, 1
        %v4138 = vrot.slane %v3937, 1
        %v4139 = vrot.slane %v3938, 1
        %v4140 = vrot.slane %v3939, 1
        %v4141 = vrot.slane %v3940, 1
        %v4142 = vrot.slane %v3941, 1
        %v4143 = vrot.slane %v3942, 1
        %v4144 = vrot.slane %v3943, 1
        %v4145 = vrot.slane %v3944, 1
        %v4146 = vrot.slane %v3945, 1
        %v4147 = vrot.slane %v3946, 1
        %v4148 = vrot.slane %v3947, 1
        %v4149 = vrot.slane %v3948, 1
        %v4150 = vrot.slane %v3949, 1
        %v4151 = vrot.slane %v3950, 1
        %v4152 = vrot.slane %v3951, 1
        %v4153 = vrot.slane %v3952, 1
        %v4154 = vrot.slane %v3953, 1
        %v4155 = vrot.slane %v3954, 1
        %v4156 = vrot.slane %v3955, 1
        %v4157 = vrot.slane %v3956, 1
        %v4158 = vrot.slane %v3957, 1
        %v4159 = vrot.slane %v3958, 1
        %v4160 = vsel %vm1992, %v4159, 0.0
        %v4161 = vsel %vm1992, %v4158, %v4159
        %v4162 = vsel %vm1992, %v4157, %v4158
        %v4163 = vsel %vm1992, %v4156, %v4157
        %v4164 = vsel %vm1992, %v4155, %v4156
        %v4165 = vsel %vm1992, %v4154, %v4155
        %v4166 = vsel %vm1992, %v4153, %v4154
        %v4167 = vsel %vm1992, %v4152, %v4153
        %v4168 = vsel %vm1992, %v4151, %v4152
        %v4169 = vsel %vm1992, %v4150, %v4151
        %v4170 = vsel %vm1992, %v4149, %v4150
        %v4171 = vsel %vm1992, %v4148, %v4149
        %v4172 = vsel %vm1992, %v4147, %v4148
        %v4173 = vsel %vm1992, %v4146, %v4147
        %v4174 = vsel %vm1992, %v4145, %v4146
        %v4175 = vsel %vm1992, %v4144, %v4145
        %v4176 = vsel %vm1992, %v4143, %v4144
        %v4177 = vsel %vm1992, %v4142, %v4143
        %v4178 = vsel %vm1992, %v4141, %v4142
        %v4179 = vsel %vm1992, %v4140, %v4141
        %v4180 = vsel %vm1992, %v4139, %v4140
        %v4181 = vsel %vm1992, %v4138, %v4139
        %v4182 = vsel %vm1992, %v4137, %v4138
        %v4183 = vsel %vm1992, %v4136, %v4137
        %v4184 = vsel %vm1992, %v4135, %v4136
        %v4185 = vsel %vm1992, %v4134, %v4135
        %v4186 = vsel %vm1992, %v4133, %v4134
        %v4187 = vsel %vm1992, %v4132, %v4133
        %v4188 = vsel %vm1992, %v4131, %v4132
        %v4189 = vsel %vm1992, %v4130, %v4131
        %v4190 = vsel %vm1992, %v4129, %v4130
        %v4191 = vsel %vm1992, %v4128, %v4129
        %v4192 = vsel %vm1992, 0.0, %v4128
        %v4193 = vmul.f32 %v4192, %v2034
        %v4194 = vmul.f32 %v4191, %v2039
        %v4195 = vmul.f32 %v4190, %v2044
        %v4196 = vmul.f32 %v4189, %v2049
        %v4197 = vmul.f32 %v4188, %v2054
        %v4198 = vmul.f32 %v4187, %v2059
        %v4199 = vmul.f32 %v4186, %v2064
        %v4200 = vmul.f32 %v4185, %v2069
        %v4201 = vmul.f32 %v4184, %v2074
        %v4202 = vmul.f32 %v4183, %v2079
        %v4203 = vmul.f32 %v4182, %v2084
        %v4204 = vmul.f32 %v4181, %v2089
        %v4205 = vmul.f32 %v4180, %v2094
        %v4206 = vmul.f32 %v4179, %v2099
        %v4207 = vmul.f32 %v4178, %v2104
        %v4208 = vmul.f32 %v4177, %v2109
        %v4209 = vmul.f32 %v4176, %v2114
        %v4210 = vmul.f32 %v4175, %v2119
        %v4211 = vmul.f32 %v4174, %v2124
        %v4212 = vmul.f32 %v4173, %v2129
        %v4213 = vmul.f32 %v4172, %v2134
        %v4214 = vmul.f32 %v4171, %v2139
        %v4215 = vmul.f32 %v4170, %v2144
        %v4216 = vmul.f32 %v4169, %v2149
        %v4217 = vmul.f32 %v4168, %v2154
        %v4218 = vmul.f32 %v4167, %v2159
        %v4219 = vmul.f32 %v4166, %v2164
        %v4220 = vmul.f32 %v4165, %v2169
        %v4221 = vmul.f32 %v4164, %v2174
        %v4222 = vmul.f32 %v4163, %v2179
        %v4223 = vmul.f32 %v4162, %v2184
        %v4224 = vmul.f32 %v4161, %v2189
        %v4225 = vmul.f32 %v4160, %v2194
        %v4226 = vld [vmem:[#allocation6] sm:$0xff]
        %v4227 = vld [vmem:[#allocation6 + $0x8] sm:$0xff]
        %v4228 = vld [vmem:[#allocation6 + $0x10] sm:$0xff]
        %v4229 = vld [vmem:[#allocation6 + $0x18] sm:$0xff]
        %v4230 = vld [vmem:[#allocation6 + $0x20] sm:$0xff]
        %v4231 = vld [vmem:[#allocation6 + $0x28] sm:$0xff]
        %v4232 = vld [vmem:[#allocation6 + $0x30] sm:$0xff]
        %v4233 = vld [vmem:[#allocation6 + $0x38] sm:$0xff]
        %v4234 = vld [vmem:[#allocation6 + $0x40] sm:$0xff]
        %v4235 = vld [vmem:[#allocation6 + $0x48] sm:$0xff]
        %v4236 = vld [vmem:[#allocation6 + $0x50] sm:$0xff]
        %v4237 = vld [vmem:[#allocation6 + $0x58] sm:$0xff]
        %v4238 = vld [vmem:[#allocation6 + $0x60] sm:$0xff]
        %v4239 = vld [vmem:[#allocation6 + $0x68] sm:$0xff]
        %v4240 = vld [vmem:[#allocation6 + $0x70] sm:$0xff]
        %v4241 = vld [vmem:[#allocation6 + $0x78] sm:$0xff]
        %v4242 = vld [vmem:[#allocation6 + $0x80] sm:$0xff]
        %v4243 = vld [vmem:[#allocation6 + $0x88] sm:$0xff]
        %v4244 = vld [vmem:[#allocation6 + $0x90] sm:$0xff]
        %v4245 = vld [vmem:[#allocation6 + $0x98] sm:$0xff]
        %v4246 = vld [vmem:[#allocation6 + $0xa0] sm:$0xff]
        %v4247 = vld [vmem:[#allocation6 + $0xa8] sm:$0xff]
        %v4248 = vld [vmem:[#allocation6 + $0xb0] sm:$0xff]
        %v4249 = vld [vmem:[#allocation6 + $0xb8] sm:$0xff]
        %v4250 = vld [vmem:[#allocation6 + $0xc0] sm:$0xff]
        %v4251 = vld [vmem:[#allocation6 + $0xc8] sm:$0xff]
        %v4252 = vld [vmem:[#allocation6 + $0xd0] sm:$0xff]
        %v4253 = vld [vmem:[#allocation6 + $0xd8] sm:$0xff]
        %v4254 = vld [vmem:[#allocation6 + $0xe0] sm:$0xff]
        %v4255 = vld [vmem:[#allocation6 + $0xe8] sm:$0xff]
        %v4256 = vld [vmem:[#allocation6 + $0xf0] sm:$0xff]
        %v4257 = vld [vmem:[#allocation6 + $0xf8] sm:$0xff]
        %v4258 = vld [vmem:[#allocation6 + $0x100] sm:$0xff]
        %v4259 = vld [vmem:[#allocation6 + $0x108] sm:$0xff]
        %v4260 = vld [vmem:[#allocation6 + $0x110] sm:$0xff]
        %v4261 = vld [vmem:[#allocation6 + $0x118] sm:$0xff]
        %v4262 = vld [vmem:[#allocation6 + $0x120] sm:$0xff]
        %v4263 = vld [vmem:[#allocation6 + $0x128] sm:$0xff]
        %v4264 = vld [vmem:[#allocation6 + $0x130] sm:$0xff]
        %v4265 = vld [vmem:[#allocation6 + $0x138] sm:$0xff]
        %v4266 = vld [vmem:[#allocation6 + $0x140] sm:$0xff]
        %v4267 = vld [vmem:[#allocation6 + $0x148] sm:$0xff]
        %v4268 = vld [vmem:[#allocation6 + $0x150] sm:$0xff]
        %v4269 = vld [vmem:[#allocation6 + $0x158] sm:$0xff]
        %v4270 = vld [vmem:[#allocation6 + $0x160] sm:$0xff]
        %v4271 = vld [vmem:[#allocation6 + $0x168] sm:$0xff]
        %v4272 = vld [vmem:[#allocation6 + $0x170] sm:$0xff]
        %v4273 = vld [vmem:[#allocation6 + $0x178] sm:$0xff]
        %4274 = vmatprep.subr.mxu0 0.0
        %4275 = vmatpush1.msra.mxu0 %v4226
        %4276 = vmatprep.subr.mxu0 0.0
        %4277 = vmatpush1.msra.mxu0 %v4227
        %4278 = vmatprep.subr.mxu0 0.0
        %4279 = vmatpush1.msra.mxu0 %v4228
        %4280 = vmatprep.subr.mxu0 0.0
        %4281 = vmatpush1.msra.mxu0 %v4229
        %4282 = vmatprep.subr.mxu0 0.0
        %4283 = vmatpush1.msra.mxu0 %v4230
        %4284 = vmatprep.subr.mxu0 0.0
        %4285 = vmatpush1.msra.mxu0 %v4231
        %4286 = vmatprep.subr.mxu0 0.0
        %4287 = vmatpush1.msra.mxu0 %v4232
        %4288 = vmatprep.subr.mxu0 0.0
        %4289 = vmatpush1.msra.mxu0 %v4233
        %4290 = vmatprep.subr.mxu0 0.0
        %4291 = vmatpush1.msra.mxu0 %v4234
        %4292 = vmatprep.subr.mxu0 0.0
        %4293 = vmatpush1.msra.mxu0 %v4235
        %4294 = vmatprep.subr.mxu0 0.0
        %4295 = vmatpush1.msra.mxu0 %v4236
        %4296 = vmatprep.subr.mxu0 0.0
        %4297 = vmatpush1.msra.mxu0 %v4237
        %4298 = vmatprep.subr.mxu0 0.0
        %4299 = vmatpush1.msra.mxu0 %v4238
        %4300 = vmatprep.subr.mxu0 0.0
        %4301 = vmatpush1.msra.mxu0 %v4239
        %4302 = vmatprep.subr.mxu0 0.0
        %4303 = vmatpush1.msra.mxu0 %v4240
        %4304 = vmatprep.subr.mxu0 0.0
        %4305 = vmatpush1.msra.mxu0 %v4241
        %4306 = vmatprep.subr.mxu0 0.0
        %4307 = vmatpush1.msra.mxu0 %v4242
        %4308 = vmatprep.subr.mxu0 0.0
        %4309 = vmatpush1.msra.mxu0 %v4243
        %4310 = vmatprep.subr.mxu0 0.0
        %4311 = vmatpush1.msra.mxu0 %v4244
        %4312 = vmatprep.subr.mxu0 0.0
        %4313 = vmatpush1.msra.mxu0 %v4245
        %4314 = vmatprep.subr.mxu0 0.0
        %4315 = vmatpush1.msra.mxu0 %v4246
        %4316 = vmatprep.subr.mxu0 0.0
        %4317 = vmatpush1.msra.mxu0 %v4247
        %4318 = vmatprep.subr.mxu0 0.0
        %4319 = vmatpush1.msra.mxu0 %v4248
        %4320 = vmatprep.subr.mxu0 0.0
        %4321 = vmatpush1.msra.mxu0 %v4249
        %4322 = vmatprep.subr.mxu0 0.0
        %4323 = vmatpush1.msra.mxu0 %v4250
        %4324 = vmatprep.subr.mxu0 0.0
        %4325 = vmatpush1.msra.mxu0 %v4251
        %4326 = vmatprep.subr.mxu0 0.0
        %4327 = vmatpush1.msra.mxu0 %v4252
        %4328 = vmatprep.subr.mxu0 0.0
        %4329 = vmatpush1.msra.mxu0 %v4253
        %4330 = vmatprep.subr.mxu0 0.0
        %4331 = vmatpush1.msra.mxu0 %v4254
        %4332 = vmatprep.subr.mxu0 0.0
        %4333 = vmatpush1.msra.mxu0 %v4255
        %4334 = vmatprep.subr.mxu0 0.0
        %4335 = vmatpush1.msra.mxu0 %v4256
        %4336 = vmatprep.subr.mxu0 0.0
        %4337 = vmatpush1.msra.mxu0 %v4257
        %4338 = vmatprep.mubr.f32.mxu0 0.0
        %4339 = vmatmul.mubr.f32.gmra.mrb[0].mxu0 %v1924
        %v4340 = vpop.f32.mrb[0].mxu0
        %v4341 = vadd.f32 0.0, %v4340
        %v4342 = vpop.f32.mrb[0].mxu0
        %4343 = vmatprep.mubr.f32.mxu0 0.0
        %4344 = vmatmul.mubr.f32.gmra.mrb[0].mxu0 %v1925
        %v4345 = vpop.f32.mrb[0].mxu0
        %v4346 = vadd.f32 0.0, %v4345
        %v4347 = vpop.f32.mrb[0].mxu0
        %4348 = vmatprep.mubr.f32.mxu0 %v3927
        %4349 = vmatmul.mubr.f32.gmra.mrb[0].mxu0 %v4095
        %v4350 = vpop.f32.mrb[0].mxu0
        %v4351 = vadd.f32 0.0, %v4350
        %v4352 = vpop.f32.mrb[0].mxu0
        %4353 = vmatprep.mubr.f32.mxu0 %v3928
        %4354 = vmatmul.mubr.f32.gmra.mrb[0].mxu0 %v4096
        %v4355 = vpop.f32.mrb[0].mxu0
        %v4356 = vadd.f32 0.0, %v4355
        %v4357 = vpop.f32.mrb[0].mxu0
        %4358 = vmatprep.mubr.f32.mxu0 %v3929
        %4359 = vmatmul.mubr.f32.gmra.mrb[0].mxu0 %v4097
        %v4360 = vpop.f32.mrb[0].mxu0
        %v4361 = vadd.f32 0.0, %v4360
        %v4362 = vpop.f32.mrb[0].mxu0
        %4363 = vmatprep.mubr.f32.mxu0 %v3930
        %4364 = vmatmul.mubr.f32.gmra.mrb[0].mxu0 %v4098
        %v4365 = vpop.f32.mrb[0].mxu0
        %v4366 = vadd.f32 0.0, %v4365
        %v4367 = vpop.f32.mrb[0].mxu0
        %4368 = vmatprep.mubr.f32.mxu0 %v3931
        %4369 = vmatmul.mubr.f32.gmra.mrb[0].mxu0 %v4099
        %v4370 = vpop.f32.mrb[0].mxu0
        %v4371 = vadd.f32 0.0, %v4370
        %v4372 = vpop.f32.mrb[0].mxu0
        %4373 = vmatprep.mubr.f32.mxu0 %v3932
        %4374 = vmatmul.mubr.f32.gmra.mrb[0].mxu0 %v4100
        %v4375 = vpop.f32.mrb[0].mxu0
        %v4376 = vadd.f32 0.0, %v4375
        %v4377 = vpop.f32.mrb[0].mxu0
        %4378 = vmatprep.mubr.f32.mxu0 %v3933
        %4379 = vmatmul.mubr.f32.gmra.mrb[0].mxu0 %v4101
        %v4380 = vpop.f32.mrb[0].mxu0
        %v4381 = vadd.f32 0.0, %v4380
        %v4382 = vpop.f32.mrb[0].mxu0
        %4383 = vmatprep.mubr.f32.mxu0 %v3934
        %4384 = vmatmul.mubr.f32.gmra.mrb[0].mxu0 %v4102
        %v4385 = vpop.f32.mrb[0].mxu0
        %v4386 = vadd.f32 0.0, %v4385
        %v4387 = vpop.f32.mrb[0].mxu0
        %4388 = vmatprep.mubr.f32.mxu0 %v3935
        %4389 = vmatmul.mubr.f32.gmra.mrb[0].mxu0 %v4103
        %v4390 = vpop.f32.mrb[0].mxu0
        %v4391 = vadd.f32 0.0, %v4390
        %v4392 = vpop.f32.mrb[0].mxu0
        %4393 = vmatprep.mubr.f32.mxu0 %v3936
        %4394 = vmatmul.mubr.f32.gmra.mrb[0].mxu0 %v4104
        %v4395 = vpop.f32.mrb[0].mxu0
        %v4396 = vadd.f32 0.0, %v4395
        %v4397 = vpop.f32.mrb[0].mxu0
        %4398 = vmatprep.mubr.f32.mxu0 %v3937
        %4399 = vmatmul.mubr.f32.gmra.mrb[0].mxu0 %v4105
        %v4400 = vpop.f32.mrb[0].mxu0
        %v4401 = vadd.f32 0.0, %v4400
        %v4402 = vpop.f32.mrb[0].mxu0
        %4403 = vmatprep.mubr.f32.mxu0 %v3938
        %4404 = vmatmul.mubr.f32.gmra.mrb[0].mxu0 %v4106
        %v4405 = vpop.f32.mrb[0].mxu0
        %v4406 = vadd.f32 0.0, %v4405
        %v4407 = vpop.f32.mrb[0].mxu0
        %4408 = vmatprep.mubr.f32.mxu0 %v3939
        %4409 = vmatmul.mubr.f32.gmra.mrb[0].mxu0 %v4107
        %v4410 = vpop.f32.mrb[0].mxu0
        %v4411 = vadd.f32 0.0, %v4410
        %v4412 = vpop.f32.mrb[0].mxu0
        %4413 = vmatprep.mubr.f32.mxu0 %v3940
        %4414 = vmatmul.mubr.f32.gmra.mrb[0].mxu0 %v4108
        %v4415 = vpop.f32.mrb[0].mxu0
        %v4416 = vadd.f32 0.0, %v4415
        %v4417 = vpop.f32.mrb[0].mxu0
        %4418 = vmatprep.mubr.f32.mxu0 %v3941
        %4419 = vmatmul.mubr.f32.gmra.mrb[0].mxu0 %v4109
        %v4420 = vpop.f32.mrb[0].mxu0
        %v4421 = vadd.f32 0.0, %v4420
        %v4422 = vpop.f32.mrb[0].mxu0
        %4423 = vmatprep.mubr.f32.mxu0 %v3942
        %4424 = vmatmul.mubr.f32.gmra.mrb[0].mxu0 %v4110
        %v4425 = vpop.f32.mrb[0].mxu0
        %v4426 = vadd.f32 0.0, %v4425
        %v4427 = vpop.f32.mrb[0].mxu0
        %4428 = vmatprep.mubr.f32.mxu0 %v3943
        %4429 = vmatmul.mubr.f32.gmra.mrb[0].mxu0 %v4111
        %v4430 = vpop.f32.mrb[0].mxu0
        %v4431 = vadd.f32 0.0, %v4430
        %v4432 = vpop.f32.mrb[0].mxu0
        %4433 = vmatprep.mubr.f32.mxu0 %v3944
        %4434 = vmatmul.mubr.f32.gmra.mrb[0].mxu0 %v4112
        %v4435 = vpop.f32.mrb[0].mxu0
        %v4436 = vadd.f32 0.0, %v4435
        %v4437 = vpop.f32.mrb[0].mxu0
        %4438 = vmatprep.mubr.f32.mxu0 %v3945
        %4439 = vmatmul.mubr.f32.gmra.mrb[0].mxu0 %v4113
        %v4440 = vpop.f32.mrb[0].mxu0
        %v4441 = vadd.f32 0.0, %v4440
        %v4442 = vpop.f32.mrb[0].mxu0
        %4443 = vmatprep.mubr.f32.mxu0 %v3946
        %4444 = vmatmul.mubr.f32.gmra.mrb[0].mxu0 %v4114
        %v4445 = vpop.f32.mrb[0].mxu0
        %v4446 = vadd.f32 0.0, %v4445
        %v4447 = vpop.f32.mrb[0].mxu0
        %4448 = vmatprep.mubr.f32.mxu0 %v3947
        %4449 = vmatmul.mubr.f32.gmra.mrb[0].mxu0 %v4115
        %v4450 = vpop.f32.mrb[0].mxu0
        %v4451 = vadd.f32 0.0, %v4450
        %v4452 = vpop.f32.mrb[0].mxu0
        %4453 = vmatprep.mubr.f32.mxu0 %v3948
        %4454 = vmatmul.mubr.f32.gmra.mrb[0].mxu0 %v4116
        %v4455 = vpop.f32.mrb[0].mxu0
        %v4456 = vadd.f32 0.0, %v4455
        %v4457 = vpop.f32.mrb[0].mxu0
        %4458 = vmatprep.mubr.f32.mxu0 %v3949
        %4459 = vmatmul.mubr.f32.gmra.mrb[0].mxu0 %v4117
        %v4460 = vpop.f32.mrb[0].mxu0
        %v4461 = vadd.f32 0.0, %v4460
        %v4462 = vpop.f32.mrb[0].mxu0
        %4463 = vmatprep.mubr.f32.mxu0 %v3950
        %4464 = vmatmul.mubr.f32.gmra.mrb[0].mxu0 %v4118
        %v4465 = vpop.f32.mrb[0].mxu0
        %v4466 = vadd.f32 0.0, %v4465
        %v4467 = vpop.f32.mrb[0].mxu0
        %4468 = vmatprep.mubr.f32.mxu0 %v3951
        %4469 = vmatmul.mubr.f32.gmra.mrb[0].mxu0 %v4119
        %v4470 = vpop.f32.mrb[0].mxu0
        %v4471 = vadd.f32 0.0, %v4470
        %v4472 = vpop.f32.mrb[0].mxu0
        %4473 = vmatprep.mubr.f32.mxu0 %v3952
        %4474 = vmatmul.mubr.f32.gmra.mrb[0].mxu0 %v4120
        %v4475 = vpop.f32.mrb[0].mxu0
        %v4476 = vadd.f32 0.0, %v4475
        %v4477 = vpop.f32.mrb[0].mxu0
        %4478 = vmatprep.mubr.f32.mxu0 %v3953
        %4479 = vmatmul.mubr.f32.gmra.mrb[0].mxu0 %v4121
        %v4480 = vpop.f32.mrb[0].mxu0
        %v4481 = vadd.f32 0.0, %v4480
        %v4482 = vpop.f32.mrb[0].mxu0
        %4483 = vmatprep.mubr.f32.mxu0 %v3954
        %4484 = vmatmul.mubr.f32.gmra.mrb[0].mxu0 %v4122
        %v4485 = vpop.f32.mrb[0].mxu0
        %v4486 = vadd.f32 0.0, %v4485
        %v4487 = vpop.f32.mrb[0].mxu0
        %4488 = vmatprep.mubr.f32.mxu0 %v3955
        %4489 = vmatmul.mubr.f32.gmra.mrb[0].mxu0 %v4123
        %v4490 = vpop.f32.mrb[0].mxu0
        %v4491 = vadd.f32 0.0, %v4490
        %v4492 = vpop.f32.mrb[0].mxu0
        %4493 = vmatprep.mubr.f32.mxu0 %v3956
        %4494 = vmatmul.mubr.f32.gmra.mrb[0].mxu0 %v4124
        %v4495 = vpop.f32.mrb[0].mxu0
        %v4496 = vadd.f32 0.0, %v4495
        %v4497 = vpop.f32.mrb[0].mxu0
        %4498 = vdwg.mxu0
        %4499 = vmatprep.subr.mxu0 0.0
        %4500 = vmatpush1.msra.mxu0 %v4258
        %4501 = vmatprep.subr.mxu0 0.0
        %4502 = vmatpush1.msra.mxu0 %v4259
        %4503 = vmatprep.subr.mxu0 0.0
        %4504 = vmatpush1.msra.mxu0 %v4260
        %4505 = vmatprep.subr.mxu0 0.0
        %4506 = vmatpush1.msra.mxu0 %v4261
        %4507 = vmatprep.subr.mxu0 0.0
        %4508 = vmatpush1.msra.mxu0 %v4262
        %4509 = vmatprep.subr.mxu0 0.0
        %4510 = vmatpush1.msra.mxu0 %v4263
        %4511 = vmatprep.subr.mxu0 0.0
        %4512 = vmatpush1.msra.mxu0 %v4264
        %4513 = vmatprep.subr.mxu0 0.0
        %4514 = vmatpush1.msra.mxu0 %v4265
        %4515 = vmatprep.subr.mxu0 0.0
        %4516 = vmatpush1.msra.mxu0 %v4266
        %4517 = vmatprep.subr.mxu0 0.0
        %4518 = vmatpush1.msra.mxu0 %v4267
        %4519 = vmatprep.subr.mxu0 0.0
        %4520 = vmatpush1.msra.mxu0 %v4268
        %4521 = vmatprep.subr.mxu0 0.0
        %4522 = vmatpush1.msra.mxu0 %v4269
        %4523 = vmatprep.subr.mxu0 0.0
        %4524 = vmatpush1.msra.mxu0 %v4270
        %4525 = vmatprep.subr.mxu0 0.0
        %4526 = vmatpush1.msra.mxu0 %v4271
        %4527 = vmatprep.subr.mxu0 0.0
        %4528 = vmatpush1.msra.mxu0 %v4272
        %4529 = vmatprep.subr.mxu0 0.0
        %4530 = vmatpush1.msra.mxu0 %v4273
        %4531 = vmatprep.subr.mxu0 0.0
        %4532 = vmatpush1.msra.mxu0 0.0
        %4533 = vmatprep.subr.mxu0 0.0
        %4534 = vmatpush1.msra.mxu0 0.0
        %4535 = vmatprep.subr.mxu0 0.0
        %4536 = vmatpush1.msra.mxu0 0.0
        %4537 = vmatprep.subr.mxu0 0.0
        %4538 = vmatpush1.msra.mxu0 0.0
        %4539 = vmatprep.subr.mxu0 0.0
        %4540 = vmatpush1.msra.mxu0 0.0
        %4541 = vmatprep.subr.mxu0 0.0
        %4542 = vmatpush1.msra.mxu0 0.0
        %4543 = vmatprep.subr.mxu0 0.0
        %4544 = vmatpush1.msra.mxu0 0.0
        %4545 = vmatprep.subr.mxu0 0.0
        %4546 = vmatpush1.msra.mxu0 0.0
        %4547 = vmatprep.subr.mxu0 0.0
        %4548 = vmatpush1.msra.mxu0 0.0
        %4549 = vmatprep.subr.mxu0 0.0
        %4550 = vmatpush1.msra.mxu0 0.0
        %4551 = vmatprep.subr.mxu0 0.0
        %4552 = vmatpush1.msra.mxu0 0.0
        %4553 = vmatprep.subr.mxu0 0.0
        %4554 = vmatpush1.msra.mxu0 0.0
        %4555 = vmatprep.subr.mxu0 0.0
        %4556 = vmatpush1.msra.mxu0 0.0
        %4557 = vmatprep.subr.mxu0 0.0
        %4558 = vmatpush1.msra.mxu0 0.0
        %4559 = vmatprep.subr.mxu0 0.0
        %4560 = vmatpush1.msra.mxu0 0.0
        %4561 = vmatprep.subr.mxu0 0.0
        %4562 = vmatpush1.msra.mxu0 0.0
        %4563 = vmatprep.mubr.f32.mxu0 0.0
        %4564 = vmatmul.mubr.f32.gmra.mrb[0].mxu0 %v2206
        %v4565 = vpop.f32.mrb[0].mxu0
        %v4566 = vadd.f32 %v4341, %v4565
        %v4567 = vpop.f32.mrb[0].mxu0
        %4568 = vmatprep.mubr.f32.mxu0 0.0
        %4569 = vmatmul.mubr.f32.gmra.mrb[0].mxu0 %v4193
        %v4570 = vpop.f32.mrb[0].mxu0
        %v4571 = vadd.f32 %v4346, %v4570
        %v4572 = vpop.f32.mrb[0].mxu0
        %4573 = vmatprep.mubr.f32.mxu0 0.0
        %4574 = vmatmul.mubr.f32.gmra.mrb[0].mxu0 %v4194
        %v4575 = vpop.f32.mrb[0].mxu0
        %v4576 = vadd.f32 %v4351, %v4575
        %v4577 = vpop.f32.mrb[0].mxu0
        %4578 = vmatprep.mubr.f32.mxu0 0.0
        %4579 = vmatmul.mubr.f32.gmra.mrb[0].mxu0 %v4195
        %v4580 = vpop.f32.mrb[0].mxu0
        %v4581 = vadd.f32 %v4356, %v4580
        %v4582 = vpop.f32.mrb[0].mxu0
        %4583 = vmatprep.mubr.f32.mxu0 0.0
        %4584 = vmatmul.mubr.f32.gmra.mrb[0].mxu0 %v4196
        %v4585 = vpop.f32.mrb[0].mxu0
        %v4586 = vadd.f32 %v4361, %v4585
        %v4587 = vpop.f32.mrb[0].mxu0
        %4588 = vmatprep.mubr.f32.mxu0 0.0
        %4589 = vmatmul.mubr.f32.gmra.mrb[0].mxu0 %v4197
        %v4590 = vpop.f32.mrb[0].mxu0
        %v4591 = vadd.f32 %v4366, %v4590
        %v4592 = vpop.f32.mrb[0].mxu0
        %4593 = vmatprep.mubr.f32.mxu0 0.0
        %4594 = vmatmul.mubr.f32.gmra.mrb[0].mxu0 %v4198
        %v4595 = vpop.f32.mrb[0].mxu0
        %v4596 = vadd.f32 %v4371, %v4595
        %v4597 = vpop.f32.mrb[0].mxu0
        %4598 = vmatprep.mubr.f32.mxu0 0.0
        %4599 = vmatmul.mubr.f32.gmra.mrb[0].mxu0 %v4199
        %v4600 = vpop.f32.mrb[0].mxu0
        %v4601 = vadd.f32 %v4376, %v4600
        %v4602 = vpop.f32.mrb[0].mxu0
        %4603 = vmatprep.mubr.f32.mxu0 0.0
        %4604 = vmatmul.mubr.f32.gmra.mrb[0].mxu0 %v4200
        %v4605 = vpop.f32.mrb[0].mxu0
        %v4606 = vadd.f32 %v4381, %v4605
        %v4607 = vpop.f32.mrb[0].mxu0
        %4608 = vmatprep.mubr.f32.mxu0 0.0
        %4609 = vmatmul.mubr.f32.gmra.mrb[0].mxu0 %v4201
        %v4610 = vpop.f32.mrb[0].mxu0
        %v4611 = vadd.f32 %v4386, %v4610
        %v4612 = vpop.f32.mrb[0].mxu0
        %4613 = vmatprep.mubr.f32.mxu0 0.0
        %4614 = vmatmul.mubr.f32.gmra.mrb[0].mxu0 %v4202
        %v4615 = vpop.f32.mrb[0].mxu0
        %v4616 = vadd.f32 %v4391, %v4615
        %v4617 = vpop.f32.mrb[0].mxu0
        %4618 = vmatprep.mubr.f32.mxu0 0.0
        %4619 = vmatmul.mubr.f32.gmra.mrb[0].mxu0 %v4203
        %v4620 = vpop.f32.mrb[0].mxu0
        %v4621 = vadd.f32 %v4396, %v4620
        %v4622 = vpop.f32.mrb[0].mxu0
        %4623 = vmatprep.mubr.f32.mxu0 0.0
        %4624 = vmatmul.mubr.f32.gmra.mrb[0].mxu0 %v4204
        %v4625 = vpop.f32.mrb[0].mxu0
        %v4626 = vadd.f32 %v4401, %v4625
        %v4627 = vpop.f32.mrb[0].mxu0
        %4628 = vmatprep.mubr.f32.mxu0 0.0
        %4629 = vmatmul.mubr.f32.gmra.mrb[0].mxu0 %v4205
        %v4630 = vpop.f32.mrb[0].mxu0
        %v4631 = vadd.f32 %v4406, %v4630
        %v4632 = vpop.f32.mrb[0].mxu0
        %4633 = vmatprep.mubr.f32.mxu0 0.0
        %4634 = vmatmul.mubr.f32.gmra.mrb[0].mxu0 %v4206
        %v4635 = vpop.f32.mrb[0].mxu0
        %v4636 = vadd.f32 %v4411, %v4635
        %v4637 = vpop.f32.mrb[0].mxu0
        %4638 = vmatprep.mubr.f32.mxu0 0.0
        %4639 = vmatmul.mubr.f32.gmra.mrb[0].mxu0 %v4207
        %v4640 = vpop.f32.mrb[0].mxu0
        %v4641 = vadd.f32 %v4416, %v4640
        %v4642 = vpop.f32.mrb[0].mxu0
        %4643 = vmatprep.mubr.f32.mxu0 0.0
        %4644 = vmatmul.mubr.f32.gmra.mrb[0].mxu0 %v4208
        %v4645 = vpop.f32.mrb[0].mxu0
        %v4646 = vadd.f32 %v4421, %v4645
        %v4647 = vpop.f32.mrb[0].mxu0
        %4648 = vmatprep.mubr.f32.mxu0 0.0
        %4649 = vmatmul.mubr.f32.gmra.mrb[0].mxu0 %v4209
        %v4650 = vpop.f32.mrb[0].mxu0
        %v4651 = vadd.f32 %v4426, %v4650
        %v4652 = vpop.f32.mrb[0].mxu0
        %4653 = vmatprep.mubr.f32.mxu0 0.0
        %4654 = vmatmul.mubr.f32.gmra.mrb[0].mxu0 %v4210
        %v4655 = vpop.f32.mrb[0].mxu0
        %v4656 = vadd.f32 %v4431, %v4655
        %v4657 = vpop.f32.mrb[0].mxu0
        %4658 = vmatprep.mubr.f32.mxu0 0.0
        %4659 = vmatmul.mubr.f32.gmra.mrb[0].mxu0 %v4211
        %v4660 = vpop.f32.mrb[0].mxu0
        %v4661 = vadd.f32 %v4436, %v4660
        %v4662 = vpop.f32.mrb[0].mxu0
        %4663 = vmatprep.mubr.f32.mxu0 0.0
        %4664 = vmatmul.mubr.f32.gmra.mrb[0].mxu0 %v4212
        %v4665 = vpop.f32.mrb[0].mxu0
        %v4666 = vadd.f32 %v4441, %v4665
        %v4667 = vpop.f32.mrb[0].mxu0
        %4668 = vmatprep.mubr.f32.mxu0 0.0
        %4669 = vmatmul.mubr.f32.gmra.mrb[0].mxu0 %v4213
        %v4670 = vpop.f32.mrb[0].mxu0
        %v4671 = vadd.f32 %v4446, %v4670
        %v4672 = vpop.f32.mrb[0].mxu0
        %4673 = vmatprep.mubr.f32.mxu0 0.0
        %4674 = vmatmul.mubr.f32.gmra.mrb[0].mxu0 %v4214
        %v4675 = vpop.f32.mrb[0].mxu0
        %v4676 = vadd.f32 %v4451, %v4675
        %v4677 = vpop.f32.mrb[0].mxu0
        %4678 = vmatprep.mubr.f32.mxu0 0.0
        %4679 = vmatmul.mubr.f32.gmra.mrb[0].mxu0 %v4215
        %v4680 = vpop.f32.mrb[0].mxu0
        %v4681 = vadd.f32 %v4456, %v4680
        %v4682 = vpop.f32.mrb[0].mxu0
        %4683 = vmatprep.mubr.f32.mxu0 0.0
        %4684 = vmatmul.mubr.f32.gmra.mrb[0].mxu0 %v4216
        %v4685 = vpop.f32.mrb[0].mxu0
        %v4686 = vadd.f32 %v4461, %v4685
        %v4687 = vpop.f32.mrb[0].mxu0
        %4688 = vmatprep.mubr.f32.mxu0 0.0
        %4689 = vmatmul.mubr.f32.gmra.mrb[0].mxu0 %v4217
        %v4690 = vpop.f32.mrb[0].mxu0
        %v4691 = vadd.f32 %v4466, %v4690
        %v4692 = vpop.f32.mrb[0].mxu0
        %4693 = vmatprep.mubr.f32.mxu0 0.0
        %4694 = vmatmul.mubr.f32.gmra.mrb[0].mxu0 %v4218
        %v4695 = vpop.f32.mrb[0].mxu0
        %v4696 = vadd.f32 %v4471, %v4695
        %v4697 = vpop.f32.mrb[0].mxu0
        %4698 = vmatprep.mubr.f32.mxu0 0.0
        %4699 = vmatmul.mubr.f32.gmra.mrb[0].mxu0 %v4219
        %v4700 = vpop.f32.mrb[0].mxu0
        %v4701 = vadd.f32 %v4476, %v4700
        %v4702 = vpop.f32.mrb[0].mxu0
        %4703 = vmatprep.mubr.f32.mxu0 0.0
        %4704 = vmatmul.mubr.f32.gmra.mrb[0].mxu0 %v4220
        %v4705 = vpop.f32.mrb[0].mxu0
        %v4706 = vadd.f32 %v4481, %v4705
        %v4707 = vpop.f32.mrb[0].mxu0
        %4708 = vmatprep.mubr.f32.mxu0 0.0
        %4709 = vmatmul.mubr.f32.gmra.mrb[0].mxu0 %v4221
        %v4710 = vpop.f32.mrb[0].mxu0
        %v4711 = vadd.f32 %v4486, %v4710
        %v4712 = vpop.f32.mrb[0].mxu0
        %4713 = vmatprep.mubr.f32.mxu0 0.0
        %4714 = vmatmul.mubr.f32.gmra.mrb[0].mxu0 %v4222
        %v4715 = vpop.f32.mrb[0].mxu0
        %v4716 = vadd.f32 %v4491, %v4715
        %v4717 = vpop.f32.mrb[0].mxu0
        %4718 = vmatprep.mubr.f32.mxu0 0.0
        %4719 = vmatmul.mubr.f32.gmra.mrb[0].mxu0 %v4223
        %v4720 = vpop.f32.mrb[0].mxu0
        %v4721 = vadd.f32 %v4496, %v4720
        %v4722 = vpop.f32.mrb[0].mxu0
        %4723 = vdwg.mxu0
        %v4724 = vadd.f32 %v3998, %v4566
        %v4725 = vadd.f32 %v3999, %v4571
        %v4726 = vadd.f32 %v4000, %v4576
        %v4727 = vadd.f32 %v4001, %v4581
        %v4728 = vadd.f32 %v4002, %v4586
        %v4729 = vadd.f32 %v4003, %v4591
        %v4730 = vadd.f32 %v4004, %v4596
        %v4731 = vadd.f32 %v4005, %v4601
        %v4732 = vadd.f32 %v4006, %v4606
        %v4733 = vadd.f32 %v4007, %v4611
        %v4734 = vadd.f32 %v4008, %v4616
        %v4735 = vadd.f32 %v4009, %v4621
        %v4736 = vadd.f32 %v4010, %v4626
        %v4737 = vadd.f32 %v4011, %v4631
        %v4738 = vadd.f32 %v4012, %v4636
        %v4739 = vadd.f32 %v4013, %v4641
        %v4740 = vadd.f32 %v4014, %v4646
        %v4741 = vadd.f32 %v4015, %v4651
        %v4742 = vadd.f32 %v4016, %v4656
        %v4743 = vadd.f32 %v4017, %v4661
        %v4744 = vadd.f32 %v4018, %v4666
        %v4745 = vadd.f32 %v4019, %v4671
        %v4746 = vadd.f32 %v4020, %v4676
        %v4747 = vadd.f32 %v4021, %v4681
        %v4748 = vadd.f32 %v4022, %v4686
        %v4749 = vadd.f32 %v4023, %v4691
        %v4750 = vadd.f32 %v4024, %v4696
        %v4751 = vadd.f32 %v4025, %v4701
        %v4752 = vadd.f32 %v4026, %v4706
        %v4753 = vadd.f32 %v4027, %v4711
        %v4754 = vadd.f32 %v4028, %v4716
        %v4755 = vadd.f32 %v4029, %v4721
        %s4756 = scalar_lea.vmem [#allocation6], 384
        %v4757 = vld [vmem:[%s4756] sm:$0xff]
        %v4758 = vld [vmem:[%s4756 + $0x8] sm:$0xff]
        %v4759 = vld [vmem:[%s4756 + $0x10] sm:$0xff]
        %v4760 = vld [vmem:[%s4756 + $0x18] sm:$0xff]
        %v4761 = vld [vmem:[%s4756 + $0x20] sm:$0xff]
        %v4762 = vld [vmem:[%s4756 + $0x28] sm:$0xff]
        %v4763 = vld [vmem:[%s4756 + $0x30] sm:$0xff]
        %v4764 = vld [vmem:[%s4756 + $0x38] sm:$0xff]
        %v4765 = vld [vmem:[%s4756 + $0x40] sm:$0xff]
        %v4766 = vld [vmem:[%s4756 + $0x48] sm:$0xff]
        %v4767 = vld [vmem:[%s4756 + $0x50] sm:$0xff]
        %v4768 = vld [vmem:[%s4756 + $0x58] sm:$0xff]
        %v4769 = vld [vmem:[%s4756 + $0x60] sm:$0xff]
        %v4770 = vld [vmem:[%s4756 + $0x68] sm:$0xff]
        %v4771 = vld [vmem:[%s4756 + $0x70] sm:$0xff]
        %v4772 = vld [vmem:[%s4756 + $0x78] sm:$0xff]
        %v4773 = vld [vmem:[%s4756 + $0x80] sm:$0xff]
        %v4774 = vld [vmem:[%s4756 + $0x88] sm:$0xff]
        %v4775 = vld [vmem:[%s4756 + $0x90] sm:$0xff]
        %v4776 = vld [vmem:[%s4756 + $0x98] sm:$0xff]
        %v4777 = vld [vmem:[%s4756 + $0xa0] sm:$0xff]
        %v4778 = vld [vmem:[%s4756 + $0xa8] sm:$0xff]
        %v4779 = vld [vmem:[%s4756 + $0xb0] sm:$0xff]
        %v4780 = vld [vmem:[%s4756 + $0xb8] sm:$0xff]
        %v4781 = vld [vmem:[%s4756 + $0xc0] sm:$0xff]
        %v4782 = vld [vmem:[%s4756 + $0xc8] sm:$0xff]
        %v4783 = vld [vmem:[%s4756 + $0xd0] sm:$0xff]
        %v4784 = vld [vmem:[%s4756 + $0xd8] sm:$0xff]
        %v4785 = vld [vmem:[%s4756 + $0xe0] sm:$0xff]
        %v4786 = vld [vmem:[%s4756 + $0xe8] sm:$0xff]
        %v4787 = vld [vmem:[%s4756 + $0xf0] sm:$0xff]
        %v4788 = vld [vmem:[%s4756 + $0xf8] sm:$0xff]
        %v4789 = vld [vmem:[%s4756 + $0x100] sm:$0xff]
        %v4790 = vld [vmem:[%s4756 + $0x108] sm:$0xff]
        %v4791 = vld [vmem:[%s4756 + $0x110] sm:$0xff]
        %v4792 = vld [vmem:[%s4756 + $0x118] sm:$0xff]
        %v4793 = vld [vmem:[%s4756 + $0x120] sm:$0xff]
        %v4794 = vld [vmem:[%s4756 + $0x128] sm:$0xff]
        %v4795 = vld [vmem:[%s4756 + $0x130] sm:$0xff]
        %v4796 = vld [vmem:[%s4756 + $0x138] sm:$0xff]
        %v4797 = vld [vmem:[%s4756 + $0x140] sm:$0xff]
        %v4798 = vld [vmem:[%s4756 + $0x148] sm:$0xff]
        %v4799 = vld [vmem:[%s4756 + $0x150] sm:$0xff]
        %v4800 = vld [vmem:[%s4756 + $0x158] sm:$0xff]
        %v4801 = vld [vmem:[%s4756 + $0x160] sm:$0xff]
        %v4802 = vld [vmem:[%s4756 + $0x168] sm:$0xff]
        %v4803 = vld [vmem:[%s4756 + $0x170] sm:$0xff]
        %v4804 = vld [vmem:[%s4756 + $0x178] sm:$0xff]
        %4805 = vmatprep.subr.mxu0 0.0
        %4806 = vmatpush1.msra.mxu0 %v4757
        %4807 = vmatprep.subr.mxu0 0.0
        %4808 = vmatpush1.msra.mxu0 %v4758
        %4809 = vmatprep.subr.mxu0 0.0
        %4810 = vmatpush1.msra.mxu0 %v4759
        %4811 = vmatprep.subr.mxu0 0.0
        %4812 = vmatpush1.msra.mxu0 %v4760
        %4813 = vmatprep.subr.mxu0 0.0
        %4814 = vmatpush1.msra.mxu0 %v4761
        %4815 = vmatprep.subr.mxu0 0.0
        %4816 = vmatpush1.msra.mxu0 %v4762
        %4817 = vmatprep.subr.mxu0 0.0
        %4818 = vmatpush1.msra.mxu0 %v4763
        %4819 = vmatprep.subr.mxu0 0.0
        %4820 = vmatpush1.msra.mxu0 %v4764
        %4821 = vmatprep.subr.mxu0 0.0
        %4822 = vmatpush1.msra.mxu0 %v4765
        %4823 = vmatprep.subr.mxu0 0.0
        %4824 = vmatpush1.msra.mxu0 %v4766
        %4825 = vmatprep.subr.mxu0 0.0
        %4826 = vmatpush1.msra.mxu0 %v4767
        %4827 = vmatprep.subr.mxu0 0.0
        %4828 = vmatpush1.msra.mxu0 %v4768
        %4829 = vmatprep.subr.mxu0 0.0
        %4830 = vmatpush1.msra.mxu0 %v4769
        %4831 = vmatprep.subr.mxu0 0.0
        %4832 = vmatpush1.msra.mxu0 %v4770
        %4833 = vmatprep.subr.mxu0 0.0
        %4834 = vmatpush1.msra.mxu0 %v4771
        %4835 = vmatprep.subr.mxu0 0.0
        %4836 = vmatpush1.msra.mxu0 %v4772
        %4837 = vmatprep.subr.mxu0 0.0
        %4838 = vmatpush1.msra.mxu0 %v4773
        %4839 = vmatprep.subr.mxu0 0.0
        %4840 = vmatpush1.msra.mxu0 %v4774
        %4841 = vmatprep.subr.mxu0 0.0
        %4842 = vmatpush1.msra.mxu0 %v4775
        %4843 = vmatprep.subr.mxu0 0.0
        %4844 = vmatpush1.msra.mxu0 %v4776
        %4845 = vmatprep.subr.mxu0 0.0
        %4846 = vmatpush1.msra.mxu0 %v4777
        %4847 = vmatprep.subr.mxu0 0.0
        %4848 = vmatpush1.msra.mxu0 %v4778
        %4849 = vmatprep.subr.mxu0 0.0
        %4850 = vmatpush1.msra.mxu0 %v4779
        %4851 = vmatprep.subr.mxu0 0.0
        %4852 = vmatpush1.msra.mxu0 %v4780
        %4853 = vmatprep.subr.mxu0 0.0
        %4854 = vmatpush1.msra.mxu0 %v4781
        %4855 = vmatprep.subr.mxu0 0.0
        %4856 = vmatpush1.msra.mxu0 %v4782
        %4857 = vmatprep.subr.mxu0 0.0
        %4858 = vmatpush1.msra.mxu0 %v4783
        %4859 = vmatprep.subr.mxu0 0.0
        %4860 = vmatpush1.msra.mxu0 %v4784
        %4861 = vmatprep.subr.mxu0 0.0
        %4862 = vmatpush1.msra.mxu0 %v4785
        %4863 = vmatprep.subr.mxu0 0.0
        %4864 = vmatpush1.msra.mxu0 %v4786
        %4865 = vmatprep.subr.mxu0 0.0
        %4866 = vmatpush1.msra.mxu0 %v4787
        %4867 = vmatprep.subr.mxu0 0.0
        %4868 = vmatpush1.msra.mxu0 %v4788
        %4869 = vmatprep.mubr.f32.mxu0 %v3927
        %4870 = vmatmul.mubr.f32.gmra.mrb[0].mxu0 %v4095
        %v4871 = vpop.f32.mrb[0].mxu0
        %v4872 = vadd.f32 0.0, %v4871
        %v4873 = vpop.f32.mrb[0].mxu0
        %4874 = vmatprep.mubr.f32.mxu0 %v3928
        %4875 = vmatmul.mubr.f32.gmra.mrb[0].mxu0 %v4096
        %v4876 = vpop.f32.mrb[0].mxu0
        %v4877 = vadd.f32 0.0, %v4876
        %v4878 = vpop.f32.mrb[0].mxu0
        %4879 = vmatprep.mubr.f32.mxu0 %v3929
        %4880 = vmatmul.mubr.f32.gmra.mrb[0].mxu0 %v4097
        %v4881 = vpop.f32.mrb[0].mxu0
        %v4882 = vadd.f32 0.0, %v4881
        %v4883 = vpop.f32.mrb[0].mxu0
        %4884 = vmatprep.mubr.f32.mxu0 %v3930
        %4885 = vmatmul.mubr.f32.gmra.mrb[0].mxu0 %v4098
        %v4886 = vpop.f32.mrb[0].mxu0
        %v4887 = vadd.f32 0.0, %v4886
        %v4888 = vpop.f32.mrb[0].mxu0
        %4889 = vmatprep.mubr.f32.mxu0 %v3931
        %4890 = vmatmul.mubr.f32.gmra.mrb[0].mxu0 %v4099
        %v4891 = vpop.f32.mrb[0].mxu0
        %v4892 = vadd.f32 0.0, %v4891
        %v4893 = vpop.f32.mrb[0].mxu0
        %4894 = vmatprep.mubr.f32.mxu0 %v3932
        %4895 = vmatmul.mubr.f32.gmra.mrb[0].mxu0 %v4100
        %v4896 = vpop.f32.mrb[0].mxu0
        %v4897 = vadd.f32 0.0, %v4896
        %v4898 = vpop.f32.mrb[0].mxu0
        %4899 = vmatprep.mubr.f32.mxu0 %v3933
        %4900 = vmatmul.mubr.f32.gmra.mrb[0].mxu0 %v4101
        %v4901 = vpop.f32.mrb[0].mxu0
        %v4902 = vadd.f32 0.0, %v4901
        %v4903 = vpop.f32.mrb[0].mxu0
        %4904 = vmatprep.mubr.f32.mxu0 %v3934
        %4905 = vmatmul.mubr.f32.gmra.mrb[0].mxu0 %v4102
        %v4906 = vpop.f32.mrb[0].mxu0
        %v4907 = vadd.f32 0.0, %v4906
        %v4908 = vpop.f32.mrb[0].mxu0
        %4909 = vmatprep.mubr.f32.mxu0 %v3935
        %4910 = vmatmul.mubr.f32.gmra.mrb[0].mxu0 %v4103
        %v4911 = vpop.f32.mrb[0].mxu0
        %v4912 = vadd.f32 0.0, %v4911
        %v4913 = vpop.f32.mrb[0].mxu0
        %4914 = vmatprep.mubr.f32.mxu0 %v3936
        %4915 = vmatmul.mubr.f32.gmra.mrb[0].mxu0 %v4104
        %v4916 = vpop.f32.mrb[0].mxu0
        %v4917 = vadd.f32 0.0, %v4916
        %v4918 = vpop.f32.mrb[0].mxu0
        %4919 = vmatprep.mubr.f32.mxu0 %v3937
        %4920 = vmatmul.mubr.f32.gmra.mrb[0].mxu0 %v4105
        %v4921 = vpop.f32.mrb[0].mxu0
        %v4922 = vadd.f32 0.0, %v4921
        %v4923 = vpop.f32.mrb[0].mxu0
        %4924 = vmatprep.mubr.f32.mxu0 %v3938
        %4925 = vmatmul.mubr.f32.gmra.mrb[0].mxu0 %v4106
        %v4926 = vpop.f32.mrb[0].mxu0
        %v4927 = vadd.f32 0.0, %v4926
        %v4928 = vpop.f32.mrb[0].mxu0
        %4929 = vmatprep.mubr.f32.mxu0 %v3939
        %4930 = vmatmul.mubr.f32.gmra.mrb[0].mxu0 %v4107
        %v4931 = vpop.f32.mrb[0].mxu0
        %v4932 = vadd.f32 0.0, %v4931
        %v4933 = vpop.f32.mrb[0].mxu0
        %4934 = vmatprep.mubr.f32.mxu0 %v3940
        %4935 = vmatmul.mubr.f32.gmra.mrb[0].mxu0 %v4108
        %v4936 = vpop.f32.mrb[0].mxu0
        %v4937 = vadd.f32 0.0, %v4936
        %v4938 = vpop.f32.mrb[0].mxu0
        %4939 = vmatprep.mubr.f32.mxu0 %v3941
        %4940 = vmatmul.mubr.f32.gmra.mrb[0].mxu0 %v4109
        %v4941 = vpop.f32.mrb[0].mxu0
        %v4942 = vadd.f32 0.0, %v4941
        %v4943 = vpop.f32.mrb[0].mxu0
        %4944 = vmatprep.mubr.f32.mxu0 %v3942
        %4945 = vmatmul.mubr.f32.gmra.mrb[0].mxu0 %v4110
        %v4946 = vpop.f32.mrb[0].mxu0
        %v4947 = vadd.f32 0.0, %v4946
        %v4948 = vpop.f32.mrb[0].mxu0
        %4949 = vmatprep.mubr.f32.mxu0 %v3943
        %4950 = vmatmul.mubr.f32.gmra.mrb[0].mxu0 %v4111
        %v4951 = vpop.f32.mrb[0].mxu0
        %v4952 = vadd.f32 0.0, %v4951
        %v4953 = vpop.f32.mrb[0].mxu0
        %4954 = vmatprep.mubr.f32.mxu0 %v3944
        %4955 = vmatmul.mubr.f32.gmra.mrb[0].mxu0 %v4112
        %v4956 = vpop.f32.mrb[0].mxu0
        %v4957 = vadd.f32 0.0, %v4956
        %v4958 = vpop.f32.mrb[0].mxu0
        %4959 = vmatprep.mubr.f32.mxu0 %v3945
        %4960 = vmatmul.mubr.f32.gmra.mrb[0].mxu0 %v4113
        %v4961 = vpop.f32.mrb[0].mxu0
        %v4962 = vadd.f32 0.0, %v4961
        %v4963 = vpop.f32.mrb[0].mxu0
        %4964 = vmatprep.mubr.f32.mxu0 %v3946
        %4965 = vmatmul.mubr.f32.gmra.mrb[0].mxu0 %v4114
        %v4966 = vpop.f32.mrb[0].mxu0
        %v4967 = vadd.f32 0.0, %v4966
        %v4968 = vpop.f32.mrb[0].mxu0
        %4969 = vmatprep.mubr.f32.mxu0 %v3947
        %4970 = vmatmul.mubr.f32.gmra.mrb[0].mxu0 %v4115
        %v4971 = vpop.f32.mrb[0].mxu0
        %v4972 = vadd.f32 0.0, %v4971
        %v4973 = vpop.f32.mrb[0].mxu0
        %4974 = vmatprep.mubr.f32.mxu0 %v3948
        %4975 = vmatmul.mubr.f32.gmra.mrb[0].mxu0 %v4116
        %v4976 = vpop.f32.mrb[0].mxu0
        %v4977 = vadd.f32 0.0, %v4976
        %v4978 = vpop.f32.mrb[0].mxu0
        %4979 = vmatprep.mubr.f32.mxu0 %v3949
        %4980 = vmatmul.mubr.f32.gmra.mrb[0].mxu0 %v4117
        %v4981 = vpop.f32.mrb[0].mxu0
        %v4982 = vadd.f32 0.0, %v4981
        %v4983 = vpop.f32.mrb[0].mxu0
        %4984 = vmatprep.mubr.f32.mxu0 %v3950
        %4985 = vmatmul.mubr.f32.gmra.mrb[0].mxu0 %v4118
        %v4986 = vpop.f32.mrb[0].mxu0
        %v4987 = vadd.f32 0.0, %v4986
        %v4988 = vpop.f32.mrb[0].mxu0
        %4989 = vmatprep.mubr.f32.mxu0 %v3951
        %4990 = vmatmul.mubr.f32.gmra.mrb[0].mxu0 %v4119
        %v4991 = vpop.f32.mrb[0].mxu0
        %v4992 = vadd.f32 0.0, %v4991
        %v4993 = vpop.f32.mrb[0].mxu0
        %4994 = vmatprep.mubr.f32.mxu0 %v3952
        %4995 = vmatmul.mubr.f32.gmra.mrb[0].mxu0 %v4120
        %v4996 = vpop.f32.mrb[0].mxu0
        %v4997 = vadd.f32 0.0, %v4996
        %v4998 = vpop.f32.mrb[0].mxu0
        %4999 = vmatprep.mubr.f32.mxu0 %v3953
        %5000 = vmatmul.mubr.f32.gmra.mrb[0].mxu0 %v4121
        %v5001 = vpop.f32.mrb[0].mxu0
        %v5002 = vadd.f32 0.0, %v5001
        %v5003 = vpop.f32.mrb[0].mxu0
        %5004 = vmatprep.mubr.f32.mxu0 %v3954
        %5005 = vmatmul.mubr.f32.gmra.mrb[0].mxu0 %v4122
        %v5006 = vpop.f32.mrb[0].mxu0
        %v5007 = vadd.f32 0.0, %v5006
        %v5008 = vpop.f32.mrb[0].mxu0
        %5009 = vmatprep.mubr.f32.mxu0 %v3955
        %5010 = vmatmul.mubr.f32.gmra.mrb[0].mxu0 %v4123
        %v5011 = vpop.f32.mrb[0].mxu0
        %v5012 = vadd.f32 0.0, %v5011
        %v5013 = vpop.f32.mrb[0].mxu0
        %5014 = vmatprep.mubr.f32.mxu0 %v3956
        %5015 = vmatmul.mubr.f32.gmra.mrb[0].mxu0 %v4124
        %v5016 = vpop.f32.mrb[0].mxu0
        %v5017 = vadd.f32 0.0, %v5016
        %v5018 = vpop.f32.mrb[0].mxu0
        %5019 = vmatprep.mubr.f32.mxu0 %v3957
        %5020 = vmatmul.mubr.f32.gmra.mrb[0].mxu0 %v4125
        %v5021 = vpop.f32.mrb[0].mxu0
        %v5022 = vadd.f32 0.0, %v5021
        %v5023 = vpop.f32.mrb[0].mxu0
        %5024 = vmatprep.mubr.f32.mxu0 %v3958
        %5025 = vmatmul.mubr.f32.gmra.mrb[0].mxu0 %v4126
        %v5026 = vpop.f32.mrb[0].mxu0
        %v5027 = vadd.f32 0.0, %v5026
        %v5028 = vpop.f32.mrb[0].mxu0
        %5029 = vdwg.mxu0
        %5030 = vmatprep.subr.mxu0 0.0
        %5031 = vmatpush1.msra.mxu0 %v4789
        %5032 = vmatprep.subr.mxu0 0.0
        %5033 = vmatpush1.msra.mxu0 %v4790
        %5034 = vmatprep.subr.mxu0 0.0
        %5035 = vmatpush1.msra.mxu0 %v4791
        %5036 = vmatprep.subr.mxu0 0.0
        %5037 = vmatpush1.msra.mxu0 %v4792
        %5038 = vmatprep.subr.mxu0 0.0
        %5039 = vmatpush1.msra.mxu0 %v4793
        %5040 = vmatprep.subr.mxu0 0.0
        %5041 = vmatpush1.msra.mxu0 %v4794
        %5042 = vmatprep.subr.mxu0 0.0
        %5043 = vmatpush1.msra.mxu0 %v4795
        %5044 = vmatprep.subr.mxu0 0.0
        %5045 = vmatpush1.msra.mxu0 %v4796
        %5046 = vmatprep.subr.mxu0 0.0
        %5047 = vmatpush1.msra.mxu0 %v4797
        %5048 = vmatprep.subr.mxu0 0.0
        %5049 = vmatpush1.msra.mxu0 %v4798
        %5050 = vmatprep.subr.mxu0 0.0
        %5051 = vmatpush1.msra.mxu0 %v4799
        %5052 = vmatprep.subr.mxu0 0.0
        %5053 = vmatpush1.msra.mxu0 %v4800
        %5054 = vmatprep.subr.mxu0 0.0
        %5055 = vmatpush1.msra.mxu0 %v4801
        %5056 = vmatprep.subr.mxu0 0.0
        %5057 = vmatpush1.msra.mxu0 %v4802
        %5058 = vmatprep.subr.mxu0 0.0
        %5059 = vmatpush1.msra.mxu0 %v4803
        %5060 = vmatprep.subr.mxu0 0.0
        %5061 = vmatpush1.msra.mxu0 %v4804
        %5062 = vmatprep.subr.mxu0 0.0
        %5063 = vmatpush1.msra.mxu0 0.0
        %5064 = vmatprep.subr.mxu0 0.0
        %5065 = vmatpush1.msra.mxu0 0.0
        %5066 = vmatprep.subr.mxu0 0.0
        %5067 = vmatpush1.msra.mxu0 0.0
        %5068 = vmatprep.subr.mxu0 0.0
        %5069 = vmatpush1.msra.mxu0 0.0
        %5070 = vmatprep.subr.mxu0 0.0
        %5071 = vmatpush1.msra.mxu0 0.0
        %5072 = vmatprep.subr.mxu0 0.0
        %5073 = vmatpush1.msra.mxu0 0.0
        %5074 = vmatprep.subr.mxu0 0.0
        %5075 = vmatpush1.msra.mxu0 0.0
        %5076 = vmatprep.subr.mxu0 0.0
        %5077 = vmatpush1.msra.mxu0 0.0
        %5078 = vmatprep.subr.mxu0 0.0
        %5079 = vmatpush1.msra.mxu0 0.0
        %5080 = vmatprep.subr.mxu0 0.0
        %5081 = vmatpush1.msra.mxu0 0.0
        %5082 = vmatprep.subr.mxu0 0.0
        %5083 = vmatpush1.msra.mxu0 0.0
        %5084 = vmatprep.subr.mxu0 0.0
        %5085 = vmatpush1.msra.mxu0 0.0
        %5086 = vmatprep.subr.mxu0 0.0
        %5087 = vmatpush1.msra.mxu0 0.0
        %5088 = vmatprep.subr.mxu0 0.0
        %5089 = vmatpush1.msra.mxu0 0.0
        %5090 = vmatprep.subr.mxu0 0.0
        %5091 = vmatpush1.msra.mxu0 0.0
        %5092 = vmatprep.subr.mxu0 0.0
        %5093 = vmatpush1.msra.mxu0 0.0
        %5094 = vmatprep.mubr.f32.mxu0 0.0
        %5095 = vmatmul.mubr.f32.gmra.mrb[0].mxu0 %v4194
        %v5096 = vpop.f32.mrb[0].mxu0
        %v5097 = vadd.f32 %v4872, %v5096
        %v5098 = vpop.f32.mrb[0].mxu0
        %5099 = vmatprep.mubr.f32.mxu0 0.0
        %5100 = vmatmul.mubr.f32.gmra.mrb[0].mxu0 %v4195
        %v5101 = vpop.f32.mrb[0].mxu0
        %v5102 = vadd.f32 %v4877, %v5101
        %v5103 = vpop.f32.mrb[0].mxu0
        %5104 = vmatprep.mubr.f32.mxu0 0.0
        %5105 = vmatmul.mubr.f32.gmra.mrb[0].mxu0 %v4196
        %v5106 = vpop.f32.mrb[0].mxu0
        %v5107 = vadd.f32 %v4882, %v5106
        %v5108 = vpop.f32.mrb[0].mxu0
        %5109 = vmatprep.mubr.f32.mxu0 0.0
        %5110 = vmatmul.mubr.f32.gmra.mrb[0].mxu0 %v4197
        %v5111 = vpop.f32.mrb[0].mxu0
        %v5112 = vadd.f32 %v4887, %v5111
        %v5113 = vpop.f32.mrb[0].mxu0
        %5114 = vmatprep.mubr.f32.mxu0 0.0
        %5115 = vmatmul.mubr.f32.gmra.mrb[0].mxu0 %v4198
        %v5116 = vpop.f32.mrb[0].mxu0
        %v5117 = vadd.f32 %v4892, %v5116
        %v5118 = vpop.f32.mrb[0].mxu0
        %5119 = vmatprep.mubr.f32.mxu0 0.0
        %5120 = vmatmul.mubr.f32.gmra.mrb[0].mxu0 %v4199
        %v5121 = vpop.f32.mrb[0].mxu0
        %v5122 = vadd.f32 %v4897, %v5121
        %v5123 = vpop.f32.mrb[0].mxu0
        %5124 = vmatprep.mubr.f32.mxu0 0.0
        %5125 = vmatmul.mubr.f32.gmra.mrb[0].mxu0 %v4200
        %v5126 = vpop.f32.mrb[0].mxu0
        %v5127 = vadd.f32 %v4902, %v5126
        %v5128 = vpop.f32.mrb[0].mxu0
        %5129 = vmatprep.mubr.f32.mxu0 0.0
        %5130 = vmatmul.mubr.f32.gmra.mrb[0].mxu0 %v4201
        %v5131 = vpop.f32.mrb[0].mxu0
        %v5132 = vadd.f32 %v4907, %v5131
        %v5133 = vpop.f32.mrb[0].mxu0
        %5134 = vmatprep.mubr.f32.mxu0 0.0
        %5135 = vmatmul.mubr.f32.gmra.mrb[0].mxu0 %v4202
        %v5136 = vpop.f32.mrb[0].mxu0
        %v5137 = vadd.f32 %v4912, %v5136
        %v5138 = vpop.f32.mrb[0].mxu0
        %5139 = vmatprep.mubr.f32.mxu0 0.0
        %5140 = vmatmul.mubr.f32.gmra.mrb[0].mxu0 %v4203
        %v5141 = vpop.f32.mrb[0].mxu0
        %v5142 = vadd.f32 %v4917, %v5141
        %v5143 = vpop.f32.mrb[0].mxu0
        %5144 = vmatprep.mubr.f32.mxu0 0.0
        %5145 = vmatmul.mubr.f32.gmra.mrb[0].mxu0 %v4204
        %v5146 = vpop.f32.mrb[0].mxu0
        %v5147 = vadd.f32 %v4922, %v5146
        %v5148 = vpop.f32.mrb[0].mxu0
        %5149 = vmatprep.mubr.f32.mxu0 0.0
        %5150 = vmatmul.mubr.f32.gmra.mrb[0].mxu0 %v4205
        %v5151 = vpop.f32.mrb[0].mxu0
        %v5152 = vadd.f32 %v4927, %v5151
        %v5153 = vpop.f32.mrb[0].mxu0
        %5154 = vmatprep.mubr.f32.mxu0 0.0
        %5155 = vmatmul.mubr.f32.gmra.mrb[0].mxu0 %v4206
        %v5156 = vpop.f32.mrb[0].mxu0
        %v5157 = vadd.f32 %v4932, %v5156
        %v5158 = vpop.f32.mrb[0].mxu0
        %5159 = vmatprep.mubr.f32.mxu0 0.0
        %5160 = vmatmul.mubr.f32.gmra.mrb[0].mxu0 %v4207
        %v5161 = vpop.f32.mrb[0].mxu0
        %v5162 = vadd.f32 %v4937, %v5161
        %v5163 = vpop.f32.mrb[0].mxu0
        %5164 = vmatprep.mubr.f32.mxu0 0.0
        %5165 = vmatmul.mubr.f32.gmra.mrb[0].mxu0 %v4208
        %v5166 = vpop.f32.mrb[0].mxu0
        %v5167 = vadd.f32 %v4942, %v5166
        %v5168 = vpop.f32.mrb[0].mxu0
        %5169 = vmatprep.mubr.f32.mxu0 0.0
        %5170 = vmatmul.mubr.f32.gmra.mrb[0].mxu0 %v4209
        %v5171 = vpop.f32.mrb[0].mxu0
        %v5172 = vadd.f32 %v4947, %v5171
        %v5173 = vpop.f32.mrb[0].mxu0
        %5174 = vmatprep.mubr.f32.mxu0 0.0
        %5175 = vmatmul.mubr.f32.gmra.mrb[0].mxu0 %v4210
        %v5176 = vpop.f32.mrb[0].mxu0
        %v5177 = vadd.f32 %v4952, %v5176
        %v5178 = vpop.f32.mrb[0].mxu0
        %5179 = vmatprep.mubr.f32.mxu0 0.0
        %5180 = vmatmul.mubr.f32.gmra.mrb[0].mxu0 %v4211
        %v5181 = vpop.f32.mrb[0].mxu0
        %v5182 = vadd.f32 %v4957, %v5181
        %v5183 = vpop.f32.mrb[0].mxu0
        %5184 = vmatprep.mubr.f32.mxu0 0.0
        %5185 = vmatmul.mubr.f32.gmra.mrb[0].mxu0 %v4212
        %v5186 = vpop.f32.mrb[0].mxu0
        %v5187 = vadd.f32 %v4962, %v5186
        %v5188 = vpop.f32.mrb[0].mxu0
        %5189 = vmatprep.mubr.f32.mxu0 0.0
        %5190 = vmatmul.mubr.f32.gmra.mrb[0].mxu0 %v4213
        %v5191 = vpop.f32.mrb[0].mxu0
        %v5192 = vadd.f32 %v4967, %v5191
        %v5193 = vpop.f32.mrb[0].mxu0
        %5194 = vmatprep.mubr.f32.mxu0 0.0
        %5195 = vmatmul.mubr.f32.gmra.mrb[0].mxu0 %v4214
        %v5196 = vpop.f32.mrb[0].mxu0
        %v5197 = vadd.f32 %v4972, %v5196
        %v5198 = vpop.f32.mrb[0].mxu0
        %5199 = vmatprep.mubr.f32.mxu0 0.0
        %5200 = vmatmul.mubr.f32.gmra.mrb[0].mxu0 %v4215
        %v5201 = vpop.f32.mrb[0].mxu0
        %v5202 = vadd.f32 %v4977, %v5201
        %v5203 = vpop.f32.mrb[0].mxu0
        %5204 = vmatprep.mubr.f32.mxu0 0.0
        %5205 = vmatmul.mubr.f32.gmra.mrb[0].mxu0 %v4216
        %v5206 = vpop.f32.mrb[0].mxu0
        %v5207 = vadd.f32 %v4982, %v5206
        %v5208 = vpop.f32.mrb[0].mxu0
        %5209 = vmatprep.mubr.f32.mxu0 0.0
        %5210 = vmatmul.mubr.f32.gmra.mrb[0].mxu0 %v4217
        %v5211 = vpop.f32.mrb[0].mxu0
        %v5212 = vadd.f32 %v4987, %v5211
        %v5213 = vpop.f32.mrb[0].mxu0
        %5214 = vmatprep.mubr.f32.mxu0 0.0
        %5215 = vmatmul.mubr.f32.gmra.mrb[0].mxu0 %v4218
        %v5216 = vpop.f32.mrb[0].mxu0
        %v5217 = vadd.f32 %v4992, %v5216
        %v5218 = vpop.f32.mrb[0].mxu0
        %5219 = vmatprep.mubr.f32.mxu0 0.0
        %5220 = vmatmul.mubr.f32.gmra.mrb[0].mxu0 %v4219
        %v5221 = vpop.f32.mrb[0].mxu0
        %v5222 = vadd.f32 %v4997, %v5221
        %v5223 = vpop.f32.mrb[0].mxu0
        %5224 = vmatprep.mubr.f32.mxu0 0.0
        %5225 = vmatmul.mubr.f32.gmra.mrb[0].mxu0 %v4220
        %v5226 = vpop.f32.mrb[0].mxu0
        %v5227 = vadd.f32 %v5002, %v5226
        %v5228 = vpop.f32.mrb[0].mxu0
        %5229 = vmatprep.mubr.f32.mxu0 0.0
        %5230 = vmatmul.mubr.f32.gmra.mrb[0].mxu0 %v4221
        %v5231 = vpop.f32.mrb[0].mxu0
        %v5232 = vadd.f32 %v5007, %v5231
        %v5233 = vpop.f32.mrb[0].mxu0
        %5234 = vmatprep.mubr.f32.mxu0 0.0
        %5235 = vmatmul.mubr.f32.gmra.mrb[0].mxu0 %v4222
        %v5236 = vpop.f32.mrb[0].mxu0
        %v5237 = vadd.f32 %v5012, %v5236
        %v5238 = vpop.f32.mrb[0].mxu0
        %5239 = vmatprep.mubr.f32.mxu0 0.0
        %5240 = vmatmul.mubr.f32.gmra.mrb[0].mxu0 %v4223
        %v5241 = vpop.f32.mrb[0].mxu0
        %v5242 = vadd.f32 %v5017, %v5241
        %v5243 = vpop.f32.mrb[0].mxu0
        %5244 = vmatprep.mubr.f32.mxu0 0.0
        %5245 = vmatmul.mubr.f32.gmra.mrb[0].mxu0 %v4224
        %v5246 = vpop.f32.mrb[0].mxu0
        %v5247 = vadd.f32 %v5022, %v5246
        %v5248 = vpop.f32.mrb[0].mxu0
        %5249 = vmatprep.mubr.f32.mxu0 0.0
        %5250 = vmatmul.mubr.f32.gmra.mrb[0].mxu0 %v4225
        %v5251 = vpop.f32.mrb[0].mxu0
        %v5252 = vadd.f32 %v5027, %v5251
        %v5253 = vpop.f32.mrb[0].mxu0
        %5254 = vdwg.mxu0
        %v5255 = vadd.f32 %v4724, %v5097
        %v5256 = vadd.f32 %v4725, %v5102
        %v5257 = vadd.f32 %v4726, %v5107
        %v5258 = vadd.f32 %v4727, %v5112
        %v5259 = vadd.f32 %v4728, %v5117
        %v5260 = vadd.f32 %v4729, %v5122
        %v5261 = vadd.f32 %v4730, %v5127
        %v5262 = vadd.f32 %v4731, %v5132
        %v5263 = vadd.f32 %v4732, %v5137
        %v5264 = vadd.f32 %v4733, %v5142
        %v5265 = vadd.f32 %v4734, %v5147
        %v5266 = vadd.f32 %v4735, %v5152
        %v5267 = vadd.f32 %v4736, %v5157
        %v5268 = vadd.f32 %v4737, %v5162
        %v5269 = vadd.f32 %v4738, %v5167
        %v5270 = vadd.f32 %v4739, %v5172
        %v5271 = vadd.f32 %v4740, %v5177
        %v5272 = vadd.f32 %v4741, %v5182
        %v5273 = vadd.f32 %v4742, %v5187
        %v5274 = vadd.f32 %v4743, %v5192
        %v5275 = vadd.f32 %v4744, %v5197
        %v5276 = vadd.f32 %v4745, %v5202
        %v5277 = vadd.f32 %v4746, %v5207
        %v5278 = vadd.f32 %v4747, %v5212
        %v5279 = vadd.f32 %v4748, %v5217
        %v5280 = vadd.f32 %v4749, %v5222
        %v5281 = vadd.f32 %v4750, %v5227
        %v5282 = vadd.f32 %v4751, %v5232
        %v5283 = vadd.f32 %v4752, %v5237
        %v5284 = vadd.f32 %v4753, %v5242
        %v5285 = vadd.f32 %v4754, %v5247
        %v5286 = vadd.f32 %v4755, %v5252
        %s5287 = scalar_lea.vmem [#allocation6], 768
        %v5288 = vld [vmem:[%s5287] sm:$0xff]
        %v5289 = vld [vmem:[%s5287 + $0x8] sm:$0xff]
        %v5290 = vld [vmem:[%s5287 + $0x10] sm:$0xff]
        %v5291 = vld [vmem:[%s5287 + $0x18] sm:$0xff]
        %v5292 = vld [vmem:[%s5287 + $0x20] sm:$0xff]
        %v5293 = vld [vmem:[%s5287 + $0x28] sm:$0xff]
        %v5294 = vld [vmem:[%s5287 + $0x30] sm:$0xff]
        %v5295 = vld [vmem:[%s5287 + $0x38] sm:$0xff]
        %v5296 = vld [vmem:[%s5287 + $0x40] sm:$0xff]
        %v5297 = vld [vmem:[%s5287 + $0x48] sm:$0xff]
        %v5298 = vld [vmem:[%s5287 + $0x50] sm:$0xff]
        %v5299 = vld [vmem:[%s5287 + $0x58] sm:$0xff]
        %v5300 = vld [vmem:[%s5287 + $0x60] sm:$0xff]
        %v5301 = vld [vmem:[%s5287 + $0x68] sm:$0xff]
        %v5302 = vld [vmem:[%s5287 + $0x70] sm:$0xff]
        %v5303 = vld [vmem:[%s5287 + $0x78] sm:$0xff]
        %v5304 = vld [vmem:[%s5287 + $0x80] sm:$0xff]
        %v5305 = vld [vmem:[%s5287 + $0x88] sm:$0xff]
        %v5306 = vld [vmem:[%s5287 + $0x90] sm:$0xff]
        %v5307 = vld [vmem:[%s5287 + $0x98] sm:$0xff]
        %v5308 = vld [vmem:[%s5287 + $0xa0] sm:$0xff]
        %v5309 = vld [vmem:[%s5287 + $0xa8] sm:$0xff]
        %v5310 = vld [vmem:[%s5287 + $0xb0] sm:$0xff]
        %v5311 = vld [vmem:[%s5287 + $0xb8] sm:$0xff]
        %v5312 = vld [vmem:[%s5287 + $0xc0] sm:$0xff]
        %v5313 = vld [vmem:[%s5287 + $0xc8] sm:$0xff]
        %v5314 = vld [vmem:[%s5287 + $0xd0] sm:$0xff]
        %v5315 = vld [vmem:[%s5287 + $0xd8] sm:$0xff]
        %v5316 = vld [vmem:[%s5287 + $0xe0] sm:$0xff]
        %v5317 = vld [vmem:[%s5287 + $0xe8] sm:$0xff]
        %v5318 = vld [vmem:[%s5287 + $0xf0] sm:$0xff]
        %v5319 = vld [vmem:[%s5287 + $0xf8] sm:$0xff]
        %v5320 = vld [vmem:[%s5287 + $0x100] sm:$0xff]
        %v5321 = vld [vmem:[%s5287 + $0x108] sm:$0xff]
        %v5322 = vld [vmem:[%s5287 + $0x110] sm:$0xff]
        %v5323 = vld [vmem:[%s5287 + $0x118] sm:$0xff]
        %v5324 = vld [vmem:[%s5287 + $0x120] sm:$0xff]
        %v5325 = vld [vmem:[%s5287 + $0x128] sm:$0xff]
        %v5326 = vld [vmem:[%s5287 + $0x130] sm:$0xff]
        %v5327 = vld [vmem:[%s5287 + $0x138] sm:$0xff]
        %v5328 = vld [vmem:[%s5287 + $0x140] sm:$0xff]
        %v5329 = vld [vmem:[%s5287 + $0x148] sm:$0xff]
        %v5330 = vld [vmem:[%s5287 + $0x150] sm:$0xff]
        %v5331 = vld [vmem:[%s5287 + $0x158] sm:$0xff]
        %v5332 = vld [vmem:[%s5287 + $0x160] sm:$0xff]
        %v5333 = vld [vmem:[%s5287 + $0x168] sm:$0xff]
        %v5334 = vld [vmem:[%s5287 + $0x170] sm:$0xff]
        %v5335 = vld [vmem:[%s5287 + $0x178] sm:$0xff]
        %5336 = vmatprep.subr.mxu0 0.0
        %5337 = vmatpush1.msra.mxu0 %v5288
        %5338 = vmatprep.subr.mxu0 0.0
        %5339 = vmatpush1.msra.mxu0 %v5289
        %5340 = vmatprep.subr.mxu0 0.0
        %5341 = vmatpush1.msra.mxu0 %v5290
        %5342 = vmatprep.subr.mxu0 0.0
        %5343 = vmatpush1.msra.mxu0 %v5291
        %5344 = vmatprep.subr.mxu0 0.0
        %5345 = vmatpush1.msra.mxu0 %v5292
        %5346 = vmatprep.subr.mxu0 0.0
        %5347 = vmatpush1.msra.mxu0 %v5293
        %5348 = vmatprep.subr.mxu0 0.0
        %5349 = vmatpush1.msra.mxu0 %v5294
        %5350 = vmatprep.subr.mxu0 0.0
        %5351 = vmatpush1.msra.mxu0 %v5295
        %5352 = vmatprep.subr.mxu0 0.0
        %5353 = vmatpush1.msra.mxu0 %v5296
        %5354 = vmatprep.subr.mxu0 0.0
        %5355 = vmatpush1.msra.mxu0 %v5297
        %5356 = vmatprep.subr.mxu0 0.0
        %5357 = vmatpush1.msra.mxu0 %v5298
        %5358 = vmatprep.subr.mxu0 0.0
        %5359 = vmatpush1.msra.mxu0 %v5299
        %5360 = vmatprep.subr.mxu0 0.0
        %5361 = vmatpush1.msra.mxu0 %v5300
        %5362 = vmatprep.subr.mxu0 0.0
        %5363 = vmatpush1.msra.mxu0 %v5301
        %5364 = vmatprep.subr.mxu0 0.0
        %5365 = vmatpush1.msra.mxu0 %v5302
        %5366 = vmatprep.subr.mxu0 0.0
        %5367 = vmatpush1.msra.mxu0 %v5303
        %5368 = vmatprep.subr.mxu0 0.0
        %5369 = vmatpush1.msra.mxu0 %v5304
        %5370 = vmatprep.subr.mxu0 0.0
        %5371 = vmatpush1.msra.mxu0 %v5305
        %5372 = vmatprep.subr.mxu0 0.0
        %5373 = vmatpush1.msra.mxu0 %v5306
        %5374 = vmatprep.subr.mxu0 0.0
        %5375 = vmatpush1.msra.mxu0 %v5307
        %5376 = vmatprep.subr.mxu0 0.0
        %5377 = vmatpush1.msra.mxu0 %v5308
        %5378 = vmatprep.subr.mxu0 0.0
        %5379 = vmatpush1.msra.mxu0 %v5309
        %5380 = vmatprep.subr.mxu0 0.0
        %5381 = vmatpush1.msra.mxu0 %v5310
        %5382 = vmatprep.subr.mxu0 0.0
        %5383 = vmatpush1.msra.mxu0 %v5311
        %5384 = vmatprep.subr.mxu0 0.0
        %5385 = vmatpush1.msra.mxu0 %v5312
        %5386 = vmatprep.subr.mxu0 0.0
        %5387 = vmatpush1.msra.mxu0 %v5313
        %5388 = vmatprep.subr.mxu0 0.0
        %5389 = vmatpush1.msra.mxu0 %v5314
        %5390 = vmatprep.subr.mxu0 0.0
        %5391 = vmatpush1.msra.mxu0 %v5315
        %5392 = vmatprep.subr.mxu0 0.0
        %5393 = vmatpush1.msra.mxu0 %v5316
        %5394 = vmatprep.subr.mxu0 0.0
        %5395 = vmatpush1.msra.mxu0 %v5317
        %5396 = vmatprep.subr.mxu0 0.0
        %5397 = vmatpush1.msra.mxu0 %v5318
        %5398 = vmatprep.subr.mxu0 0.0
        %5399 = vmatpush1.msra.mxu0 %v5319
        %5400 = vmatprep.mubr.f32.mxu0 %v3929
        %5401 = vmatmul.mubr.f32.gmra.mrb[0].mxu0 %v4097
        %v5402 = vpop.f32.mrb[0].mxu0
        %v5403 = vadd.f32 0.0, %v5402
        %v5404 = vpop.f32.mrb[0].mxu0
        %5405 = vmatprep.mubr.f32.mxu0 %v3930
        %5406 = vmatmul.mubr.f32.gmra.mrb[0].mxu0 %v4098
        %v5407 = vpop.f32.mrb[0].mxu0
        %v5408 = vadd.f32 0.0, %v5407
        %v5409 = vpop.f32.mrb[0].mxu0
        %5410 = vmatprep.mubr.f32.mxu0 %v3931
        %5411 = vmatmul.mubr.f32.gmra.mrb[0].mxu0 %v4099
        %v5412 = vpop.f32.mrb[0].mxu0
        %v5413 = vadd.f32 0.0, %v5412
        %v5414 = vpop.f32.mrb[0].mxu0
        %5415 = vmatprep.mubr.f32.mxu0 %v3932
        %5416 = vmatmul.mubr.f32.gmra.mrb[0].mxu0 %v4100
        %v5417 = vpop.f32.mrb[0].mxu0
        %v5418 = vadd.f32 0.0, %v5417
        %v5419 = vpop.f32.mrb[0].mxu0
        %5420 = vmatprep.mubr.f32.mxu0 %v3933
        %5421 = vmatmul.mubr.f32.gmra.mrb[0].mxu0 %v4101
        %v5422 = vpop.f32.mrb[0].mxu0
        %v5423 = vadd.f32 0.0, %v5422
        %v5424 = vpop.f32.mrb[0].mxu0
        %5425 = vmatprep.mubr.f32.mxu0 %v3934
        %5426 = vmatmul.mubr.f32.gmra.mrb[0].mxu0 %v4102
        %v5427 = vpop.f32.mrb[0].mxu0
        %v5428 = vadd.f32 0.0, %v5427
        %v5429 = vpop.f32.mrb[0].mxu0
        %5430 = vmatprep.mubr.f32.mxu0 %v3935
        %5431 = vmatmul.mubr.f32.gmra.mrb[0].mxu0 %v4103
        %v5432 = vpop.f32.mrb[0].mxu0
        %v5433 = vadd.f32 0.0, %v5432
        %v5434 = vpop.f32.mrb[0].mxu0
        %5435 = vmatprep.mubr.f32.mxu0 %v3936
        %5436 = vmatmul.mubr.f32.gmra.mrb[0].mxu0 %v4104
        %v5437 = vpop.f32.mrb[0].mxu0
        %v5438 = vadd.f32 0.0, %v5437
        %v5439 = vpop.f32.mrb[0].mxu0
        %5440 = vmatprep.mubr.f32.mxu0 %v3937
        %5441 = vmatmul.mubr.f32.gmra.mrb[0].mxu0 %v4105
        %v5442 = vpop.f32.mrb[0].mxu0
        %v5443 = vadd.f32 0.0, %v5442
        %v5444 = vpop.f32.mrb[0].mxu0
        %5445 = vmatprep.mubr.f32.mxu0 %v3938
        %5446 = vmatmul.mubr.f32.gmra.mrb[0].mxu0 %v4106
        %v5447 = vpop.f32.mrb[0].mxu0
        %v5448 = vadd.f32 0.0, %v5447
        %v5449 = vpop.f32.mrb[0].mxu0
        %5450 = vmatprep.mubr.f32.mxu0 %v3939
        %5451 = vmatmul.mubr.f32.gmra.mrb[0].mxu0 %v4107
        %v5452 = vpop.f32.mrb[0].mxu0
        %v5453 = vadd.f32 0.0, %v5452
        %v5454 = vpop.f32.mrb[0].mxu0
        %5455 = vmatprep.mubr.f32.mxu0 %v3940
        %5456 = vmatmul.mubr.f32.gmra.mrb[0].mxu0 %v4108
        %v5457 = vpop.f32.mrb[0].mxu0
        %v5458 = vadd.f32 0.0, %v5457
        %v5459 = vpop.f32.mrb[0].mxu0
        %5460 = vmatprep.mubr.f32.mxu0 %v3941
        %5461 = vmatmul.mubr.f32.gmra.mrb[0].mxu0 %v4109
        %v5462 = vpop.f32.mrb[0].mxu0
        %v5463 = vadd.f32 0.0, %v5462
        %v5464 = vpop.f32.mrb[0].mxu0
        %5465 = vmatprep.mubr.f32.mxu0 %v3942
        %5466 = vmatmul.mubr.f32.gmra.mrb[0].mxu0 %v4110
        %v5467 = vpop.f32.mrb[0].mxu0
        %v5468 = vadd.f32 0.0, %v5467
        %v5469 = vpop.f32.mrb[0].mxu0
        %5470 = vmatprep.mubr.f32.mxu0 %v3943
        %5471 = vmatmul.mubr.f32.gmra.mrb[0].mxu0 %v4111
        %v5472 = vpop.f32.mrb[0].mxu0
        %v5473 = vadd.f32 0.0, %v5472
        %v5474 = vpop.f32.mrb[0].mxu0
        %5475 = vmatprep.mubr.f32.mxu0 %v3944
        %5476 = vmatmul.mubr.f32.gmra.mrb[0].mxu0 %v4112
        %v5477 = vpop.f32.mrb[0].mxu0
        %v5478 = vadd.f32 0.0, %v5477
        %v5479 = vpop.f32.mrb[0].mxu0
        %5480 = vmatprep.mubr.f32.mxu0 %v3945
        %5481 = vmatmul.mubr.f32.gmra.mrb[0].mxu0 %v4113
        %v5482 = vpop.f32.mrb[0].mxu0
        %v5483 = vadd.f32 0.0, %v5482
        %v5484 = vpop.f32.mrb[0].mxu0
        %5485 = vmatprep.mubr.f32.mxu0 %v3946
        %5486 = vmatmul.mubr.f32.gmra.mrb[0].mxu0 %v4114
        %v5487 = vpop.f32.mrb[0].mxu0
        %v5488 = vadd.f32 0.0, %v5487
        %v5489 = vpop.f32.mrb[0].mxu0
        %5490 = vmatprep.mubr.f32.mxu0 %v3947
        %5491 = vmatmul.mubr.f32.gmra.mrb[0].mxu0 %v4115
        %v5492 = vpop.f32.mrb[0].mxu0
        %v5493 = vadd.f32 0.0, %v5492
        %v5494 = vpop.f32.mrb[0].mxu0
        %5495 = vmatprep.mubr.f32.mxu0 %v3948
        %5496 = vmatmul.mubr.f32.gmra.mrb[0].mxu0 %v4116
        %v5497 = vpop.f32.mrb[0].mxu0
        %v5498 = vadd.f32 0.0, %v5497
        %v5499 = vpop.f32.mrb[0].mxu0
        %5500 = vmatprep.mubr.f32.mxu0 %v3949
        %5501 = vmatmul.mubr.f32.gmra.mrb[0].mxu0 %v4117
        %v5502 = vpop.f32.mrb[0].mxu0
        %v5503 = vadd.f32 0.0, %v5502
        %v5504 = vpop.f32.mrb[0].mxu0
        %5505 = vmatprep.mubr.f32.mxu0 %v3950
        %5506 = vmatmul.mubr.f32.gmra.mrb[0].mxu0 %v4118
        %v5507 = vpop.f32.mrb[0].mxu0
        %v5508 = vadd.f32 0.0, %v5507
        %v5509 = vpop.f32.mrb[0].mxu0
        %5510 = vmatprep.mubr.f32.mxu0 %v3951
        %5511 = vmatmul.mubr.f32.gmra.mrb[0].mxu0 %v4119
        %v5512 = vpop.f32.mrb[0].mxu0
        %v5513 = vadd.f32 0.0, %v5512
        %v5514 = vpop.f32.mrb[0].mxu0
        %5515 = vmatprep.mubr.f32.mxu0 %v3952
        %5516 = vmatmul.mubr.f32.gmra.mrb[0].mxu0 %v4120
        %v5517 = vpop.f32.mrb[0].mxu0
        %v5518 = vadd.f32 0.0, %v5517
        %v5519 = vpop.f32.mrb[0].mxu0
        %5520 = vmatprep.mubr.f32.mxu0 %v3953
        %5521 = vmatmul.mubr.f32.gmra.mrb[0].mxu0 %v4121
        %v5522 = vpop.f32.mrb[0].mxu0
        %v5523 = vadd.f32 0.0, %v5522
        %v5524 = vpop.f32.mrb[0].mxu0
        %5525 = vmatprep.mubr.f32.mxu0 %v3954
        %5526 = vmatmul.mubr.f32.gmra.mrb[0].mxu0 %v4122
        %v5527 = vpop.f32.mrb[0].mxu0
        %v5528 = vadd.f32 0.0, %v5527
        %v5529 = vpop.f32.mrb[0].mxu0
        %5530 = vmatprep.mubr.f32.mxu0 %v3955
        %5531 = vmatmul.mubr.f32.gmra.mrb[0].mxu0 %v4123
        %v5532 = vpop.f32.mrb[0].mxu0
        %v5533 = vadd.f32 0.0, %v5532
        %v5534 = vpop.f32.mrb[0].mxu0
        %5535 = vmatprep.mubr.f32.mxu0 %v3956
        %5536 = vmatmul.mubr.f32.gmra.mrb[0].mxu0 %v4124
        %v5537 = vpop.f32.mrb[0].mxu0
        %v5538 = vadd.f32 0.0, %v5537
        %v5539 = vpop.f32.mrb[0].mxu0
        %5540 = vmatprep.mubr.f32.mxu0 %v3957
        %5541 = vmatmul.mubr.f32.gmra.mrb[0].mxu0 %v4125
        %v5542 = vpop.f32.mrb[0].mxu0
        %v5543 = vadd.f32 0.0, %v5542
        %v5544 = vpop.f32.mrb[0].mxu0
        %5545 = vmatprep.mubr.f32.mxu0 %v3958
        %5546 = vmatmul.mubr.f32.gmra.mrb[0].mxu0 %v4126
        %v5547 = vpop.f32.mrb[0].mxu0
        %v5548 = vadd.f32 0.0, %v5547
        %v5549 = vpop.f32.mrb[0].mxu0
        %5550 = vmatprep.mubr.f32.mxu0 0.0
        %5551 = vmatmul.mubr.f32.gmra.mrb[0].mxu0 %v4127
        %v5552 = vpop.f32.mrb[0].mxu0
        %v5553 = vadd.f32 0.0, %v5552
        %v5554 = vpop.f32.mrb[0].mxu0
        %5555 = vmatprep.mubr.f32.mxu0 0.0
        %5556 = vmatmul.mubr.f32.gmra.mrb[0].mxu0 %v1959
        %v5557 = vpop.f32.mrb[0].mxu0
        %v5558 = vadd.f32 0.0, %v5557
        %v5559 = vpop.f32.mrb[0].mxu0
        %5560 = vdwg.mxu0
        %5561 = vmatprep.subr.mxu0 0.0
        %5562 = vmatpush1.msra.mxu0 %v5320
        %5563 = vmatprep.subr.mxu0 0.0
        %5564 = vmatpush1.msra.mxu0 %v5321
        %5565 = vmatprep.subr.mxu0 0.0
        %5566 = vmatpush1.msra.mxu0 %v5322
        %5567 = vmatprep.subr.mxu0 0.0
        %5568 = vmatpush1.msra.mxu0 %v5323
        %5569 = vmatprep.subr.mxu0 0.0
        %5570 = vmatpush1.msra.mxu0 %v5324
        %5571 = vmatprep.subr.mxu0 0.0
        %5572 = vmatpush1.msra.mxu0 %v5325
        %5573 = vmatprep.subr.mxu0 0.0
        %5574 = vmatpush1.msra.mxu0 %v5326
        %5575 = vmatprep.subr.mxu0 0.0
        %5576 = vmatpush1.msra.mxu0 %v5327
        %5577 = vmatprep.subr.mxu0 0.0
        %5578 = vmatpush1.msra.mxu0 %v5328
        %5579 = vmatprep.subr.mxu0 0.0
        %5580 = vmatpush1.msra.mxu0 %v5329
        %5581 = vmatprep.subr.mxu0 0.0
        %5582 = vmatpush1.msra.mxu0 %v5330
        %5583 = vmatprep.subr.mxu0 0.0
        %5584 = vmatpush1.msra.mxu0 %v5331
        %5585 = vmatprep.subr.mxu0 0.0
        %5586 = vmatpush1.msra.mxu0 %v5332
        %5587 = vmatprep.subr.mxu0 0.0
        %5588 = vmatpush1.msra.mxu0 %v5333
        %5589 = vmatprep.subr.mxu0 0.0
        %5590 = vmatpush1.msra.mxu0 %v5334
        %5591 = vmatprep.subr.mxu0 0.0
        %5592 = vmatpush1.msra.mxu0 %v5335
        %5593 = vmatprep.subr.mxu0 0.0
        %5594 = vmatpush1.msra.mxu0 0.0
        %5595 = vmatprep.subr.mxu0 0.0
        %5596 = vmatpush1.msra.mxu0 0.0
        %5597 = vmatprep.subr.mxu0 0.0
        %5598 = vmatpush1.msra.mxu0 0.0
        %5599 = vmatprep.subr.mxu0 0.0
        %5600 = vmatpush1.msra.mxu0 0.0
        %5601 = vmatprep.subr.mxu0 0.0
        %5602 = vmatpush1.msra.mxu0 0.0
        %5603 = vmatprep.subr.mxu0 0.0
        %5604 = vmatpush1.msra.mxu0 0.0
        %5605 = vmatprep.subr.mxu0 0.0
        %5606 = vmatpush1.msra.mxu0 0.0
        %5607 = vmatprep.subr.mxu0 0.0
        %5608 = vmatpush1.msra.mxu0 0.0
        %5609 = vmatprep.subr.mxu0 0.0
        %5610 = vmatpush1.msra.mxu0 0.0
        %5611 = vmatprep.subr.mxu0 0.0
        %5612 = vmatpush1.msra.mxu0 0.0
        %5613 = vmatprep.subr.mxu0 0.0
        %5614 = vmatpush1.msra.mxu0 0.0
        %5615 = vmatprep.subr.mxu0 0.0
        %5616 = vmatpush1.msra.mxu0 0.0
        %5617 = vmatprep.subr.mxu0 0.0
        %5618 = vmatpush1.msra.mxu0 0.0
        %5619 = vmatprep.subr.mxu0 0.0
        %5620 = vmatpush1.msra.mxu0 0.0
        %5621 = vmatprep.subr.mxu0 0.0
        %5622 = vmatpush1.msra.mxu0 0.0
        %5623 = vmatprep.subr.mxu0 0.0
        %5624 = vmatpush1.msra.mxu0 0.0
        %5625 = vmatprep.mubr.f32.mxu0 0.0
        %5626 = vmatmul.mubr.f32.gmra.mrb[0].mxu0 %v4196
        %v5627 = vpop.f32.mrb[0].mxu0
        %v5628 = vadd.f32 %v5403, %v5627
        %v5629 = vpop.f32.mrb[0].mxu0
        %5630 = vmatprep.mubr.f32.mxu0 0.0
        %5631 = vmatmul.mubr.f32.gmra.mrb[0].mxu0 %v4197
        %v5632 = vpop.f32.mrb[0].mxu0
        %v5633 = vadd.f32 %v5408, %v5632
        %v5634 = vpop.f32.mrb[0].mxu0
        %5635 = vmatprep.mubr.f32.mxu0 0.0
        %5636 = vmatmul.mubr.f32.gmra.mrb[0].mxu0 %v4198
        %v5637 = vpop.f32.mrb[0].mxu0
        %v5638 = vadd.f32 %v5413, %v5637
        %v5639 = vpop.f32.mrb[0].mxu0
        %5640 = vmatprep.mubr.f32.mxu0 0.0
        %5641 = vmatmul.mubr.f32.gmra.mrb[0].mxu0 %v4199
        %v5642 = vpop.f32.mrb[0].mxu0
        %v5643 = vadd.f32 %v5418, %v5642
        %v5644 = vpop.f32.mrb[0].mxu0
        %5645 = vmatprep.mubr.f32.mxu0 0.0
        %5646 = vmatmul.mubr.f32.gmra.mrb[0].mxu0 %v4200
        %v5647 = vpop.f32.mrb[0].mxu0
        %v5648 = vadd.f32 %v5423, %v5647
        %v5649 = vpop.f32.mrb[0].mxu0
        %5650 = vmatprep.mubr.f32.mxu0 0.0
        %5651 = vmatmul.mubr.f32.gmra.mrb[0].mxu0 %v4201
        %v5652 = vpop.f32.mrb[0].mxu0
        %v5653 = vadd.f32 %v5428, %v5652
        %v5654 = vpop.f32.mrb[0].mxu0
        %5655 = vmatprep.mubr.f32.mxu0 0.0
        %5656 = vmatmul.mubr.f32.gmra.mrb[0].mxu0 %v4202
        %v5657 = vpop.f32.mrb[0].mxu0
        %v5658 = vadd.f32 %v5433, %v5657
        %v5659 = vpop.f32.mrb[0].mxu0
        %5660 = vmatprep.mubr.f32.mxu0 0.0
        %5661 = vmatmul.mubr.f32.gmra.mrb[0].mxu0 %v4203
        %v5662 = vpop.f32.mrb[0].mxu0
        %v5663 = vadd.f32 %v5438, %v5662
        %v5664 = vpop.f32.mrb[0].mxu0
        %5665 = vmatprep.mubr.f32.mxu0 0.0
        %5666 = vmatmul.mubr.f32.gmra.mrb[0].mxu0 %v4204
        %v5667 = vpop.f32.mrb[0].mxu0
        %v5668 = vadd.f32 %v5443, %v5667
        %v5669 = vpop.f32.mrb[0].mxu0
        %5670 = vmatprep.mubr.f32.mxu0 0.0
        %5671 = vmatmul.mubr.f32.gmra.mrb[0].mxu0 %v4205
        %v5672 = vpop.f32.mrb[0].mxu0
        %v5673 = vadd.f32 %v5448, %v5672
        %v5674 = vpop.f32.mrb[0].mxu0
        %5675 = vmatprep.mubr.f32.mxu0 0.0
        %5676 = vmatmul.mubr.f32.gmra.mrb[0].mxu0 %v4206
        %v5677 = vpop.f32.mrb[0].mxu0
        %v5678 = vadd.f32 %v5453, %v5677
        %v5679 = vpop.f32.mrb[0].mxu0
        %5680 = vmatprep.mubr.f32.mxu0 0.0
        %5681 = vmatmul.mubr.f32.gmra.mrb[0].mxu0 %v4207
        %v5682 = vpop.f32.mrb[0].mxu0
        %v5683 = vadd.f32 %v5458, %v5682
        %v5684 = vpop.f32.mrb[0].mxu0
        %5685 = vmatprep.mubr.f32.mxu0 0.0
        %5686 = vmatmul.mubr.f32.gmra.mrb[0].mxu0 %v4208
        %v5687 = vpop.f32.mrb[0].mxu0
        %v5688 = vadd.f32 %v5463, %v5687
        %v5689 = vpop.f32.mrb[0].mxu0
        %5690 = vmatprep.mubr.f32.mxu0 0.0
        %5691 = vmatmul.mubr.f32.gmra.mrb[0].mxu0 %v4209
        %v5692 = vpop.f32.mrb[0].mxu0
        %v5693 = vadd.f32 %v5468, %v5692
        %v5694 = vpop.f32.mrb[0].mxu0
        %5695 = vmatprep.mubr.f32.mxu0 0.0
        %5696 = vmatmul.mubr.f32.gmra.mrb[0].mxu0 %v4210
        %v5697 = vpop.f32.mrb[0].mxu0
        %v5698 = vadd.f32 %v5473, %v5697
        %v5699 = vpop.f32.mrb[0].mxu0
        %5700 = vmatprep.mubr.f32.mxu0 0.0
        %5701 = vmatmul.mubr.f32.gmra.mrb[0].mxu0 %v4211
        %v5702 = vpop.f32.mrb[0].mxu0
        %v5703 = vadd.f32 %v5478, %v5702
        %v5704 = vpop.f32.mrb[0].mxu0
        %5705 = vmatprep.mubr.f32.mxu0 0.0
        %5706 = vmatmul.mubr.f32.gmra.mrb[0].mxu0 %v4212
        %v5707 = vpop.f32.mrb[0].mxu0
        %v5708 = vadd.f32 %v5483, %v5707
        %v5709 = vpop.f32.mrb[0].mxu0
        %5710 = vmatprep.mubr.f32.mxu0 0.0
        %5711 = vmatmul.mubr.f32.gmra.mrb[0].mxu0 %v4213
        %v5712 = vpop.f32.mrb[0].mxu0
        %v5713 = vadd.f32 %v5488, %v5712
        %v5714 = vpop.f32.mrb[0].mxu0
        %5715 = vmatprep.mubr.f32.mxu0 0.0
        %5716 = vmatmul.mubr.f32.gmra.mrb[0].mxu0 %v4214
        %v5717 = vpop.f32.mrb[0].mxu0
        %v5718 = vadd.f32 %v5493, %v5717
        %v5719 = vpop.f32.mrb[0].mxu0
        %5720 = vmatprep.mubr.f32.mxu0 0.0
        %5721 = vmatmul.mubr.f32.gmra.mrb[0].mxu0 %v4215
        %v5722 = vpop.f32.mrb[0].mxu0
        %v5723 = vadd.f32 %v5498, %v5722
        %v5724 = vpop.f32.mrb[0].mxu0
        %5725 = vmatprep.mubr.f32.mxu0 0.0
        %5726 = vmatmul.mubr.f32.gmra.mrb[0].mxu0 %v4216
        %v5727 = vpop.f32.mrb[0].mxu0
        %v5728 = vadd.f32 %v5503, %v5727
        %v5729 = vpop.f32.mrb[0].mxu0
        %5730 = vmatprep.mubr.f32.mxu0 0.0
        %5731 = vmatmul.mubr.f32.gmra.mrb[0].mxu0 %v4217
        %v5732 = vpop.f32.mrb[0].mxu0
        %v5733 = vadd.f32 %v5508, %v5732
        %v5734 = vpop.f32.mrb[0].mxu0
        %5735 = vmatprep.mubr.f32.mxu0 0.0
        %5736 = vmatmul.mubr.f32.gmra.mrb[0].mxu0 %v4218
        %v5737 = vpop.f32.mrb[0].mxu0
        %v5738 = vadd.f32 %v5513, %v5737
        %v5739 = vpop.f32.mrb[0].mxu0
        %5740 = vmatprep.mubr.f32.mxu0 0.0
        %5741 = vmatmul.mubr.f32.gmra.mrb[0].mxu0 %v4219
        %v5742 = vpop.f32.mrb[0].mxu0
        %v5743 = vadd.f32 %v5518, %v5742
        %v5744 = vpop.f32.mrb[0].mxu0
        %5745 = vmatprep.mubr.f32.mxu0 0.0
        %5746 = vmatmul.mubr.f32.gmra.mrb[0].mxu0 %v4220
        %v5747 = vpop.f32.mrb[0].mxu0
        %v5748 = vadd.f32 %v5523, %v5747
        %v5749 = vpop.f32.mrb[0].mxu0
        %5750 = vmatprep.mubr.f32.mxu0 0.0
        %5751 = vmatmul.mubr.f32.gmra.mrb[0].mxu0 %v4221
        %v5752 = vpop.f32.mrb[0].mxu0
        %v5753 = vadd.f32 %v5528, %v5752
        %v5754 = vpop.f32.mrb[0].mxu0
        %5755 = vmatprep.mubr.f32.mxu0 0.0
        %5756 = vmatmul.mubr.f32.gmra.mrb[0].mxu0 %v4222
        %v5757 = vpop.f32.mrb[0].mxu0
        %v5758 = vadd.f32 %v5533, %v5757
        %v5759 = vpop.f32.mrb[0].mxu0
        %5760 = vmatprep.mubr.f32.mxu0 0.0
        %5761 = vmatmul.mubr.f32.gmra.mrb[0].mxu0 %v4223
        %v5762 = vpop.f32.mrb[0].mxu0
        %v5763 = vadd.f32 %v5538, %v5762
        %v5764 = vpop.f32.mrb[0].mxu0
        %5765 = vmatprep.mubr.f32.mxu0 0.0
        %5766 = vmatmul.mubr.f32.gmra.mrb[0].mxu0 %v4224
        %v5767 = vpop.f32.mrb[0].mxu0
        %v5768 = vadd.f32 %v5543, %v5767
        %v5769 = vpop.f32.mrb[0].mxu0
        %5770 = vmatprep.mubr.f32.mxu0 0.0
        %5771 = vmatmul.mubr.f32.gmra.mrb[0].mxu0 %v4225
        %v5772 = vpop.f32.mrb[0].mxu0
        %v5773 = vadd.f32 %v5548, %v5772
        %v5774 = vpop.f32.mrb[0].mxu0
        %5775 = vmatprep.mubr.f32.mxu0 0.0
        %5776 = vmatmul.mubr.f32.gmra.mrb[0].mxu0 %v2240
        %v5777 = vpop.f32.mrb[0].mxu0
        %v5778 = vadd.f32 %v5553, %v5777
        %v5779 = vpop.f32.mrb[0].mxu0
        %5780 = vmatprep.mubr.f32.mxu0 0.0
        %5781 = vmatmul.mubr.f32.gmra.mrb[0].mxu0 %v2241
        %v5782 = vpop.f32.mrb[0].mxu0
        %v5783 = vadd.f32 %v5558, %v5782
        %v5784 = vpop.f32.mrb[0].mxu0
        %5785 = vdwg.mxu0
        %v5786 = vadd.f32 %v5255, %v5628
        %v5787 = vadd.f32 %v5256, %v5633
        %v5788 = vadd.f32 %v5257, %v5638
        %v5789 = vadd.f32 %v5258, %v5643
        %v5790 = vadd.f32 %v5259, %v5648
        %v5791 = vadd.f32 %v5260, %v5653
        %v5792 = vadd.f32 %v5261, %v5658
        %v5793 = vadd.f32 %v5262, %v5663
        %v5794 = vadd.f32 %v5263, %v5668
        %v5795 = vadd.f32 %v5264, %v5673
        %v5796 = vadd.f32 %v5265, %v5678
        %v5797 = vadd.f32 %v5266, %v5683
        %v5798 = vadd.f32 %v5267, %v5688
        %v5799 = vadd.f32 %v5268, %v5693
        %v5800 = vadd.f32 %v5269, %v5698
        %v5801 = vadd.f32 %v5270, %v5703
        %v5802 = vadd.f32 %v5271, %v5708
        %v5803 = vadd.f32 %v5272, %v5713
        %v5804 = vadd.f32 %v5273, %v5718
        %v5805 = vadd.f32 %v5274, %v5723
        %v5806 = vadd.f32 %v5275, %v5728
        %v5807 = vadd.f32 %v5276, %v5733
        %v5808 = vadd.f32 %v5277, %v5738
        %v5809 = vadd.f32 %v5278, %v5743
        %v5810 = vadd.f32 %v5279, %v5748
        %v5811 = vadd.f32 %v5280, %v5753
        %v5812 = vadd.f32 %v5281, %v5758
        %v5813 = vadd.f32 %v5282, %v5763
        %v5814 = vadd.f32 %v5283, %v5768
        %v5815 = vadd.f32 %v5284, %v5773
        %v5816 = vadd.f32 %v5285, %v5778
        %v5817 = vadd.f32 %v5286, %v5783
        %5818 = vst [vmem:[%s554] sm:$0xff] %v5786
        %5819 = vst [vmem:[%s554 + $0x8] sm:$0xff] %v5787
        %5820 = vst [vmem:[%s554 + $0x10] sm:$0xff] %v5788
        %5821 = vst [vmem:[%s554 + $0x18] sm:$0xff] %v5789
        %5822 = vst [vmem:[%s554 + $0x20] sm:$0xff] %v5790
        %5823 = vst [vmem:[%s554 + $0x28] sm:$0xff] %v5791
        %5824 = vst [vmem:[%s554 + $0x30] sm:$0xff] %v5792
        %5825 = vst [vmem:[%s554 + $0x38] sm:$0xff] %v5793
        %5826 = vst [vmem:[%s554 + $0x40] sm:$0xff] %v5794
        %5827 = vst [vmem:[%s554 + $0x48] sm:$0xff] %v5795
        %5828 = vst [vmem:[%s554 + $0x50] sm:$0xff] %v5796
        %5829 = vst [vmem:[%s554 + $0x58] sm:$0xff] %v5797
        %5830 = vst [vmem:[%s554 + $0x60] sm:$0xff] %v5798
        %5831 = vst [vmem:[%s554 + $0x68] sm:$0xff] %v5799
        %5832 = vst [vmem:[%s554 + $0x70] sm:$0xff] %v5800
        %5833 = vst [vmem:[%s554 + $0x78] sm:$0xff] %v5801
        %5834 = vst [vmem:[%s554 + $0x80] sm:$0xff] %v5802
        %5835 = vst [vmem:[%s554 + $0x88] sm:$0xff] %v5803
        %5836 = vst [vmem:[%s554 + $0x90] sm:$0xff] %v5804
        %5837 = vst [vmem:[%s554 + $0x98] sm:$0xff] %v5805
        %5838 = vst [vmem:[%s554 + $0xa0] sm:$0xff] %v5806
        %5839 = vst [vmem:[%s554 + $0xa8] sm:$0xff] %v5807
        %5840 = vst [vmem:[%s554 + $0xb0] sm:$0xff] %v5808
        %5841 = vst [vmem:[%s554 + $0xb8] sm:$0xff] %v5809
        %5842 = vst [vmem:[%s554 + $0xc0] sm:$0xff] %v5810
        %5843 = vst [vmem:[%s554 + $0xc8] sm:$0xff] %v5811
        %5844 = vst [vmem:[%s554 + $0xd0] sm:$0xff] %v5812
        %5845 = vst [vmem:[%s554 + $0xd8] sm:$0xff] %v5813
        %5846 = vst [vmem:[%s554 + $0xe0] sm:$0xff] %v5814
        %5847 = vst [vmem:[%s554 + $0xe8] sm:$0xff] %v5815
        %5848 = vst [vmem:[%s554 + $0xf0] sm:$0xff] %v5816
        %5849 = vst [vmem:[%s554 + $0xf8] sm:$0xff] %v5817
        %s5850 = sand.u32 %s383, 1
        %s5851 = scalar_lea.sflag [#allocation5], %s5850
        %s5852 = sand.u32 %s383, 1
        %s5853 = smul.addr %s5852, 256
        %s5854 = scalar_lea.vmem [#allocation8], %s5853
        // Predicated region
        $region93: #{tpu_custom_call.1} parent=83 // pred_check
          %p5855 = pneg %p393
        $region94: #{tpu_custom_call.1} parent=83 // pred_check_branch
          %5857 = sbr.rel (%p5855) target = $region96
        $region95: #{tpu_custom_call.1} parent=83 // pred_region
          %s5859 = ssub.s32 4096, 4096
          %5860 = vsyncadd %s5851, %s5859
          %s5861 = smul.addr %s34, 32
          %s5862 = smul.addr %s5861, 128
          %s5863 = scalar_lea.hbm %s16, %s5862
          %s5864 = sshll.u32 %s5854, 4
          %s5865 = int_to_ptr.vmem [resolvable:$true] %s5864
          %5870 = dma.vmem_to_hbm [thread:$0]  %s5865, 4096, %s5863, %s5851, 128, 128, 8
        $region96: #{tpu_custom_call.1} parent=83 // pred_fallthru
          _
      $region84: #{tpu_custom_call.1} parent=5 // pred_fallthru
        _
      %p5871 = scmp.le.s32.totalorder 2, %s29
      // Predicated region
      $region97: #{tpu_custom_call.1} parent=5 // pred_check
        %p5872 = pneg %p5871
      $region98: #{tpu_custom_call.1} parent=5 // pred_check_branch
        %5874 = sbr.rel (%p5872) target = $region100
      $region99: #{tpu_custom_call.1} parent=5 // pred_region
        %s5875 = ssub.s32 %s29, 2
        // Predicated region
        $region101: #{tpu_custom_call.1} parent=99 // pred_check
          %p5876 = pneg %p399
        $region102: #{tpu_custom_call.1} parent=99 // pred_check_branch
          %5878 = sbr.rel (%p5876) target = $region104
        $region103: #{tpu_custom_call.1} parent=99 // pred_region
          %s5879 = sand.u32 %s384, 1
          %s5880 = scalar_lea.sflag [#allocation5], %s5879
          %s5881 = sand.u32 %s384, 1
          %s5882 = smul.addr %s5881, 256
          %s5883 = scalar_lea.vmem [#allocation8], %s5882
          %5884 = dma.done %s5880, 4096
        $region104: #{tpu_custom_call.1} parent=99 // pred_fallthru
          _
      $region100: #{tpu_custom_call.1} parent=5 // pred_fallthru
        _
    $region6: #{tpu_custom_call.1} parent=1 // loop_footer
      %s33 = sadd.s32 1, %s29
    $region7: #{tpu_custom_call.1} parent=1 // loop_footer_branch
      %28 = sbr.rel target = $region3
    $region8: #{tpu_custom_call.1} parent=1 // loop_exit
      _
    %5885 = vsyncpa [#allocation4], 1
    %s5886 = scalar_lea.sflag [#allocation4], 1
    %5887 = vsyncpa %s5886, 1
    %5888 = vsyncpa [#allocation7], 1
    %5889 = vsyncpa [#allocation5], 1
    %s5890 = scalar_lea.sflag [#allocation5], 1
    %5891 = vsyncpa %s5890, 1

</llo_original>
